<compile_context>
chip_gen: v7x
topology: tpu7x:2x2x1
jax: 0.10.0
libtpu: 0.0.40
codegen_flags: <defaults>
</compile_context>

<pallas_src>
import jax
import jax.numpy as jnp
import numpy as np
from jax import lax
from jax.experimental import pallas as pl
from jax.experimental.pallas import tpu as pltpu


def _round_up(x, m):
    return ((x + m - 1) // m) * m


def transrec_kernel(previd_ref, posid_ref, negid_ref,            # scalar prefetch (SMEM)
                    prev_ref, pos_ref, neg_ref, up_ref, ug_ref,  # (TB,D) VMEM inputs
                    posb_ref, negb_ref, poi_in_ref,              # (TB,1)x2, HBM table (alias)
                    obj_ref, poi_out_ref,                        # (TB,1) out, HBM table out
                    prevn_buf, posn_buf, negn_buf, sem):         # (2*TB,D) scratch x3, DMA sems
    del poi_in_ref  # present only to establish the input/output alias
    tb, d = prev_ref.shape
    i = pl.program_id(0)
    slot = i & 1                                   # double-buffered scratch slot
    base = pl.multiple_of(i * tb, tb)              # offset into the SMEM id arrays
    soff = pl.multiple_of(slot * tb, tb)           # row offset of this slot's scratch

    prev = prev_ref[...]                           # (TB, D)
    pos = pos_ref[...]
    neg = neg_ref[...]
    trans = prev + up_ref[...] + ug_ref[...]       # (TB,D) + (TB,D) + (1,D)

    d_pos = trans - pos
    d_neg = trans - neg
    pos_dist = jnp.sqrt(jnp.sum(d_pos * d_pos, axis=1, keepdims=True))  # (TB, 1)
    neg_dist = jnp.sqrt(jnp.sum(d_neg * d_neg, axis=1, keepdims=True))  # (TB, 1)
    obj_ref[...] = (posb_ref[...] - pos_dist) - (negb_ref[...] - neg_dist)

    # x / max(1, ||x||)  ==  x * min(1, rsqrt(sum(x^2)))   (rsqrt(0)=inf clamps to 1)
    def renorm(x):
        ss = jnp.sum(x * x, axis=1, keepdims=True)
        return x * jnp.minimum(jnp.float32(1.0), lax.rsqrt(ss))

    prevn_buf[pl.ds(soff, tb), :] = renorm(prev)
    posn_buf[pl.ds(soff, tb), :] = renorm(pos)
    negn_buf[pl.ds(soff, tb), :] = renorm(neg)

    def drain(s):
        # One buffer-sized wait per scratch buffer: the DMA semaphore counts bytes,
        # so a single (TB, D) descriptor drains all TB (1, D) row copies issued
        # from that buffer on slot `s` (3 waits per tile instead of 3*TB).
        off = pl.multiple_of(s * tb, tb)
        for buf in (prevn_buf, posn_buf, negn_buf):
            pltpu.make_async_copy(buf.at[pl.ds(off, tb)],
                                  poi_out_ref.at[pl.ds(0, tb)],
                                  sem.at[s]).wait()

    # Deferred drain: retire the *previous* tile's scatter DMAs only now, so their
    # latency overlapped this tile's input DMAs and compute (relies on sequential
    # grid execution -> dimension_semantics=("arbitrary",)).
    @pl.when(i > 0)
    def _():
        drain(1 - slot)

    # In-kernel scatter of renormalized rows back into the aliased poi table.
    # Duplicate ids write byte-identical data (renorm of the same pre-update source
    # row), so overlapping writes are benign.  Unrolled so SMEM id loads and
    # descriptor pushes interleave instead of serializing per row.
    def issue_row(r, carry):
        pid = previd_ref[base + r]
        qid = posid_ref[base + r]
        nid = negid_ref[base + r]
        row = soff + r
        pltpu.make_async_copy(prevn_buf.at[pl.ds(row, 1)],
                              poi_out_ref.at[pl.ds(pid, 1)], sem.at[slot]).start()
        pltpu.make_async_copy(posn_buf.at[pl.ds(row, 1)],
                              poi_out_ref.at[pl.ds(qid, 1)], sem.at[slot]).start()
        pltpu.make_async_copy(negn_buf.at[pl.ds(row, 1)],
                              poi_out_ref.at[pl.ds(nid, 1)], sem.at[slot]).start()
        return carry

    lax.fori_loop(0, tb, issue_row, 0, unroll=8)

    # Last tile has no successor to defer to: drain its own copies before exit.
    @pl.when(i == pl.num_programs(0) - 1)
    def _():
        drain(slot)


def _transrec_forward_impl(poi_emb, user_emb, ug_emb, poi_bias,
                           user_id, prev_id, pos_id, neg_id, *, block_b):
    n_poi, D = poi_emb.shape
    B = prev_id.shape[0]

    # Batch tile: multiple of 8 sublanes; cap so (double-buffered inputs ~8x +
    # double-buffered scratch ~6x) * TB * D * 4B stays well under v7x's 64 MiB VMEM.
    vmem_budget = 40 * 1024 * 1024
    max_tb = max(8, ((vmem_budget // (16 * D * 4)) // 8) * 8)
    TB = max(8, (min(block_b, max_tb, _round_up(B, 8)) // 8) * 8)
    B_pad = _round_up(B, TB)
    num_tiles = B_pad // TB

    def pad_edge(ix):
        ix = ix.astype(jnp.int32)
        if B_pad == B:
            return ix
        return jnp.concatenate([ix, jnp.broadcast_to(ix[-1:], (B_pad - B,))])

    user_id_p = pad_edge(user_id)
    prev_id_p = pad_edge(prev_id)
    pos_id_p = pad_edge(pos_id)
    neg_id_p = pad_edge(neg_id)

    # Embedding gathers stay in XLA: they read the pre-update table, so objective
    # and renorm sources exactly match the reference even with duplicate ids.
    # Padded rows are real rows -> their extra scatter writes are idempotent.
    prev_e = poi_emb[prev_id_p]                  # (B_pad, D)
    pos_e = poi_emb[pos_id_p]
    neg_e = poi_emb[neg_id_p]
    up = user_emb[user_id_p]
    pos_b = poi_bias[pos_id_p]                   # (B_pad, 1)
    neg_b = poi_bias[neg_id_p]

    bd = lambda: pl.BlockSpec((TB, D), lambda i, p, q, n: (i, 0))
    b1 = lambda: pl.BlockSpec((TB, 1), lambda i, p, q, n: (i, 0))
    gd = pl.BlockSpec((1, D), lambda i, p, q, n: (0, 0))
    any_spec = pl.BlockSpec(memory_space=pl.ANY)

    grid_spec = pltpu.PrefetchScalarGridSpec(
        num_scalar_prefetch=3,                   # prev/pos/neg ids -> SMEM
        grid=(num_tiles,),
        in_specs=[bd(), bd(), bd(), bd(), gd, b1(), b1(), any_spec],
        out_specs=(b1(), any_spec),
        scratch_shapes=[
            pltpu.VMEM((2 * TB, D), jnp.float32),   # renormalized prev rows (2 slots)
            pltpu.VMEM((2 * TB, D), jnp.float32),   # renormalized pos rows  (2 slots)
            pltpu.VMEM((2 * TB, D), jnp.float32),   # renormalized neg rows  (2 slots)
            pltpu.SemaphoreType.DMA((2,)),          # one DMA sem per scratch slot
        ],
    )

    # Right-sized VMEM limit: double-buffered pipeline blocks + scratch + slack,
    # capped below v7x's 64 MiB/TC and above v5e's 16 MiB default scope.
    vmem_need = 4 * (2 * (4 * TB * D + D + 3 * TB) + 6 * TB * D)
    vmem_limit = int(min(max(2 * vmem_need, 16 * 1024 * 1024), 48 * 1024 * 1024))

    cost = pl.CostEstimate(
        flops=20 * B_pad * D,
        transcendentals=5 * B_pad,
        bytes_accessed=4 * (4 * B_pad * D + 3 * B_pad) + 4 * (3 * B_pad * D + B_pad),
    )

    # Operand order: 3 scalar-prefetch ids, then the 8 in_specs inputs; poi_emb is
    # operand index 10 and aliases output index 1 (the updated table).
    obj, new_poi_emb = pl.pallas_call(
        transrec_kernel,
        grid_spec=grid_spec,
        out_shape=(
            jax.ShapeDtypeStruct((B_pad, 1), jnp.float32),
            jax.ShapeDtypeStruct((n_poi, D), jnp.float32),
        ),
        input_output_aliases={10: 1},
        compiler_params=pltpu.CompilerParams(
            # "arbitrary": the deferred cross-grid-step DMA drain relies on
            # sequential grid execution on a single core.
            dimension_semantics=("arbitrary",),
            vmem_limit_bytes=vmem_limit,
        ),
        cost_estimate=cost,
    )(prev_id_p, pos_id_p, neg_id_p,
      prev_e, pos_e, neg_e, up, ug_emb, pos_b, neg_b, poi_emb)

    return obj[:B, 0], new_poi_emb


# poi_embedding (arg 0) is donated so the aliased in-kernel writeback is truly
# in-place (no hidden full-table copy inserted by XLA).
_transrec_forward_jit = jax.jit(
    _transrec_forward_impl,
    static_argnames=("block_b",),
    donate_argnums=(0,),
)


def transrec_forward(params, user_id, prev_id, pos_id, neg_id, *, block_b=1024):
    """Returns (objective (B,), updated poi_embedding).

    NOTE: donates params['poi_embedding']; do not reuse it after this call.
    """
    return _transrec_forward_jit(
        params["poi_embedding"], params["user_embedding"],
        params["user_global_embedding"], params["poi_bias"],
        user_id, prev_id, pos_id, neg_id, block_b=block_b)


def init_params(key, n_poi, n_users, embedding_dim):
    k_poi, k_glob = jax.random.split(key)

    def f_normalize(x, eps=1e-12):
        n = jnp.sqrt(jnp.sum(x * x, axis=1, keepdims=True))
        return x / jnp.maximum(n, eps)

    poi_w = jax.random.normal(k_poi, (n_poi, embedding_dim), dtype=jnp.float32)
    glob_w = jax.random.normal(k_glob, (1, embedding_dim), dtype=jnp.float32)
    return {
        "poi_embedding": f_normalize(poi_w),
        "user_embedding": jnp.zeros((n_users, embedding_dim), jnp.float32),
        "user_global_embedding": f_normalize(glob_w),
        "poi_bias": jnp.zeros((n_poi, 1), jnp.float32),
    }


def reference_forward(params, user_id, prev_id, pos_id, neg_id):
    poi_emb = params["poi_embedding"]
    prev_e = poi_emb[prev_id]
    pos_e = poi_emb[pos_id]
    neg_e = poi_emb[neg_id]
    up = params["user_embedding"][user_id]
    ug = params["user_global_embedding"]
    pos_b = params["poi_bias"][pos_id]
    neg_b = params["poi_bias"][neg_id]
    trans = prev_e + up + ug
    pos_p = pos_b - jnp.linalg.norm(trans - pos_e, axis=1, keepdims=True)
    neg_p = neg_b - jnp.linalg.norm(trans - neg_e, axis=1, keepdims=True)
    obj = jnp.squeeze(pos_p - neg_p)

    def renorm(x):
        n = jnp.linalg.norm(x, axis=1, keepdims=True)
        return x / jnp.maximum(jnp.float32(1.0), n)

    new_poi = poi_emb.at[prev_id].set(renorm(prev_e))
    new_poi = new_poi.at[pos_id].set(renorm(pos_e))
    new_poi = new_poi.at[neg_id].set(renorm(neg_e))
    return obj, new_poi


if __name__ == "__main__":
    embedding_dim = 32
    n_poi = 64
    n_users = 16
    batch = 16

    root = jax.random.PRNGKey(0)
    k_params, k_u, k_prev, k_pos, k_neg = jax.random.split(root, 5)
    params = init_params(k_params, n_poi, n_users, embedding_dim)

    user_id = jax.random.randint(k_u, (batch,), 0, n_users)
    prev_id = jax.random.randint(k_prev, (batch,), 0, n_poi)
    pos_id = jax.random.randint(k_pos, (batch,), 0, n_poi)
    neg_id = jax.random.randint(k_neg, (batch,), 0, n_poi)

    # Reference FIRST: the kernel call below donates params["poi_embedding"].
    ref_obj, ref_poi = reference_forward(params, user_id, prev_id, pos_id, neg_id)
    ref_obj = jax.block_until_ready(ref_obj)
    ref_poi = jax.block_until_ready(ref_poi)

    # block_b=8 -> TB=8, grid=(2,): exercises tiling, the double-buffered scratch
    # and the deferred cross-step scatter drain.
    objective, new_poi_emb = transrec_forward(
        params, user_id, prev_id, pos_id, neg_id, block_b=8)
    objective = jax.block_until_ready(objective)
    new_poi_emb = jax.block_until_ready(new_poi_emb)

    assert objective.shape == (batch,)
    assert np.allclose(np.asarray(objective), np.asarray(ref_obj), atol=1e-5, rtol=1e-5)
    assert np.allclose(np.asarray(new_poi_emb), np.asarray(ref_poi), atol=1e-5, rtol=1e-5)

    print("KERNEL_OK")
</pallas_src>

<mosaic_0001>
module attributes {stable_mosaic.version = 11 : i64} {
  func.func @transrec_kernel(%arg0: i32, %arg1: memref<16xi32, #tpu.memory_space<smem>>, %arg2: memref<16xi32, #tpu.memory_space<smem>>, %arg3: memref<16xi32, #tpu.memory_space<smem>>, %arg4: memref<8x32xf32, #tpu.memory_space<vmem>>, %arg5: memref<8x32xf32, #tpu.memory_space<vmem>>, %arg6: memref<8x32xf32, #tpu.memory_space<vmem>>, %arg7: memref<8x32xf32, #tpu.memory_space<vmem>>, %arg8: memref<1x32xf32, #tpu.memory_space<vmem>>, %arg9: memref<8x1xf32, #tpu.memory_space<vmem>>, %arg10: memref<8x1xf32, #tpu.memory_space<vmem>>, %arg11: memref<64x32xf32, #tpu.memory_space<any>>, %arg12: memref<8x1xf32, #tpu.memory_space<vmem>>, %arg13: memref<64x32xf32, #tpu.memory_space<any>>, %arg14: memref<16x32xf32, #tpu.memory_space<vmem>>, %arg15: memref<16x32xf32, #tpu.memory_space<vmem>>, %arg16: memref<16x32xf32, #tpu.memory_space<vmem>>, %arg17: memref<2x!tpu.dma_semaphore, #tpu.memory_space<semaphore_mem>>) attributes {dimension_semantics = [#tpu.dimension_semantics<arbitrary>], iteration_bounds = array<i64: 2>, scalar_prefetch = 3 : i64, scratch_operands = 4 : i64, tpu.core_type = #tpu.core_type<tc>, window_params = [{transform_indices = @transform_0, window_bounds = array<i64: 8, 32>}, {transform_indices = @transform_1, window_bounds = array<i64: 8, 32>}, {transform_indices = @transform_2, window_bounds = array<i64: 8, 32>}, {transform_indices = @transform_3, window_bounds = array<i64: 8, 32>}, {pipeline_mode = #tpu.pipeline_mode<synchronous>, transform_indices = @transform_4, window_bounds = array<i64: 1, 32>}, {transform_indices = @transform_5, window_bounds = array<i64: 8, 1>}, {transform_indices = @transform_6, window_bounds = array<i64: 8, 1>}, {}, {transform_indices = @transform_8, window_bounds = array<i64: 8, 1>}, {}]} {
    %c1_i32 = arith.constant 1 : i32
    %0 = arith.andi %arg0, %c1_i32 : i32
    %c8_i32 = arith.constant 8 : i32
    %1 = arith.muli %arg0, %c8_i32 : i32
    %2 = tpu.assume_multiple %1, 8 : i32
    %c8_i32_0 = arith.constant 8 : i32
    %3 = arith.muli %0, %c8_i32_0 : i32
    %4 = tpu.assume_multiple %3, 8 : i32
    %c0 = arith.constant 0 : index
    %c0_1 = arith.constant 0 : index
    %5 = vector.load %arg4[%c0, %c0_1] : memref<8x32xf32, #tpu.memory_space<vmem>>, vector<8x32xf32>
    %c0_2 = arith.constant 0 : index
    %c0_3 = arith.constant 0 : index
    %6 = vector.load %arg5[%c0_2, %c0_3] : memref<8x32xf32, #tpu.memory_space<vmem>>, vector<8x32xf32>
    %c0_4 = arith.constant 0 : index
    %c0_5 = arith.constant 0 : index
    %7 = vector.load %arg6[%c0_4, %c0_5] : memref<8x32xf32, #tpu.memory_space<vmem>>, vector<8x32xf32>
    %c0_6 = arith.constant 0 : index
    %c0_7 = arith.constant 0 : index
    %8 = vector.load %arg7[%c0_6, %c0_7] : memref<8x32xf32, #tpu.memory_space<vmem>>, vector<8x32xf32>
    %9 = arith.addf %5, %8 : vector<8x32xf32>
    %c0_8 = arith.constant 0 : index
    %c0_9 = arith.constant 0 : index
    %10 = vector.load %arg8[%c0_8, %c0_9] : memref<1x32xf32, #tpu.memory_space<vmem>>, vector<1x32xf32>
    %11 = vector.broadcast %10 : vector<1x32xf32> to vector<8x32xf32>
    %12 = arith.addf %9, %11 : vector<8x32xf32>
    %13 = arith.subf %12, %6 : vector<8x32xf32>
    %14 = arith.subf %12, %7 : vector<8x32xf32>
    %15 = arith.mulf %13, %13 : vector<8x32xf32>
    %cst = arith.constant dense<0.000000e+00> : vector<8xf32>
    %16 = vector.multi_reduction <add>, %15, %cst [1] : vector<8x32xf32> to vector<8xf32>
    %17 = vector.shape_cast %16 : vector<8xf32> to vector<8x1xf32>
    %18 = math.sqrt %17 : vector<8x1xf32>
    %19 = arith.mulf %14, %14 : vector<8x32xf32>
    %cst_10 = arith.constant dense<0.000000e+00> : vector<8xf32>
    %20 = vector.multi_reduction <add>, %19, %cst_10 [1] : vector<8x32xf32> to vector<8xf32>
    %21 = vector.shape_cast %20 : vector<8xf32> to vector<8x1xf32>
    %22 = math.sqrt %21 : vector<8x1xf32>
    %c0_11 = arith.constant 0 : index
    %c0_12 = arith.constant 0 : index
    %23 = vector.load %arg9[%c0_11, %c0_12] : memref<8x1xf32, #tpu.memory_space<vmem>>, vector<8x1xf32>
    %24 = arith.subf %23, %18 : vector<8x1xf32>
    %c0_13 = arith.constant 0 : index
    %c0_14 = arith.constant 0 : index
    %25 = vector.load %arg10[%c0_13, %c0_14] : memref<8x1xf32, #tpu.memory_space<vmem>>, vector<8x1xf32>
    %26 = arith.subf %25, %22 : vector<8x1xf32>
    %27 = arith.subf %24, %26 : vector<8x1xf32>
    %c0_15 = arith.constant 0 : index
    %c0_16 = arith.constant 0 : index
    %28 = vector.load %arg12[%c0_15, %c0_16] : memref<8x1xf32, #tpu.memory_space<vmem>>, vector<8x1xf32>
    tpu.vector_store %arg12[%c0_15, %c0_16], %27 {strides = array<i32>} : memref<8x1xf32, #tpu.memory_space<vmem>>, vector<8x1xf32>,
    %29 = arith.mulf %5, %5 : vector<8x32xf32>
    %cst_17 = arith.constant dense<0.000000e+00> : vector<8xf32>
    %30 = vector.multi_reduction <add>, %29, %cst_17 [1] : vector<8x32xf32> to vector<8xf32>
    %31 = vector.shape_cast %30 : vector<8xf32> to vector<8x1xf32>
    %32 = math.rsqrt %31 : vector<8x1xf32>
    %cst_18 = arith.constant 1.000000e+00 : f32
    %33 = vector.broadcast %cst_18 : f32 to vector<8x1xf32>
    %34 = arith.minimumf %33, %32 : vector<8x1xf32>
    %35 = vector.broadcast %34 : vector<8x1xf32> to vector<8x32xf32>
    %36 = arith.mulf %5, %35 : vector<8x32xf32>
    %37 = arith.index_cast %4 : i32 to index
    %c0_19 = arith.constant 0 : index
    %38 = vector.load %arg14[%37, %c0_19] : memref<16x32xf32, #tpu.memory_space<vmem>>, vector<8x32xf32>
    tpu.vector_store %arg14[%37, %c0_19], %36 {strides = array<i32>} : memref<16x32xf32, #tpu.memory_space<vmem>>, vector<8x32xf32>,
    %39 = arith.mulf %6, %6 : vector<8x32xf32>
    %cst_20 = arith.constant dense<0.000000e+00> : vector<8xf32>
    %40 = vector.multi_reduction <add>, %39, %cst_20 [1] : vector<8x32xf32> to vector<8xf32>
    %41 = vector.shape_cast %40 : vector<8xf32> to vector<8x1xf32>
    %42 = math.rsqrt %41 : vector<8x1xf32>
    %cst_21 = arith.constant 1.000000e+00 : f32
    %43 = vector.broadcast %cst_21 : f32 to vector<8x1xf32>
    %44 = arith.minimumf %43, %42 : vector<8x1xf32>
    %45 = vector.broadcast %44 : vector<8x1xf32> to vector<8x32xf32>
    %46 = arith.mulf %6, %45 : vector<8x32xf32>
    %47 = arith.index_cast %4 : i32 to index
    %c0_22 = arith.constant 0 : index
    %48 = vector.load %arg15[%47, %c0_22] : memref<16x32xf32, #tpu.memory_space<vmem>>, vector<8x32xf32>
    tpu.vector_store %arg15[%47, %c0_22], %46 {strides = array<i32>} : memref<16x32xf32, #tpu.memory_space<vmem>>, vector<8x32xf32>,
    %49 = arith.mulf %7, %7 : vector<8x32xf32>
    %cst_23 = arith.constant dense<0.000000e+00> : vector<8xf32>
    %50 = vector.multi_reduction <add>, %49, %cst_23 [1] : vector<8x32xf32> to vector<8xf32>
    %51 = vector.shape_cast %50 : vector<8xf32> to vector<8x1xf32>
    %52 = math.rsqrt %51 : vector<8x1xf32>
    %cst_24 = arith.constant 1.000000e+00 : f32
    %53 = vector.broadcast %cst_24 : f32 to vector<8x1xf32>
    %54 = arith.minimumf %53, %52 : vector<8x1xf32>
    %55 = vector.broadcast %54 : vector<8x1xf32> to vector<8x32xf32>
    %56 = arith.mulf %7, %55 : vector<8x32xf32>
    %57 = arith.index_cast %4 : i32 to index
    %c0_25 = arith.constant 0 : index
    %58 = vector.load %arg16[%57, %c0_25] : memref<16x32xf32, #tpu.memory_space<vmem>>, vector<8x32xf32>
    tpu.vector_store %arg16[%57, %c0_25], %56 {strides = array<i32>} : memref<16x32xf32, #tpu.memory_space<vmem>>, vector<8x32xf32>,
    %c0_i32 = arith.constant 0 : i32
    %59 = arith.cmpi sgt, %arg0, %c0_i32 : i32
    %60 = arith.extui %59 : i1 to i32
    %c0_i32_26 = arith.constant 0 : i32
    %61 = arith.cmpi ne, %60, %c0_i32_26 : i32
    scf.if %61 {
      %c1_i32_80 = arith.constant 1 : i32
      %241 = arith.subi %c1_i32_80, %0 : i32
      %c8_i32_81 = arith.constant 8 : i32
      %242 = arith.muli %241, %c8_i32_81 : i32
      %243 = tpu.assume_multiple %242, 8 : i32
      %c0_i32_82 = arith.constant 0 : i32
      %244 = tpu.memref_slice %arg14[%243, %c0_i32_82] : memref<16x32xf32, #tpu.memory_space<vmem>> -> memref<8x32xf32, #tpu.memory_space<vmem>>
      %c0_i32_83 = arith.constant 0 : i32
      %c0_i32_84 = arith.constant 0 : i32
      %245 = tpu.memref_slice %arg13[%c0_i32_83, %c0_i32_84] : memref<64x32xf32, #tpu.memory_space<any>> -> memref<8x32xf32, #tpu.memory_space<any>>
      %246 = tpu.memref_slice %arg17[%241] : memref<2x!tpu.dma_semaphore, #tpu.memory_space<semaphore_mem>> -> memref<1x!tpu.dma_semaphore, #tpu.memory_space<semaphore_mem>>
      %247 = tpu.memref_squeeze %246 : memref<1x!tpu.dma_semaphore, #tpu.memory_space<semaphore_mem>> -> memref<!tpu.dma_semaphore, #tpu.memory_space<semaphore_mem>>
      tpu.wait_dma2 semaphore(%247 : memref<!tpu.dma_semaphore, #tpu.memory_space<semaphore_mem>>) src(%244 : memref<8x32xf32, #tpu.memory_space<vmem>>) dst(%245 : memref<8x32xf32, #tpu.memory_space<any>>)
      %c0_i32_85 = arith.constant 0 : i32
      %248 = tpu.memref_slice %arg15[%243, %c0_i32_85] : memref<16x32xf32, #tpu.memory_space<vmem>> -> memref<8x32xf32, #tpu.memory_space<vmem>>
      %c0_i32_86 = arith.constant 0 : i32
      %c0_i32_87 = arith.constant 0 : i32
      %249 = tpu.memref_slice %arg13[%c0_i32_86, %c0_i32_87] : memref<64x32xf32, #tpu.memory_space<any>> -> memref<8x32xf32, #tpu.memory_space<any>>
      %250 = tpu.memref_slice %arg17[%241] : memref<2x!tpu.dma_semaphore, #tpu.memory_space<semaphore_mem>> -> memref<1x!tpu.dma_semaphore, #tpu.memory_space<semaphore_mem>>
      %251 = tpu.memref_squeeze %250 : memref<1x!tpu.dma_semaphore, #tpu.memory_space<semaphore_mem>> -> memref<!tpu.dma_semaphore, #tpu.memory_space<semaphore_mem>>
      tpu.wait_dma2 semaphore(%251 : memref<!tpu.dma_semaphore, #tpu.memory_space<semaphore_mem>>) src(%248 : memref<8x32xf32, #tpu.memory_space<vmem>>) dst(%249 : memref<8x32xf32, #tpu.memory_space<any>>)
      %c0_i32_88 = arith.constant 0 : i32
      %252 = tpu.memref_slice %arg16[%243, %c0_i32_88] : memref<16x32xf32, #tpu.memory_space<vmem>> -> memref<8x32xf32, #tpu.memory_space<vmem>>
      %c0_i32_89 = arith.constant 0 : i32
      %c0_i32_90 = arith.constant 0 : i32
      %253 = tpu.memref_slice %arg13[%c0_i32_89, %c0_i32_90] : memref<64x32xf32, #tpu.memory_space<any>> -> memref<8x32xf32, #tpu.memory_space<any>>
      %254 = tpu.memref_slice %arg17[%241] : memref<2x!tpu.dma_semaphore, #tpu.memory_space<semaphore_mem>> -> memref<1x!tpu.dma_semaphore, #tpu.memory_space<semaphore_mem>>
      %255 = tpu.memref_squeeze %254 : memref<1x!tpu.dma_semaphore, #tpu.memory_space<semaphore_mem>> -> memref<!tpu.dma_semaphore, #tpu.memory_space<semaphore_mem>>
      tpu.wait_dma2 semaphore(%255 : memref<!tpu.dma_semaphore, #tpu.memory_space<semaphore_mem>>) src(%252 : memref<8x32xf32, #tpu.memory_space<vmem>>) dst(%253 : memref<8x32xf32, #tpu.memory_space<any>>)
    } else {
    }
    %c0_i32_27 = arith.constant 0 : i32
    %62 = arith.addi %2, %c0_i32_27 : i32
    %63 = arith.index_cast %62 : i32 to index
    %64 = memref.load %arg1[%63] : memref<16xi32, #tpu.memory_space<smem>>
    %65 = arith.addi %2, %c0_i32_27 : i32
    %66 = arith.index_cast %65 : i32 to index
    %67 = memref.load %arg2[%66] : memref<16xi32, #tpu.memory_space<smem>>
    %68 = arith.addi %2, %c0_i32_27 : i32
    %69 = arith.index_cast %68 : i32 to index
    %70 = memref.load %arg3[%69] : memref<16xi32, #tpu.memory_space<smem>>
    %71 = arith.addi %4, %c0_i32_27 : i32
    %c0_i32_28 = arith.constant 0 : i32
    %72 = tpu.memref_slice %arg14[%71, %c0_i32_28] : memref<16x32xf32, #tpu.memory_space<vmem>> -> memref<1x32xf32, #tpu.memory_space<vmem>>
    %c0_i32_29 = arith.constant 0 : i32
    %73 = tpu.memref_slice %arg13[%64, %c0_i32_29] : memref<64x32xf32, #tpu.memory_space<any>> -> memref<1x32xf32, #tpu.memory_space<any>>
    %74 = tpu.memref_slice %arg17[%0] : memref<2x!tpu.dma_semaphore, #tpu.memory_space<semaphore_mem>> -> memref<1x!tpu.dma_semaphore, #tpu.memory_space<semaphore_mem>>
    %75 = tpu.memref_squeeze %74 : memref<1x!tpu.dma_semaphore, #tpu.memory_space<semaphore_mem>> -> memref<!tpu.dma_semaphore, #tpu.memory_space<semaphore_mem>>
    tpu.enqueue_dma source(%72 : memref<1x32xf32, #tpu.memory_space<vmem>>) target(%73 : memref<1x32xf32, #tpu.memory_space<any>>) target_semaphore(%75 : memref<!tpu.dma_semaphore, #tpu.memory_space<semaphore_mem>>)
    %c0_i32_30 = arith.constant 0 : i32
    %76 = tpu.memref_slice %arg15[%71, %c0_i32_30] : memref<16x32xf32, #tpu.memory_space<vmem>> -> memref<1x32xf32, #tpu.memory_space<vmem>>
    %c0_i32_31 = arith.constant 0 : i32
    %77 = tpu.memref_slice %arg13[%67, %c0_i32_31] : memref<64x32xf32, #tpu.memory_space<any>> -> memref<1x32xf32, #tpu.memory_space<any>>
    %78 = tpu.memref_slice %arg17[%0] : memref<2x!tpu.dma_semaphore, #tpu.memory_space<semaphore_mem>> -> memref<1x!tpu.dma_semaphore, #tpu.memory_space<semaphore_mem>>
    %79 = tpu.memref_squeeze %78 : memref<1x!tpu.dma_semaphore, #tpu.memory_space<semaphore_mem>> -> memref<!tpu.dma_semaphore, #tpu.memory_space<semaphore_mem>>
    tpu.enqueue_dma source(%76 : memref<1x32xf32, #tpu.memory_space<vmem>>) target(%77 : memref<1x32xf32, #tpu.memory_space<any>>) target_semaphore(%79 : memref<!tpu.dma_semaphore, #tpu.memory_space<semaphore_mem>>)
    %c0_i32_32 = arith.constant 0 : i32
    %80 = tpu.memref_slice %arg16[%71, %c0_i32_32] : memref<16x32xf32, #tpu.memory_space<vmem>> -> memref<1x32xf32, #tpu.memory_space<vmem>>
    %c0_i32_33 = arith.constant 0 : i32
    %81 = tpu.memref_slice %arg13[%70, %c0_i32_33] : memref<64x32xf32, #tpu.memory_space<any>> -> memref<1x32xf32, #tpu.memory_space<any>>
    %82 = tpu.memref_slice %arg17[%0] : memref<2x!tpu.dma_semaphore, #tpu.memory_space<semaphore_mem>> -> memref<1x!tpu.dma_semaphore, #tpu.memory_space<semaphore_mem>>
    %83 = tpu.memref_squeeze %82 : memref<1x!tpu.dma_semaphore, #tpu.memory_space<semaphore_mem>> -> memref<!tpu.dma_semaphore, #tpu.memory_space<semaphore_mem>>
    tpu.enqueue_dma source(%80 : memref<1x32xf32, #tpu.memory_space<vmem>>) target(%81 : memref<1x32xf32, #tpu.memory_space<any>>) target_semaphore(%83 : memref<!tpu.dma_semaphore, #tpu.memory_space<semaphore_mem>>)
    %c1_i32_34 = arith.constant 1 : i32
    %84 = arith.addi %2, %c1_i32_34 : i32
    %85 = arith.index_cast %84 : i32 to index
    %86 = memref.load %arg1[%85] : memref<16xi32, #tpu.memory_space<smem>>
    %87 = arith.addi %2, %c1_i32_34 : i32
    %88 = arith.index_cast %87 : i32 to index
    %89 = memref.load %arg2[%88] : memref<16xi32, #tpu.memory_space<smem>>
    %90 = arith.addi %2, %c1_i32_34 : i32
    %91 = arith.index_cast %90 : i32 to index
    %92 = memref.load %arg3[%91] : memref<16xi32, #tpu.memory_space<smem>>
    %93 = arith.addi %4, %c1_i32_34 : i32
    %c0_i32_35 = arith.constant 0 : i32
    %94 = tpu.memref_slice %arg14[%93, %c0_i32_35] : memref<16x32xf32, #tpu.memory_space<vmem>> -> memref<1x32xf32, #tpu.memory_space<vmem>>
    %c0_i32_36 = arith.constant 0 : i32
    %95 = tpu.memref_slice %arg13[%86, %c0_i32_36] : memref<64x32xf32, #tpu.memory_space<any>> -> memref<1x32xf32, #tpu.memory_space<any>>
    %96 = tpu.memref_slice %arg17[%0] : memref<2x!tpu.dma_semaphore, #tpu.memory_space<semaphore_mem>> -> memref<1x!tpu.dma_semaphore, #tpu.memory_space<semaphore_mem>>
    %97 = tpu.memref_squeeze %96 : memref<1x!tpu.dma_semaphore, #tpu.memory_space<semaphore_mem>> -> memref<!tpu.dma_semaphore, #tpu.memory_space<semaphore_mem>>
    tpu.enqueue_dma source(%94 : memref<1x32xf32, #tpu.memory_space<vmem>>) target(%95 : memref<1x32xf32, #tpu.memory_space<any>>) target_semaphore(%97 : memref<!tpu.dma_semaphore, #tpu.memory_space<semaphore_mem>>)
    %c0_i32_37 = arith.constant 0 : i32
    %98 = tpu.memref_slice %arg15[%93, %c0_i32_37] : memref<16x32xf32, #tpu.memory_space<vmem>> -> memref<1x32xf32, #tpu.memory_space<vmem>>
    %c0_i32_38 = arith.constant 0 : i32
    %99 = tpu.memref_slice %arg13[%89, %c0_i32_38] : memref<64x32xf32, #tpu.memory_space<any>> -> memref<1x32xf32, #tpu.memory_space<any>>
    %100 = tpu.memref_slice %arg17[%0] : memref<2x!tpu.dma_semaphore, #tpu.memory_space<semaphore_mem>> -> memref<1x!tpu.dma_semaphore, #tpu.memory_space<semaphore_mem>>
    %101 = tpu.memref_squeeze %100 : memref<1x!tpu.dma_semaphore, #tpu.memory_space<semaphore_mem>> -> memref<!tpu.dma_semaphore, #tpu.memory_space<semaphore_mem>>
    tpu.enqueue_dma source(%98 : memref<1x32xf32, #tpu.memory_space<vmem>>) target(%99 : memref<1x32xf32, #tpu.memory_space<any>>) target_semaphore(%101 : memref<!tpu.dma_semaphore, #tpu.memory_space<semaphore_mem>>)
    %c0_i32_39 = arith.constant 0 : i32
    %102 = tpu.memref_slice %arg16[%93, %c0_i32_39] : memref<16x32xf32, #tpu.memory_space<vmem>> -> memref<1x32xf32, #tpu.memory_space<vmem>>
    %c0_i32_40 = arith.constant 0 : i32
    %103 = tpu.memref_slice %arg13[%92, %c0_i32_40] : memref<64x32xf32, #tpu.memory_space<any>> -> memref<1x32xf32, #tpu.memory_space<any>>
    %104 = tpu.memref_slice %arg17[%0] : memref<2x!tpu.dma_semaphore, #tpu.memory_space<semaphore_mem>> -> memref<1x!tpu.dma_semaphore, #tpu.memory_space<semaphore_mem>>
    %105 = tpu.memref_squeeze %104 : memref<1x!tpu.dma_semaphore, #tpu.memory_space<semaphore_mem>> -> memref<!tpu.dma_semaphore, #tpu.memory_space<semaphore_mem>>
    tpu.enqueue_dma source(%102 : memref<1x32xf32, #tpu.memory_space<vmem>>) target(%103 : memref<1x32xf32, #tpu.memory_space<any>>) target_semaphore(%105 : memref<!tpu.dma_semaphore, #tpu.memory_space<semaphore_mem>>)
    %c2_i32 = arith.constant 2 : i32
    %106 = arith.addi %2, %c2_i32 : i32
    %107 = arith.index_cast %106 : i32 to index
    %108 = memref.load %arg1[%107] : memref<16xi32, #tpu.memory_space<smem>>
    %109 = arith.addi %2, %c2_i32 : i32
    %110 = arith.index_cast %109 : i32 to index
    %111 = memref.load %arg2[%110] : memref<16xi32, #tpu.memory_space<smem>>
    %112 = arith.addi %2, %c2_i32 : i32
    %113 = arith.index_cast %112 : i32 to index
    %114 = memref.load %arg3[%113] : memref<16xi32, #tpu.memory_space<smem>>
    %115 = arith.addi %4, %c2_i32 : i32
    %c0_i32_41 = arith.constant 0 : i32
    %116 = tpu.memref_slice %arg14[%115, %c0_i32_41] : memref<16x32xf32, #tpu.memory_space<vmem>> -> memref<1x32xf32, #tpu.memory_space<vmem>>
    %c0_i32_42 = arith.constant 0 : i32
    %117 = tpu.memref_slice %arg13[%108, %c0_i32_42] : memref<64x32xf32, #tpu.memory_space<any>> -> memref<1x32xf32, #tpu.memory_space<any>>
    %118 = tpu.memref_slice %arg17[%0] : memref<2x!tpu.dma_semaphore, #tpu.memory_space<semaphore_mem>> -> memref<1x!tpu.dma_semaphore, #tpu.memory_space<semaphore_mem>>
    %119 = tpu.memref_squeeze %118 : memref<1x!tpu.dma_semaphore, #tpu.memory_space<semaphore_mem>> -> memref<!tpu.dma_semaphore, #tpu.memory_space<semaphore_mem>>
    tpu.enqueue_dma source(%116 : memref<1x32xf32, #tpu.memory_space<vmem>>) target(%117 : memref<1x32xf32, #tpu.memory_space<any>>) target_semaphore(%119 : memref<!tpu.dma_semaphore, #tpu.memory_space<semaphore_mem>>)
    %c0_i32_43 = arith.constant 0 : i32
    %120 = tpu.memref_slice %arg15[%115, %c0_i32_43] : memref<16x32xf32, #tpu.memory_space<vmem>> -> memref<1x32xf32, #tpu.memory_space<vmem>>
    %c0_i32_44 = arith.constant 0 : i32
    %121 = tpu.memref_slice %arg13[%111, %c0_i32_44] : memref<64x32xf32, #tpu.memory_space<any>> -> memref<1x32xf32, #tpu.memory_space<any>>
    %122 = tpu.memref_slice %arg17[%0] : memref<2x!tpu.dma_semaphore, #tpu.memory_space<semaphore_mem>> -> memref<1x!tpu.dma_semaphore, #tpu.memory_space<semaphore_mem>>
    %123 = tpu.memref_squeeze %122 : memref<1x!tpu.dma_semaphore, #tpu.memory_space<semaphore_mem>> -> memref<!tpu.dma_semaphore, #tpu.memory_space<semaphore_mem>>
    tpu.enqueue_dma source(%120 : memref<1x32xf32, #tpu.memory_space<vmem>>) target(%121 : memref<1x32xf32, #tpu.memory_space<any>>) target_semaphore(%123 : memref<!tpu.dma_semaphore, #tpu.memory_space<semaphore_mem>>)
    %c0_i32_45 = arith.constant 0 : i32
    %124 = tpu.memref_slice %arg16[%115, %c0_i32_45] : memref<16x32xf32, #tpu.memory_space<vmem>> -> memref<1x32xf32, #tpu.memory_space<vmem>>
    %c0_i32_46 = arith.constant 0 : i32
    %125 = tpu.memref_slice %arg13[%114, %c0_i32_46] : memref<64x32xf32, #tpu.memory_space<any>> -> memref<1x32xf32, #tpu.memory_space<any>>
    %126 = tpu.memref_slice %arg17[%0] : memref<2x!tpu.dma_semaphore, #tpu.memory_space<semaphore_mem>> -> memref<1x!tpu.dma_semaphore, #tpu.memory_space<semaphore_mem>>
    %127 = tpu.memref_squeeze %126 : memref<1x!tpu.dma_semaphore, #tpu.memory_space<semaphore_mem>> -> memref<!tpu.dma_semaphore, #tpu.memory_space<semaphore_mem>>
    tpu.enqueue_dma source(%124 : memref<1x32xf32, #tpu.memory_space<vmem>>) target(%125 : memref<1x32xf32, #tpu.memory_space<any>>) target_semaphore(%127 : memref<!tpu.dma_semaphore, #tpu.memory_space<semaphore_mem>>)
    %c3_i32 = arith.constant 3 : i32
    %128 = arith.addi %2, %c3_i32 : i32
    %129 = arith.index_cast %128 : i32 to index
    %130 = memref.load %arg1[%129] : memref<16xi32, #tpu.memory_space<smem>>
    %131 = arith.addi %2, %c3_i32 : i32
    %132 = arith.index_cast %131 : i32 to index
    %133 = memref.load %arg2[%132] : memref<16xi32, #tpu.memory_space<smem>>
    %134 = arith.addi %2, %c3_i32 : i32
    %135 = arith.index_cast %134 : i32 to index
    %136 = memref.load %arg3[%135] : memref<16xi32, #tpu.memory_space<smem>>
    %137 = arith.addi %4, %c3_i32 : i32
    %c0_i32_47 = arith.constant 0 : i32
    %138 = tpu.memref_slice %arg14[%137, %c0_i32_47] : memref<16x32xf32, #tpu.memory_space<vmem>> -> memref<1x32xf32, #tpu.memory_space<vmem>>
    %c0_i32_48 = arith.constant 0 : i32
    %139 = tpu.memref_slice %arg13[%130, %c0_i32_48] : memref<64x32xf32, #tpu.memory_space<any>> -> memref<1x32xf32, #tpu.memory_space<any>>
    %140 = tpu.memref_slice %arg17[%0] : memref<2x!tpu.dma_semaphore, #tpu.memory_space<semaphore_mem>> -> memref<1x!tpu.dma_semaphore, #tpu.memory_space<semaphore_mem>>
    %141 = tpu.memref_squeeze %140 : memref<1x!tpu.dma_semaphore, #tpu.memory_space<semaphore_mem>> -> memref<!tpu.dma_semaphore, #tpu.memory_space<semaphore_mem>>
    tpu.enqueue_dma source(%138 : memref<1x32xf32, #tpu.memory_space<vmem>>) target(%139 : memref<1x32xf32, #tpu.memory_space<any>>) target_semaphore(%141 : memref<!tpu.dma_semaphore, #tpu.memory_space<semaphore_mem>>)
    %c0_i32_49 = arith.constant 0 : i32
    %142 = tpu.memref_slice %arg15[%137, %c0_i32_49] : memref<16x32xf32, #tpu.memory_space<vmem>> -> memref<1x32xf32, #tpu.memory_space<vmem>>
    %c0_i32_50 = arith.constant 0 : i32
    %143 = tpu.memref_slice %arg13[%133, %c0_i32_50] : memref<64x32xf32, #tpu.memory_space<any>> -> memref<1x32xf32, #tpu.memory_space<any>>
    %144 = tpu.memref_slice %arg17[%0] : memref<2x!tpu.dma_semaphore, #tpu.memory_space<semaphore_mem>> -> memref<1x!tpu.dma_semaphore, #tpu.memory_space<semaphore_mem>>
    %145 = tpu.memref_squeeze %144 : memref<1x!tpu.dma_semaphore, #tpu.memory_space<semaphore_mem>> -> memref<!tpu.dma_semaphore, #tpu.memory_space<semaphore_mem>>
    tpu.enqueue_dma source(%142 : memref<1x32xf32, #tpu.memory_space<vmem>>) target(%143 : memref<1x32xf32, #tpu.memory_space<any>>) target_semaphore(%145 : memref<!tpu.dma_semaphore, #tpu.memory_space<semaphore_mem>>)
    %c0_i32_51 = arith.constant 0 : i32
    %146 = tpu.memref_slice %arg16[%137, %c0_i32_51] : memref<16x32xf32, #tpu.memory_space<vmem>> -> memref<1x32xf32, #tpu.memory_space<vmem>>
    %c0_i32_52 = arith.constant 0 : i32
    %147 = tpu.memref_slice %arg13[%136, %c0_i32_52] : memref<64x32xf32, #tpu.memory_space<any>> -> memref<1x32xf32, #tpu.memory_space<any>>
    %148 = tpu.memref_slice %arg17[%0] : memref<2x!tpu.dma_semaphore, #tpu.memory_space<semaphore_mem>> -> memref<1x!tpu.dma_semaphore, #tpu.memory_space<semaphore_mem>>
    %149 = tpu.memref_squeeze %148 : memref<1x!tpu.dma_semaphore, #tpu.memory_space<semaphore_mem>> -> memref<!tpu.dma_semaphore, #tpu.memory_space<semaphore_mem>>
    tpu.enqueue_dma source(%146 : memref<1x32xf32, #tpu.memory_space<vmem>>) target(%147 : memref<1x32xf32, #tpu.memory_space<any>>) target_semaphore(%149 : memref<!tpu.dma_semaphore, #tpu.memory_space<semaphore_mem>>)
    %c4_i32 = arith.constant 4 : i32
    %150 = arith.addi %2, %c4_i32 : i32
    %151 = arith.index_cast %150 : i32 to index
    %152 = memref.load %arg1[%151] : memref<16xi32, #tpu.memory_space<smem>>
    %153 = arith.addi %2, %c4_i32 : i32
    %154 = arith.index_cast %153 : i32 to index
    %155 = memref.load %arg2[%154] : memref<16xi32, #tpu.memory_space<smem>>
    %156 = arith.addi %2, %c4_i32 : i32
    %157 = arith.index_cast %156 : i32 to index
    %158 = memref.load %arg3[%157] : memref<16xi32, #tpu.memory_space<smem>>
    %159 = arith.addi %4, %c4_i32 : i32
    %c0_i32_53 = arith.constant 0 : i32
    %160 = tpu.memref_slice %arg14[%159, %c0_i32_53] : memref<16x32xf32, #tpu.memory_space<vmem>> -> memref<1x32xf32, #tpu.memory_space<vmem>>
    %c0_i32_54 = arith.constant 0 : i32
    %161 = tpu.memref_slice %arg13[%152, %c0_i32_54] : memref<64x32xf32, #tpu.memory_space<any>> -> memref<1x32xf32, #tpu.memory_space<any>>
    %162 = tpu.memref_slice %arg17[%0] : memref<2x!tpu.dma_semaphore, #tpu.memory_space<semaphore_mem>> -> memref<1x!tpu.dma_semaphore, #tpu.memory_space<semaphore_mem>>
    %163 = tpu.memref_squeeze %162 : memref<1x!tpu.dma_semaphore, #tpu.memory_space<semaphore_mem>> -> memref<!tpu.dma_semaphore, #tpu.memory_space<semaphore_mem>>
    tpu.enqueue_dma source(%160 : memref<1x32xf32, #tpu.memory_space<vmem>>) target(%161 : memref<1x32xf32, #tpu.memory_space<any>>) target_semaphore(%163 : memref<!tpu.dma_semaphore, #tpu.memory_space<semaphore_mem>>)
    %c0_i32_55 = arith.constant 0 : i32
    %164 = tpu.memref_slice %arg15[%159, %c0_i32_55] : memref<16x32xf32, #tpu.memory_space<vmem>> -> memref<1x32xf32, #tpu.memory_space<vmem>>
    %c0_i32_56 = arith.constant 0 : i32
    %165 = tpu.memref_slice %arg13[%155, %c0_i32_56] : memref<64x32xf32, #tpu.memory_space<any>> -> memref<1x32xf32, #tpu.memory_space<any>>
    %166 = tpu.memref_slice %arg17[%0] : memref<2x!tpu.dma_semaphore, #tpu.memory_space<semaphore_mem>> -> memref<1x!tpu.dma_semaphore, #tpu.memory_space<semaphore_mem>>
    %167 = tpu.memref_squeeze %166 : memref<1x!tpu.dma_semaphore, #tpu.memory_space<semaphore_mem>> -> memref<!tpu.dma_semaphore, #tpu.memory_space<semaphore_mem>>
    tpu.enqueue_dma source(%164 : memref<1x32xf32, #tpu.memory_space<vmem>>) target(%165 : memref<1x32xf32, #tpu.memory_space<any>>) target_semaphore(%167 : memref<!tpu.dma_semaphore, #tpu.memory_space<semaphore_mem>>)
    %c0_i32_57 = arith.constant 0 : i32
    %168 = tpu.memref_slice %arg16[%159, %c0_i32_57] : memref<16x32xf32, #tpu.memory_space<vmem>> -> memref<1x32xf32, #tpu.memory_space<vmem>>
    %c0_i32_58 = arith.constant 0 : i32
    %169 = tpu.memref_slice %arg13[%158, %c0_i32_58] : memref<64x32xf32, #tpu.memory_space<any>> -> memref<1x32xf32, #tpu.memory_space<any>>
    %170 = tpu.memref_slice %arg17[%0] : memref<2x!tpu.dma_semaphore, #tpu.memory_space<semaphore_mem>> -> memref<1x!tpu.dma_semaphore, #tpu.memory_space<semaphore_mem>>
    %171 = tpu.memref_squeeze %170 : memref<1x!tpu.dma_semaphore, #tpu.memory_space<semaphore_mem>> -> memref<!tpu.dma_semaphore, #tpu.memory_space<semaphore_mem>>
    tpu.enqueue_dma source(%168 : memref<1x32xf32, #tpu.memory_space<vmem>>) target(%169 : memref<1x32xf32, #tpu.memory_space<any>>) target_semaphore(%171 : memref<!tpu.dma_semaphore, #tpu.memory_space<semaphore_mem>>)
    %c5_i32 = arith.constant 5 : i32
    %172 = arith.addi %2, %c5_i32 : i32
    %173 = arith.index_cast %172 : i32 to index
    %174 = memref.load %arg1[%173] : memref<16xi32, #tpu.memory_space<smem>>
    %175 = arith.addi %2, %c5_i32 : i32
    %176 = arith.index_cast %175 : i32 to index
    %177 = memref.load %arg2[%176] : memref<16xi32, #tpu.memory_space<smem>>
    %178 = arith.addi %2, %c5_i32 : i32
    %179 = arith.index_cast %178 : i32 to index
    %180 = memref.load %arg3[%179] : memref<16xi32, #tpu.memory_space<smem>>
    %181 = arith.addi %4, %c5_i32 : i32
    %c0_i32_59 = arith.constant 0 : i32
    %182 = tpu.memref_slice %arg14[%181, %c0_i32_59] : memref<16x32xf32, #tpu.memory_space<vmem>> -> memref<1x32xf32, #tpu.memory_space<vmem>>
    %c0_i32_60 = arith.constant 0 : i32
    %183 = tpu.memref_slice %arg13[%174, %c0_i32_60] : memref<64x32xf32, #tpu.memory_space<any>> -> memref<1x32xf32, #tpu.memory_space<any>>
    %184 = tpu.memref_slice %arg17[%0] : memref<2x!tpu.dma_semaphore, #tpu.memory_space<semaphore_mem>> -> memref<1x!tpu.dma_semaphore, #tpu.memory_space<semaphore_mem>>
    %185 = tpu.memref_squeeze %184 : memref<1x!tpu.dma_semaphore, #tpu.memory_space<semaphore_mem>> -> memref<!tpu.dma_semaphore, #tpu.memory_space<semaphore_mem>>
    tpu.enqueue_dma source(%182 : memref<1x32xf32, #tpu.memory_space<vmem>>) target(%183 : memref<1x32xf32, #tpu.memory_space<any>>) target_semaphore(%185 : memref<!tpu.dma_semaphore, #tpu.memory_space<semaphore_mem>>)
    %c0_i32_61 = arith.constant 0 : i32
    %186 = tpu.memref_slice %arg15[%181, %c0_i32_61] : memref<16x32xf32, #tpu.memory_space<vmem>> -> memref<1x32xf32, #tpu.memory_space<vmem>>
    %c0_i32_62 = arith.constant 0 : i32
    %187 = tpu.memref_slice %arg13[%177, %c0_i32_62] : memref<64x32xf32, #tpu.memory_space<any>> -> memref<1x32xf32, #tpu.memory_space<any>>
    %188 = tpu.memref_slice %arg17[%0] : memref<2x!tpu.dma_semaphore, #tpu.memory_space<semaphore_mem>> -> memref<1x!tpu.dma_semaphore, #tpu.memory_space<semaphore_mem>>
    %189 = tpu.memref_squeeze %188 : memref<1x!tpu.dma_semaphore, #tpu.memory_space<semaphore_mem>> -> memref<!tpu.dma_semaphore, #tpu.memory_space<semaphore_mem>>
    tpu.enqueue_dma source(%186 : memref<1x32xf32, #tpu.memory_space<vmem>>) target(%187 : memref<1x32xf32, #tpu.memory_space<any>>) target_semaphore(%189 : memref<!tpu.dma_semaphore, #tpu.memory_space<semaphore_mem>>)
    %c0_i32_63 = arith.constant 0 : i32
    %190 = tpu.memref_slice %arg16[%181, %c0_i32_63] : memref<16x32xf32, #tpu.memory_space<vmem>> -> memref<1x32xf32, #tpu.memory_space<vmem>>
    %c0_i32_64 = arith.constant 0 : i32
    %191 = tpu.memref_slice %arg13[%180, %c0_i32_64] : memref<64x32xf32, #tpu.memory_space<any>> -> memref<1x32xf32, #tpu.memory_space<any>>
    %192 = tpu.memref_slice %arg17[%0] : memref<2x!tpu.dma_semaphore, #tpu.memory_space<semaphore_mem>> -> memref<1x!tpu.dma_semaphore, #tpu.memory_space<semaphore_mem>>
    %193 = tpu.memref_squeeze %192 : memref<1x!tpu.dma_semaphore, #tpu.memory_space<semaphore_mem>> -> memref<!tpu.dma_semaphore, #tpu.memory_space<semaphore_mem>>
    tpu.enqueue_dma source(%190 : memref<1x32xf32, #tpu.memory_space<vmem>>) target(%191 : memref<1x32xf32, #tpu.memory_space<any>>) target_semaphore(%193 : memref<!tpu.dma_semaphore, #tpu.memory_space<semaphore_mem>>)
    %c6_i32 = arith.constant 6 : i32
    %194 = arith.addi %2, %c6_i32 : i32
    %195 = arith.index_cast %194 : i32 to index
    %196 = memref.load %arg1[%195] : memref<16xi32, #tpu.memory_space<smem>>
    %197 = arith.addi %2, %c6_i32 : i32
    %198 = arith.index_cast %197 : i32 to index
    %199 = memref.load %arg2[%198] : memref<16xi32, #tpu.memory_space<smem>>
    %200 = arith.addi %2, %c6_i32 : i32
    %201 = arith.index_cast %200 : i32 to index
    %202 = memref.load %arg3[%201] : memref<16xi32, #tpu.memory_space<smem>>
    %203 = arith.addi %4, %c6_i32 : i32
    %c0_i32_65 = arith.constant 0 : i32
    %204 = tpu.memref_slice %arg14[%203, %c0_i32_65] : memref<16x32xf32, #tpu.memory_space<vmem>> -> memref<1x32xf32, #tpu.memory_space<vmem>>
    %c0_i32_66 = arith.constant 0 : i32
    %205 = tpu.memref_slice %arg13[%196, %c0_i32_66] : memref<64x32xf32, #tpu.memory_space<any>> -> memref<1x32xf32, #tpu.memory_space<any>>
    %206 = tpu.memref_slice %arg17[%0] : memref<2x!tpu.dma_semaphore, #tpu.memory_space<semaphore_mem>> -> memref<1x!tpu.dma_semaphore, #tpu.memory_space<semaphore_mem>>
    %207 = tpu.memref_squeeze %206 : memref<1x!tpu.dma_semaphore, #tpu.memory_space<semaphore_mem>> -> memref<!tpu.dma_semaphore, #tpu.memory_space<semaphore_mem>>
    tpu.enqueue_dma source(%204 : memref<1x32xf32, #tpu.memory_space<vmem>>) target(%205 : memref<1x32xf32, #tpu.memory_space<any>>) target_semaphore(%207 : memref<!tpu.dma_semaphore, #tpu.memory_space<semaphore_mem>>)
    %c0_i32_67 = arith.constant 0 : i32
    %208 = tpu.memref_slice %arg15[%203, %c0_i32_67] : memref<16x32xf32, #tpu.memory_space<vmem>> -> memref<1x32xf32, #tpu.memory_space<vmem>>
    %c0_i32_68 = arith.constant 0 : i32
    %209 = tpu.memref_slice %arg13[%199, %c0_i32_68] : memref<64x32xf32, #tpu.memory_space<any>> -> memref<1x32xf32, #tpu.memory_space<any>>
    %210 = tpu.memref_slice %arg17[%0] : memref<2x!tpu.dma_semaphore, #tpu.memory_space<semaphore_mem>> -> memref<1x!tpu.dma_semaphore, #tpu.memory_space<semaphore_mem>>
    %211 = tpu.memref_squeeze %210 : memref<1x!tpu.dma_semaphore, #tpu.memory_space<semaphore_mem>> -> memref<!tpu.dma_semaphore, #tpu.memory_space<semaphore_mem>>
    tpu.enqueue_dma source(%208 : memref<1x32xf32, #tpu.memory_space<vmem>>) target(%209 : memref<1x32xf32, #tpu.memory_space<any>>) target_semaphore(%211 : memref<!tpu.dma_semaphore, #tpu.memory_space<semaphore_mem>>)
    %c0_i32_69 = arith.constant 0 : i32
    %212 = tpu.memref_slice %arg16[%203, %c0_i32_69] : memref<16x32xf32, #tpu.memory_space<vmem>> -> memref<1x32xf32, #tpu.memory_space<vmem>>
    %c0_i32_70 = arith.constant 0 : i32
    %213 = tpu.memref_slice %arg13[%202, %c0_i32_70] : memref<64x32xf32, #tpu.memory_space<any>> -> memref<1x32xf32, #tpu.memory_space<any>>
    %214 = tpu.memref_slice %arg17[%0] : memref<2x!tpu.dma_semaphore, #tpu.memory_space<semaphore_mem>> -> memref<1x!tpu.dma_semaphore, #tpu.memory_space<semaphore_mem>>
    %215 = tpu.memref_squeeze %214 : memref<1x!tpu.dma_semaphore, #tpu.memory_space<semaphore_mem>> -> memref<!tpu.dma_semaphore, #tpu.memory_space<semaphore_mem>>
    tpu.enqueue_dma source(%212 : memref<1x32xf32, #tpu.memory_space<vmem>>) target(%213 : memref<1x32xf32, #tpu.memory_space<any>>) target_semaphore(%215 : memref<!tpu.dma_semaphore, #tpu.memory_space<semaphore_mem>>)
    %c7_i32 = arith.constant 7 : i32
    %216 = arith.addi %2, %c7_i32 : i32
    %217 = arith.index_cast %216 : i32 to index
    %218 = memref.load %arg1[%217] : memref<16xi32, #tpu.memory_space<smem>>
    %219 = arith.addi %2, %c7_i32 : i32
    %220 = arith.index_cast %219 : i32 to index
    %221 = memref.load %arg2[%220] : memref<16xi32, #tpu.memory_space<smem>>
    %222 = arith.addi %2, %c7_i32 : i32
    %223 = arith.index_cast %222 : i32 to index
    %224 = memref.load %arg3[%223] : memref<16xi32, #tpu.memory_space<smem>>
    %225 = arith.addi %4, %c7_i32 : i32
    %c0_i32_71 = arith.constant 0 : i32
    %226 = tpu.memref_slice %arg14[%225, %c0_i32_71] : memref<16x32xf32, #tpu.memory_space<vmem>> -> memref<1x32xf32, #tpu.memory_space<vmem>>
    %c0_i32_72 = arith.constant 0 : i32
    %227 = tpu.memref_slice %arg13[%218, %c0_i32_72] : memref<64x32xf32, #tpu.memory_space<any>> -> memref<1x32xf32, #tpu.memory_space<any>>
    %228 = tpu.memref_slice %arg17[%0] : memref<2x!tpu.dma_semaphore, #tpu.memory_space<semaphore_mem>> -> memref<1x!tpu.dma_semaphore, #tpu.memory_space<semaphore_mem>>
    %229 = tpu.memref_squeeze %228 : memref<1x!tpu.dma_semaphore, #tpu.memory_space<semaphore_mem>> -> memref<!tpu.dma_semaphore, #tpu.memory_space<semaphore_mem>>
    tpu.enqueue_dma source(%226 : memref<1x32xf32, #tpu.memory_space<vmem>>) target(%227 : memref<1x32xf32, #tpu.memory_space<any>>) target_semaphore(%229 : memref<!tpu.dma_semaphore, #tpu.memory_space<semaphore_mem>>)
    %c0_i32_73 = arith.constant 0 : i32
    %230 = tpu.memref_slice %arg15[%225, %c0_i32_73] : memref<16x32xf32, #tpu.memory_space<vmem>> -> memref<1x32xf32, #tpu.memory_space<vmem>>
    %c0_i32_74 = arith.constant 0 : i32
    %231 = tpu.memref_slice %arg13[%221, %c0_i32_74] : memref<64x32xf32, #tpu.memory_space<any>> -> memref<1x32xf32, #tpu.memory_space<any>>
    %232 = tpu.memref_slice %arg17[%0] : memref<2x!tpu.dma_semaphore, #tpu.memory_space<semaphore_mem>> -> memref<1x!tpu.dma_semaphore, #tpu.memory_space<semaphore_mem>>
    %233 = tpu.memref_squeeze %232 : memref<1x!tpu.dma_semaphore, #tpu.memory_space<semaphore_mem>> -> memref<!tpu.dma_semaphore, #tpu.memory_space<semaphore_mem>>
    tpu.enqueue_dma source(%230 : memref<1x32xf32, #tpu.memory_space<vmem>>) target(%231 : memref<1x32xf32, #tpu.memory_space<any>>) target_semaphore(%233 : memref<!tpu.dma_semaphore, #tpu.memory_space<semaphore_mem>>)
    %c0_i32_75 = arith.constant 0 : i32
    %234 = tpu.memref_slice %arg16[%225, %c0_i32_75] : memref<16x32xf32, #tpu.memory_space<vmem>> -> memref<1x32xf32, #tpu.memory_space<vmem>>
    %c0_i32_76 = arith.constant 0 : i32
    %235 = tpu.memref_slice %arg13[%224, %c0_i32_76] : memref<64x32xf32, #tpu.memory_space<any>> -> memref<1x32xf32, #tpu.memory_space<any>>
    %236 = tpu.memref_slice %arg17[%0] : memref<2x!tpu.dma_semaphore, #tpu.memory_space<semaphore_mem>> -> memref<1x!tpu.dma_semaphore, #tpu.memory_space<semaphore_mem>>
    %237 = tpu.memref_squeeze %236 : memref<1x!tpu.dma_semaphore, #tpu.memory_space<semaphore_mem>> -> memref<!tpu.dma_semaphore, #tpu.memory_space<semaphore_mem>>
    tpu.enqueue_dma source(%234 : memref<1x32xf32, #tpu.memory_space<vmem>>) target(%235 : memref<1x32xf32, #tpu.memory_space<any>>) target_semaphore(%237 : memref<!tpu.dma_semaphore, #tpu.memory_space<semaphore_mem>>)
    %c8_i32_77 = arith.constant 8 : i32
    %c1_i32_78 = arith.constant 1 : i32
    %238 = arith.cmpi eq, %arg0, %c1_i32_78 : i32
    %239 = arith.extui %238 : i1 to i32
    %c0_i32_79 = arith.constant 0 : i32
    %240 = arith.cmpi ne, %239, %c0_i32_79 : i32
    scf.if %240 {
      %c8_i32_80 = arith.constant 8 : i32
      %241 = arith.muli %0, %c8_i32_80 : i32
      %242 = tpu.assume_multiple %241, 8 : i32
      %c0_i32_81 = arith.constant 0 : i32
      %243 = tpu.memref_slice %arg14[%242, %c0_i32_81] : memref<16x32xf32, #tpu.memory_space<vmem>> -> memref<8x32xf32, #tpu.memory_space<vmem>>
      %c0_i32_82 = arith.constant 0 : i32
      %c0_i32_83 = arith.constant 0 : i32
      %244 = tpu.memref_slice %arg13[%c0_i32_82, %c0_i32_83] : memref<64x32xf32, #tpu.memory_space<any>> -> memref<8x32xf32, #tpu.memory_space<any>>
      %245 = tpu.memref_slice %arg17[%0] : memref<2x!tpu.dma_semaphore, #tpu.memory_space<semaphore_mem>> -> memref<1x!tpu.dma_semaphore, #tpu.memory_space<semaphore_mem>>
      %246 = tpu.memref_squeeze %245 : memref<1x!tpu.dma_semaphore, #tpu.memory_space<semaphore_mem>> -> memref<!tpu.dma_semaphore, #tpu.memory_space<semaphore_mem>>
      tpu.wait_dma2 semaphore(%246 : memref<!tpu.dma_semaphore, #tpu.memory_space<semaphore_mem>>) src(%243 : memref<8x32xf32, #tpu.memory_space<vmem>>) dst(%244 : memref<8x32xf32, #tpu.memory_space<any>>)
      %c0_i32_84 = arith.constant 0 : i32
      %247 = tpu.memref_slice %arg15[%242, %c0_i32_84] : memref<16x32xf32, #tpu.memory_space<vmem>> -> memref<8x32xf32, #tpu.memory_space<vmem>>
      %c0_i32_85 = arith.constant 0 : i32
      %c0_i32_86 = arith.constant 0 : i32
      %248 = tpu.memref_slice %arg13[%c0_i32_85, %c0_i32_86] : memref<64x32xf32, #tpu.memory_space<any>> -> memref<8x32xf32, #tpu.memory_space<any>>
      %249 = tpu.memref_slice %arg17[%0] : memref<2x!tpu.dma_semaphore, #tpu.memory_space<semaphore_mem>> -> memref<1x!tpu.dma_semaphore, #tpu.memory_space<semaphore_mem>>
      %250 = tpu.memref_squeeze %249 : memref<1x!tpu.dma_semaphore, #tpu.memory_space<semaphore_mem>> -> memref<!tpu.dma_semaphore, #tpu.memory_space<semaphore_mem>>
      tpu.wait_dma2 semaphore(%250 : memref<!tpu.dma_semaphore, #tpu.memory_space<semaphore_mem>>) src(%247 : memref<8x32xf32, #tpu.memory_space<vmem>>) dst(%248 : memref<8x32xf32, #tpu.memory_space<any>>)
      %c0_i32_87 = arith.constant 0 : i32
      %251 = tpu.memref_slice %arg16[%242, %c0_i32_87] : memref<16x32xf32, #tpu.memory_space<vmem>> -> memref<8x32xf32, #tpu.memory_space<vmem>>
      %c0_i32_88 = arith.constant 0 : i32
      %c0_i32_89 = arith.constant 0 : i32
      %252 = tpu.memref_slice %arg13[%c0_i32_88, %c0_i32_89] : memref<64x32xf32, #tpu.memory_space<any>> -> memref<8x32xf32, #tpu.memory_space<any>>
      %253 = tpu.memref_slice %arg17[%0] : memref<2x!tpu.dma_semaphore, #tpu.memory_space<semaphore_mem>> -> memref<1x!tpu.dma_semaphore, #tpu.memory_space<semaphore_mem>>
      %254 = tpu.memref_squeeze %253 : memref<1x!tpu.dma_semaphore, #tpu.memory_space<semaphore_mem>> -> memref<!tpu.dma_semaphore, #tpu.memory_space<semaphore_mem>>
      tpu.wait_dma2 semaphore(%254 : memref<!tpu.dma_semaphore, #tpu.memory_space<semaphore_mem>>) src(%251 : memref<8x32xf32, #tpu.memory_space<vmem>>) dst(%252 : memref<8x32xf32, #tpu.memory_space<any>>)
    } else {
    }
    return
  }
  func.func @transform_0(%arg0: i32, %arg1: memref<16xi32, #tpu.memory_space<smem>>, %arg2: memref<16xi32, #tpu.memory_space<smem>>, %arg3: memref<16xi32, #tpu.memory_space<smem>>) -> (i32, i32) {
    %c0_i32 = arith.constant 0 : i32
    %c0_i32_0 = arith.constant 0 : i32
    return %arg0, %c0_i32 : i32, i32
  }
  func.func @transform_1(%arg0: i32, %arg1: memref<16xi32, #tpu.memory_space<smem>>, %arg2: memref<16xi32, #tpu.memory_space<smem>>, %arg3: memref<16xi32, #tpu.memory_space<smem>>) -> (i32, i32) {
    %c0_i32 = arith.constant 0 : i32
    %c0_i32_0 = arith.constant 0 : i32
    return %arg0, %c0_i32 : i32, i32
  }
  func.func @transform_2(%arg0: i32, %arg1: memref<16xi32, #tpu.memory_space<smem>>, %arg2: memref<16xi32, #tpu.memory_space<smem>>, %arg3: memref<16xi32, #tpu.memory_space<smem>>) -> (i32, i32) {
    %c0_i32 = arith.constant 0 : i32
    %c0_i32_0 = arith.constant 0 : i32
    return %arg0, %c0_i32 : i32, i32
  }
  func.func @transform_3(%arg0: i32, %arg1: memref<16xi32, #tpu.memory_space<smem>>, %arg2: memref<16xi32, #tpu.memory_space<smem>>, %arg3: memref<16xi32, #tpu.memory_space<smem>>) -> (i32, i32) {
    %c0_i32 = arith.constant 0 : i32
    %c0_i32_0 = arith.constant 0 : i32
    return %arg0, %c0_i32 : i32, i32
  }
  func.func @transform_4(%arg0: i32, %arg1: memref<16xi32, #tpu.memory_space<smem>>, %arg2: memref<16xi32, #tpu.memory_space<smem>>, %arg3: memref<16xi32, #tpu.memory_space<smem>>) -> (i32, i32) {
    %c0_i32 = arith.constant 0 : i32
    %c0_i32_0 = arith.constant 0 : i32
    %c0_i32_1 = arith.constant 0 : i32
    return %c0_i32, %c0_i32_0 : i32, i32
  }
  func.func @transform_5(%arg0: i32, %arg1: memref<16xi32, #tpu.memory_space<smem>>, %arg2: memref<16xi32, #tpu.memory_space<smem>>, %arg3: memref<16xi32, #tpu.memory_space<smem>>) -> (i32, i32) {
    %c0_i32 = arith.constant 0 : i32
    %c0_i32_0 = arith.constant 0 : i32
    return %arg0, %c0_i32 : i32, i32
  }
  func.func @transform_6(%arg0: i32, %arg1: memref<16xi32, #tpu.memory_space<smem>>, %arg2: memref<16xi32, #tpu.memory_space<smem>>, %arg3: memref<16xi32, #tpu.memory_space<smem>>) -> (i32, i32) {
    %c0_i32 = arith.constant 0 : i32
    %c0_i32_0 = arith.constant 0 : i32
    return %arg0, %c0_i32 : i32, i32
  }
  func.func @transform_8(%arg0: i32, %arg1: memref<16xi32, #tpu.memory_space<smem>>, %arg2: memref<16xi32, #tpu.memory_space<smem>>, %arg3: memref<16xi32, #tpu.memory_space<smem>>) -> (i32, i32) {
    %c0_i32 = arith.constant 0 : i32
    %c0_i32_0 = arith.constant 0 : i32
    return %arg0, %c0_i32 : i32, i32
  }
}

</mosaic_0001>

<llo_original>
// kernel: _transrec_forward_impl.1
$region0: #{_transrec_forward_impl.1}
  #allocation0 [shape = 'u32[]', space=smem, size = 0x4, offset = 0x4, fixed_abs, tag = 'smem constant byte address 0x4 - core index']
  #allocation1 [shape = 'u32[144,128]{1,0:T(1,128)}', space=vmem, size = 0x12000, scoped, tag = 'internal scratch']
  #allocation2 [shape = 'f32[16,32]{1,0:T(8,128)}', space=vmem, size = 0x2000, scoped, tag = 'scratch operand']
  #allocation3 [shape = 'f32[16,32]{1,0:T(8,128)}', space=vmem, size = 0x2000, scoped, tag = 'scratch operand']
  #allocation4 [shape = 'f32[16,32]{1,0:T(8,128)}', space=vmem, size = 0x2000, scoped, tag = 'scratch operand']
  #allocation5 [shape = 's32[2]{0}', space=sflag, size = 0x8, scoped, tag = 'scratch operand']
  #allocation6 [shape = 's32[1]{0}', space=sflag, size = 0x4, scoped, tag = 'scoped memory for _transrec_forward_impl.1']
  #allocation7 [shape = 'u8[512]{0}', space=smem, size = 0x200, scoped, tag = 'prefetched SMEM operand 0']
  #allocation8 [shape = 'u8[512]{0}', space=smem, size = 0x200, scoped, tag = 'prefetched SMEM operand 1']
  #allocation9 [shape = 'u8[512]{0}', space=smem, size = 0x200, scoped, tag = 'prefetched SMEM operand 2']
  #allocation10 [shape = 's32[]', space=sflag, size = 0x4, offset = 0, fixed_abs, tag = 'sflag constant byte address 0x0 - dummy sync flag']
  #allocation11 [shape = 's32[]', space=sflag, size = 0x4, offset = 0, fixed_abs, tag = 'sflag constant byte address 0x0 - dummy sync flag']
  #allocation12 [shape = 's32[]', space=sflag, size = 0x4, offset = 0, fixed_abs, tag = 'sflag constant byte address 0x0 - dummy sync flag']
  #allocation13 [shape = 's32[]', space=sflag, size = 0x4, offset = 0, fixed_abs, tag = 'sflag constant byte address 0x0 - dummy sync flag']
  #allocation14 [shape = 's32[]', space=sflag, size = 0x4, offset = 0, fixed_abs, tag = 'sflag constant byte address 0x0 - dummy sync flag']
  #allocation15 [shape = 's32[]', space=sflag, size = 0x4, offset = 0, fixed_abs, tag = 'sflag constant byte address 0x0 - dummy sync flag']
  #allocation16 [shape = 's32[]', space=sflag, size = 0x4, offset = 0, fixed_abs, tag = 'sflag constant byte address 0x0 - dummy sync flag']
  #allocation17 [shape = 's32[]', space=sflag, size = 0x4, offset = 0, fixed_abs, tag = 'sflag constant byte address 0x0 - dummy sync flag']
  #allocation18 [shape = 's32[]', space=sflag, size = 0x4, offset = 0, fixed_abs, tag = 'sflag constant byte address 0x0 - dummy sync flag']
  #allocation19 [shape = 's32[]', space=sflag, size = 0x4, offset = 0, fixed_abs, tag = 'sflag constant byte address 0x0 - dummy sync flag']
  #allocation20 [shape = 's32[]', space=sflag, size = 0x4, offset = 0, fixed_abs, tag = 'sflag constant byte address 0x0 - dummy sync flag']
  #allocation21 [shape = 's32[]', space=sflag, size = 0x4, offset = 0, fixed_abs, tag = 'sflag constant byte address 0x0 - dummy sync flag']
  #allocation22 [shape = 's32[]', space=sflag, size = 0x4, offset = 0, fixed_abs, tag = 'sflag constant byte address 0x0 - dummy sync flag']
  #allocation23 [shape = 's32[]', space=sflag, size = 0x4, offset = 0, fixed_abs, tag = 'sflag constant byte address 0x0 - dummy sync flag']
  #allocation24 [shape = 's32[]', space=sflag, size = 0x4, offset = 0, fixed_abs, tag = 'sflag constant byte address 0x0 - dummy sync flag']
  #allocation25 [shape = 's32[]', space=sflag, size = 0x4, offset = 0, fixed_abs, tag = 'sflag constant byte address 0x0 - dummy sync flag']
  #allocation26 [shape = 's32[]', space=sflag, size = 0x4, offset = 0, fixed_abs, tag = 'sflag constant byte address 0x0 - dummy sync flag']
  #allocation27 [shape = 's32[]', space=sflag, size = 0x4, offset = 0, fixed_abs, tag = 'sflag constant byte address 0x0 - dummy sync flag']
  #allocation28 [shape = 's32[]', space=sflag, size = 0x4, offset = 0, fixed_abs, tag = 'sflag constant byte address 0x0 - dummy sync flag']
  #allocation29 [shape = 's32[]', space=sflag, size = 0x4, offset = 0, fixed_abs, tag = 'sflag constant byte address 0x0 - dummy sync flag']
  #allocation30 [shape = 's32[]', space=sflag, size = 0x4, offset = 0, fixed_abs, tag = 'sflag constant byte address 0x0 - dummy sync flag']
  #allocation31 [shape = 's32[]', space=sflag, size = 0x4, offset = 0, fixed_abs, tag = 'sflag constant byte address 0x0 - dummy sync flag']
  #allocation32 [shape = 's32[]', space=sflag, size = 0x4, offset = 0, fixed_abs, tag = 'sflag constant byte address 0x0 - dummy sync flag']
  #allocation33 [shape = 's32[]', space=sflag, size = 0x4, offset = 0, fixed_abs, tag = 'sflag constant byte address 0x0 - dummy sync flag']
  %s0 = inlined_call_operand.vmem [shape: s32[16], index: 0, kind: input, shape index: {}]
  %s1 = inlined_call_operand.vmem [shape: s32[16], index: 1, kind: input, shape index: {}]
  %s2 = inlined_call_operand.vmem [shape: s32[16], index: 2, kind: input, shape index: {}]
  %s3 = inlined_call_operand.vmem [shape: f32[16,32], index: 3, kind: input, shape index: {}]
  %s4 = inlined_call_operand.vmem [shape: f32[16,32], index: 4, kind: input, shape index: {}]
  %s5 = inlined_call_operand.vmem [shape: f32[16,32], index: 5, kind: input, shape index: {}]
  %s6 = inlined_call_operand.vmem [shape: f32[16,32], index: 6, kind: input, shape index: {}]
  %s7 = inlined_call_operand.vmem [shape: f32[1,32], index: 7, kind: input, shape index: {}]
  %s8 = inlined_call_operand.vmem [shape: f32[16,1], index: 8, kind: input, shape index: {}]
  %s9 = inlined_call_operand.vmem [shape: f32[16,1], index: 9, kind: input, shape index: {}]
  %s10 = inlined_call_operand.vmem [shape: f32[64,32], index: 10, kind: input, shape index: {}, may-alias: {10,12}]
  %s11 = inlined_call_operand.vmem [shape: f32[16,1], index: 11, kind: output, shape index: {0}]
  %s12 = inlined_call_operand.vmem [shape: f32[64,32], index: 12, kind: output, shape index: {1}, may-alias: {10,12}]
  %13 = xla_tuple %s11, %s12
  %s14 = sld [smem:[#allocation0]]
  $region789: #{_transrec_forward_impl.1} parent=0
    _
  %s16 = ssub.s32 1, %s14
  %s17 = scalar_select 0, %s16, %s14
  %s18 = sshll.u32 %s0, 4
  %s19 = int_to_ptr.vmem [resolvable:$true] %s18
  %21 = dma.vmem_to_smem %s19, 16, [#allocation7], [#allocation6]
  %s22 = sshll.u32 %s1, 4
  %s23 = int_to_ptr.vmem [resolvable:$true] %s22
  %25 = dma.vmem_to_smem %s23, 16, [#allocation8], [#allocation6]
  %s26 = sshll.u32 %s2, 4
  %s27 = int_to_ptr.vmem [resolvable:$true] %s26
  %29 = dma.vmem_to_smem %s27, 16, [#allocation9], [#allocation6]
  %30 = dma.done [#allocation6], 48
  %31 = sfence
  loop: start=0, step=1, limit=4
  $region2: #{_transrec_forward_impl.1} parent=0 // loop_pre_header
    _
  $region3: #{_transrec_forward_impl.1} parent=0 // loop_header
    %s33 = sphi 0, %s37
    %p34 = scmp.ge.s32.totalorder %s33, 4
    %s43 = sphi 0, %s45
    %s46 = sphi 0, %s43
    %s47 = sphi 0, %s46
    %s63 = sphi 0, %s47
    %s69 = sphi 0, %s71
    %s72 = sphi 0, %s69
    %s73 = sphi 0, %s72
    %s89 = sphi 0, %s73
    %s95 = sphi 0, %s97
    %s98 = sphi 0, %s95
    %s99 = sphi 0, %s98
    %s115 = sphi 0, %s99
    %s121 = sphi 0, %s123
    %s124 = sphi 0, %s121
    %s125 = sphi 0, %s124
    %s141 = sphi 0, %s125
    %s145 = sphi 0, %s145
    %s147 = sphi 0, %s145
    %s148 = sphi 0, %s147
    %s162 = sphi 0, %s148
    %s168 = sphi 0, %s170
    %s171 = sphi 0, %s168
    %s172 = sphi 0, %s171
    %s188 = sphi 0, %s172
    %s194 = sphi 0, %s196
    %s197 = sphi 0, %s194
    %s198 = sphi 0, %s197
    %s214 = sphi 0, %s198
    %s220 = sphi 0, %s222
    %s223 = sphi 0, %s220
    %s224 = sphi 0, %s223
    %s240 = sphi 0, %s224
  $region4: #{_transrec_forward_impl.1} parent=0 // loop_header_branch
    %36 = sbr.rel (%p34) target = $region8
  $region5: #{_transrec_forward_impl.1} parent=0 // loop_body
    %s38 = ssub.s32 %s33, 1
    %s39 = ssub.s32 %s33, 2
    %s40 = sadd.s32 %s33, 1
    %s41 = ssub.s32 %s33, %s40
    %p42 = scmp.eq.s32.totalorder %s41, 0
    %s44 = sadd.s32 %s43, 1
    %s45 = scalar_select %p42, %s43, %s44
    %p48 = pneg %p42
    %p49 = scmp.eq.s32.totalorder %s33, 1
    %p50 = por %p48, %p49
    %p51 = scmp.ne.s32.totalorder %s43, %s46
    %p52 = scmp.eq.s32.totalorder %s33, 0
    %p53 = por %p51, %p52
    %p54 = scmp.ne.s32.totalorder %s43, %s46
    %p55 = scmp.eq.s32.totalorder %s38, 1
    %p56 = por %p54, %p55
    %p57 = scmp.ne.s32.totalorder %s46, %s47
    %p58 = scmp.eq.s32.totalorder %s38, 0
    %p59 = por %p57, %p58
    %p60 = scmp.ne.s32.totalorder %s46, %s47
    %p61 = scmp.eq.s32.totalorder %s39, 1
    %p62 = por %p60, %p61
    %p64 = scmp.ne.s32.totalorder %s47, %s63
    %p65 = scmp.eq.s32.totalorder %s39, 0
    %p66 = por %p64, %p65
    %s67 = ssub.s32 %s33, %s40
    %p68 = scmp.eq.s32.totalorder %s67, 0
    %s70 = sadd.s32 %s69, 1
    %s71 = scalar_select %p68, %s69, %s70
    %p74 = pneg %p68
    %p75 = scmp.eq.s32.totalorder %s33, 1
    %p76 = por %p74, %p75
    %p77 = scmp.ne.s32.totalorder %s69, %s72
    %p78 = scmp.eq.s32.totalorder %s33, 0
    %p79 = por %p77, %p78
    %p80 = scmp.ne.s32.totalorder %s69, %s72
    %p81 = scmp.eq.s32.totalorder %s38, 1
    %p82 = por %p80, %p81
    %p83 = scmp.ne.s32.totalorder %s72, %s73
    %p84 = scmp.eq.s32.totalorder %s38, 0
    %p85 = por %p83, %p84
    %p86 = scmp.ne.s32.totalorder %s72, %s73
    %p87 = scmp.eq.s32.totalorder %s39, 1
    %p88 = por %p86, %p87
    %p90 = scmp.ne.s32.totalorder %s73, %s89
    %p91 = scmp.eq.s32.totalorder %s39, 0
    %p92 = por %p90, %p91
    %s93 = ssub.s32 %s33, %s40
    %p94 = scmp.eq.s32.totalorder %s93, 0
    %s96 = sadd.s32 %s95, 1
    %s97 = scalar_select %p94, %s95, %s96
    %p100 = pneg %p94
    %p101 = scmp.eq.s32.totalorder %s33, 1
    %p102 = por %p100, %p101
    %p103 = scmp.ne.s32.totalorder %s95, %s98
    %p104 = scmp.eq.s32.totalorder %s33, 0
    %p105 = por %p103, %p104
    %p106 = scmp.ne.s32.totalorder %s95, %s98
    %p107 = scmp.eq.s32.totalorder %s38, 1
    %p108 = por %p106, %p107
    %p109 = scmp.ne.s32.totalorder %s98, %s99
    %p110 = scmp.eq.s32.totalorder %s38, 0
    %p111 = por %p109, %p110
    %p112 = scmp.ne.s32.totalorder %s98, %s99
    %p113 = scmp.eq.s32.totalorder %s39, 1
    %p114 = por %p112, %p113
    %p116 = scmp.ne.s32.totalorder %s99, %s115
    %p117 = scmp.eq.s32.totalorder %s39, 0
    %p118 = por %p116, %p117
    %s119 = ssub.s32 %s33, %s40
    %p120 = scmp.eq.s32.totalorder %s119, 0
    %s122 = sadd.s32 %s121, 1
    %s123 = scalar_select %p120, %s121, %s122
    %p126 = pneg %p120
    %p127 = scmp.eq.s32.totalorder %s33, 1
    %p128 = por %p126, %p127
    %p129 = scmp.ne.s32.totalorder %s121, %s124
    %p130 = scmp.eq.s32.totalorder %s33, 0
    %p131 = por %p129, %p130
    %p132 = scmp.ne.s32.totalorder %s121, %s124
    %p133 = scmp.eq.s32.totalorder %s38, 1
    %p134 = por %p132, %p133
    %p135 = scmp.ne.s32.totalorder %s124, %s125
    %p136 = scmp.eq.s32.totalorder %s38, 0
    %p137 = por %p135, %p136
    %p138 = scmp.ne.s32.totalorder %s124, %s125
    %p139 = scmp.eq.s32.totalorder %s39, 1
    %p140 = por %p138, %p139
    %p142 = scmp.ne.s32.totalorder %s125, %s141
    %p143 = scmp.eq.s32.totalorder %s39, 0
    %p144 = por %p142, %p143
    %s146 = sadd.s32 %s145, 1
    %p149 = scmp.eq.s32.totalorder %s33, 1
    %p150 = scmp.ne.s32.totalorder %s145, %s147
    %p151 = scmp.eq.s32.totalorder %s33, 0
    %p152 = por %p150, %p151
    %p153 = scmp.ne.s32.totalorder %s145, %s147
    %p154 = scmp.eq.s32.totalorder %s38, 1
    %p155 = por %p153, %p154
    %p156 = scmp.ne.s32.totalorder %s147, %s148
    %p157 = scmp.eq.s32.totalorder %s38, 0
    %p158 = por %p156, %p157
    %p159 = scmp.ne.s32.totalorder %s147, %s148
    %p160 = scmp.eq.s32.totalorder %s39, 1
    %p161 = por %p159, %p160
    %p163 = scmp.ne.s32.totalorder %s148, %s162
    %p164 = scmp.eq.s32.totalorder %s39, 0
    %p165 = por %p163, %p164
    %s166 = ssub.s32 %s33, %s40
    %p167 = scmp.eq.s32.totalorder %s166, 0
    %s169 = sadd.s32 %s168, 1
    %s170 = scalar_select %p167, %s168, %s169
    %p173 = pneg %p167
    %p174 = scmp.eq.s32.totalorder %s33, 1
    %p175 = por %p173, %p174
    %p176 = scmp.ne.s32.totalorder %s168, %s171
    %p177 = scmp.eq.s32.totalorder %s33, 0
    %p178 = por %p176, %p177
    %p179 = scmp.ne.s32.totalorder %s168, %s171
    %p180 = scmp.eq.s32.totalorder %s38, 1
    %p181 = por %p179, %p180
    %p182 = scmp.ne.s32.totalorder %s171, %s172
    %p183 = scmp.eq.s32.totalorder %s38, 0
    %p184 = por %p182, %p183
    %p185 = scmp.ne.s32.totalorder %s171, %s172
    %p186 = scmp.eq.s32.totalorder %s39, 1
    %p187 = por %p185, %p186
    %p189 = scmp.ne.s32.totalorder %s172, %s188
    %p190 = scmp.eq.s32.totalorder %s39, 0
    %p191 = por %p189, %p190
    %s192 = ssub.s32 %s33, %s40
    %p193 = scmp.eq.s32.totalorder %s192, 0
    %s195 = sadd.s32 %s194, 1
    %s196 = scalar_select %p193, %s194, %s195
    %p199 = pneg %p193
    %p200 = scmp.eq.s32.totalorder %s33, 1
    %p201 = por %p199, %p200
    %p202 = scmp.ne.s32.totalorder %s194, %s197
    %p203 = scmp.eq.s32.totalorder %s33, 0
    %p204 = por %p202, %p203
    %p205 = scmp.ne.s32.totalorder %s194, %s197
    %p206 = scmp.eq.s32.totalorder %s38, 1
    %p207 = por %p205, %p206
    %p208 = scmp.ne.s32.totalorder %s197, %s198
    %p209 = scmp.eq.s32.totalorder %s38, 0
    %p210 = por %p208, %p209
    %p211 = scmp.ne.s32.totalorder %s197, %s198
    %p212 = scmp.eq.s32.totalorder %s39, 1
    %p213 = por %p211, %p212
    %p215 = scmp.ne.s32.totalorder %s198, %s214
    %p216 = scmp.eq.s32.totalorder %s39, 0
    %p217 = por %p215, %p216
    %s218 = ssub.s32 %s33, %s40
    %p219 = scmp.eq.s32.totalorder %s218, 0
    %s221 = sadd.s32 %s220, 1
    %s222 = scalar_select %p219, %s220, %s221
    %p225 = pneg %p219
    %p226 = scmp.eq.s32.totalorder %s33, 1
    %p227 = por %p225, %p226
    %p228 = scmp.ne.s32.totalorder %s220, %s223
    %p229 = scmp.eq.s32.totalorder %s33, 0
    %p230 = por %p228, %p229
    %p231 = scmp.ne.s32.totalorder %s220, %s223
    %p232 = scmp.eq.s32.totalorder %s38, 1
    %p233 = por %p231, %p232
    %p234 = scmp.ne.s32.totalorder %s223, %s224
    %p235 = scmp.eq.s32.totalorder %s38, 0
    %p236 = por %p234, %p235
    %p237 = scmp.ne.s32.totalorder %s223, %s224
    %p238 = scmp.eq.s32.totalorder %s39, 1
    %p239 = por %p237, %p238
    %p241 = scmp.ne.s32.totalorder %s224, %s240
    %p242 = scmp.eq.s32.totalorder %s39, 0
    %p243 = por %p241, %p242
    %p244 = scmp.le.s32.totalorder 1, %s33
    %p245 = scmp.lt.s32.totalorder %s33, 3
    %p246 = pnand %p244, %p245
    %p247 = pneg %p246
    // Predicated region
    $region9: #{_transrec_forward_impl.1} parent=5 // pred_check
      _
    $region10: #{_transrec_forward_impl.1} parent=5 // pred_check_branch
      %249 = sbr.rel (%p246) target = $region12
    $region11: #{_transrec_forward_impl.1} parent=5 // pred_region
      %s250 = ssub.s32 %s33, 1
      // Predicated region
      $region13: #{_transrec_forward_impl.1} parent=11 // pred_check
        %p251 = pneg %p158
      $region14: #{_transrec_forward_impl.1} parent=11 // pred_check_branch
        %253 = sbr.rel (%p251) target = $region16
      $region15: #{_transrec_forward_impl.1} parent=11 // pred_region
        _
      $region16: #{_transrec_forward_impl.1} parent=11 // pred_fallthru
        _
    $region12: #{_transrec_forward_impl.1} parent=5 // pred_fallthru
      _
    %p254 = scmp.lt.s32.totalorder %s33, 2
    // Predicated region
    $region17: #{_transrec_forward_impl.1} parent=5 // pred_check
      %p255 = pneg %p254
    $region18: #{_transrec_forward_impl.1} parent=5 // pred_check_branch
      %257 = sbr.rel (%p255) target = $region20
    $region19: #{_transrec_forward_impl.1} parent=5 // pred_region
      // Predicated region
      $region21: #{_transrec_forward_impl.1} parent=19 // pred_check
        %p258 = pneg %p53
      $region22: #{_transrec_forward_impl.1} parent=19 // pred_check_branch
        %260 = sbr.rel (%p258) target = $region24
      $region23: #{_transrec_forward_impl.1} parent=19 // pred_region
        %p261 = scmp.lt.s32.totalorder %s33, 1
        %s262 = scalar_select %p261, %s33, 1
        %s263 = smul.addr %s262, 8
        %s264 = scalar_lea.vmem %s3, %s263
      $region24: #{_transrec_forward_impl.1} parent=19 // pred_fallthru
        _
      // Predicated region
      $region25: #{_transrec_forward_impl.1} parent=19 // pred_check
        %p265 = pneg %p79
      $region26: #{_transrec_forward_impl.1} parent=19 // pred_check_branch
        %267 = sbr.rel (%p265) target = $region28
      $region27: #{_transrec_forward_impl.1} parent=19 // pred_region
        %p268 = scmp.lt.s32.totalorder %s33, 1
        %s269 = scalar_select %p268, %s33, 1
        %s270 = smul.addr %s269, 8
        %s271 = scalar_lea.vmem %s4, %s270
      $region28: #{_transrec_forward_impl.1} parent=19 // pred_fallthru
        _
      // Predicated region
      $region29: #{_transrec_forward_impl.1} parent=19 // pred_check
        %p272 = pneg %p105
      $region30: #{_transrec_forward_impl.1} parent=19 // pred_check_branch
        %274 = sbr.rel (%p272) target = $region32
      $region31: #{_transrec_forward_impl.1} parent=19 // pred_region
        %p275 = scmp.lt.s32.totalorder %s33, 1
        %s276 = scalar_select %p275, %s33, 1
        %s277 = smul.addr %s276, 8
        %s278 = scalar_lea.vmem %s5, %s277
      $region32: #{_transrec_forward_impl.1} parent=19 // pred_fallthru
        _
      // Predicated region
      $region33: #{_transrec_forward_impl.1} parent=19 // pred_check
        %p279 = pneg %p131
      $region34: #{_transrec_forward_impl.1} parent=19 // pred_check_branch
        %281 = sbr.rel (%p279) target = $region36
      $region35: #{_transrec_forward_impl.1} parent=19 // pred_region
        %p282 = scmp.lt.s32.totalorder %s33, 1
        %s283 = scalar_select %p282, %s33, 1
        %s284 = smul.addr %s283, 8
        %s285 = scalar_lea.vmem %s6, %s284
      $region36: #{_transrec_forward_impl.1} parent=19 // pred_fallthru
        _
      // Predicated region
      $region37: #{_transrec_forward_impl.1} parent=19 // pred_check
        %p286 = pneg %p178
      $region38: #{_transrec_forward_impl.1} parent=19 // pred_check_branch
        %288 = sbr.rel (%p286) target = $region40
      $region39: #{_transrec_forward_impl.1} parent=19 // pred_region
        %p289 = scmp.lt.s32.totalorder %s33, 1
        %s290 = scalar_select %p289, %s33, 1
        %s291 = smul.addr %s290, 8
        %s292 = scalar_lea.vmem %s8, %s291
      $region40: #{_transrec_forward_impl.1} parent=19 // pred_fallthru
        _
      // Predicated region
      $region41: #{_transrec_forward_impl.1} parent=19 // pred_check
        %p293 = pneg %p204
      $region42: #{_transrec_forward_impl.1} parent=19 // pred_check_branch
        %295 = sbr.rel (%p293) target = $region44
      $region43: #{_transrec_forward_impl.1} parent=19 // pred_region
        %p296 = scmp.lt.s32.totalorder %s33, 1
        %s297 = scalar_select %p296, %s33, 1
        %s298 = smul.addr %s297, 8
        %s299 = scalar_lea.vmem %s9, %s298
      $region44: #{_transrec_forward_impl.1} parent=19 // pred_fallthru
        _
    $region20: #{_transrec_forward_impl.1} parent=5 // pred_fallthru
      _
    %p300 = scmp.le.s32.totalorder 1, %s33
    %p301 = scmp.lt.s32.totalorder %s33, 3
    %p302 = pnand %p300, %p301
    %p303 = pneg %p302
    // Predicated region
    $region45: #{_transrec_forward_impl.1} parent=5 // pred_check
      _
    $region46: #{_transrec_forward_impl.1} parent=5 // pred_check_branch
      %305 = sbr.rel (%p302) target = $region48
    $region47: #{_transrec_forward_impl.1} parent=5 // pred_region
      %s306 = ssub.s32 %s33, 1
      %p307 = scmp.lt.s32.totalorder %s38, 1
      %s308 = scalar_select %p307, %s38, 1
      %s309 = smul.addr %s308, 8
      %s310 = scalar_lea.vmem %s3, %s309
      %p311 = pneg %p59
      %p312 = pneg %p56
      %p313 = scmp.lt.s32.totalorder %s38, 1
      %s314 = scalar_select %p313, %s38, 1
      %s315 = smul.addr %s314, 8
      %s316 = scalar_lea.vmem %s4, %s315
      %p317 = pneg %p85
      %p318 = pneg %p82
      %p319 = scmp.lt.s32.totalorder %s38, 1
      %s320 = scalar_select %p319, %s38, 1
      %s321 = smul.addr %s320, 8
      %s322 = scalar_lea.vmem %s5, %s321
      %p323 = pneg %p111
      %p324 = pneg %p108
      %p325 = scmp.lt.s32.totalorder %s38, 1
      %s326 = scalar_select %p325, %s38, 1
      %s327 = smul.addr %s326, 8
      %s328 = scalar_lea.vmem %s6, %s327
      %p329 = pneg %p137
      %p330 = pneg %p134
      %p331 = pneg %p158
      %p332 = pneg %p155
      %p333 = scmp.lt.s32.totalorder %s38, 1
      %s334 = scalar_select %p333, %s38, 1
      %s335 = smul.addr %s334, 8
      %s336 = scalar_lea.vmem %s8, %s335
      %p337 = pneg %p184
      %p338 = pneg %p181
      %p339 = scmp.lt.s32.totalorder %s38, 1
      %s340 = scalar_select %p339, %s38, 1
      %s341 = smul.addr %s340, 8
      %s342 = scalar_lea.vmem %s9, %s341
      %p343 = pneg %p210
      %p344 = pneg %p207
      %p345 = pneg %p236
      %p346 = pneg %p233
      %p347 = scmp.lt.s32.totalorder %s38, 1
      %s348 = scalar_select %p347, %s38, 1
      %s349 = smul.addr %s348, 8
      %s350 = scalar_lea.vmem %s11, %s349
      %p351 = scmp.lt.s32.totalorder %s38, 1
      %s352 = scalar_select %p351, %s38, 1
      %s353 = smul.addr %s352, 8
      %s354 = scalar_lea.vmem %s3, %s353
      %p355 = scmp.lt.s32.totalorder %s38, 1
      %s356 = scalar_select %p355, %s38, 1
      %s357 = smul.addr %s356, 8
      %s358 = scalar_lea.vmem %s4, %s357
      %p359 = scmp.lt.s32.totalorder %s38, 1
      %s360 = scalar_select %p359, %s38, 1
      %s361 = smul.addr %s360, 8
      %s362 = scalar_lea.vmem %s5, %s361
      %p363 = scmp.lt.s32.totalorder %s38, 1
      %s364 = scalar_select %p363, %s38, 1
      %s365 = smul.addr %s364, 8
      %s366 = scalar_lea.vmem %s6, %s365
      %p367 = scmp.lt.s32.totalorder %s38, 1
      %s368 = scalar_select %p367, %s38, 1
      %s369 = smul.addr %s368, 8
      %s370 = scalar_lea.vmem %s8, %s369
      %p371 = scmp.lt.s32.totalorder %s38, 1
      %s372 = scalar_select %p371, %s38, 1
      %s373 = smul.addr %s372, 8
      %s374 = scalar_lea.vmem %s9, %s373
      %p375 = scmp.lt.s32.totalorder %s38, 1
      %s376 = scalar_select %p375, %s38, 1
      %s377 = smul.addr %s376, 8
      %s378 = scalar_lea.vmem %s11, %s377
      %s379 = sand.u32 %s38, 1
      %s380 = smul.u32 %s38, 8
      %s381 = smul.u32 %s379, 8
      %v382 = vld [vmem:[%s354] sm:$0xff]
      %v383 = vld [vmem:[%s358] sm:$0xff]
      %v384 = vld [vmem:[%s362] sm:$0xff]
      %v385 = vld [vmem:[%s366] sm:$0xff]
      %v386 = vadd.f32 %v382, %v385
      %v387 = vld [vmem:[%s7] sm:$0x1]
      %v389 = vlaneseq
      %v390 = vshrl.u32 %v389, 7
      %v391 = vsub.s32 0, %v390
      %v392 = vrot.slane %v387, %v391
      %v394 = vadd.f32 %v386, %v392
      %v395 = vsub.f32 %v394, %v383
      %v396 = vsub.f32 %v394, %v384
      %v397 = vmul.f32 %v395, %v395
      %vm398 = vcmask 261120
      %v399 = vsel %vm398, %v397, 0.0
      %400 = vadd.xlane.f32.xlu0 %v399
      %v401 = vpop.xlane.xlu0 %400
      %v402 = vrsqrt.pop %v401
      %v403 = vmul.f32 %v401, %v402
      %vm404 = vcmp.eq.f32.partialorder %v401, inf
      %v405 = vsel %vm404, %v401, %v403
      %vm406 = vcmp.eq.f32.partialorder %v401, 0.0
      %v407 = vand.u32 %v401, 2147483648
      %v408 = vsel %vm406, %v407, %v405
      %v409 = vmul.f32 %v396, %v396
      %v410 = vsel %vm398, %v409, 0.0
      %411 = vadd.xlane.f32.xlu0 %v410
      %v412 = vpop.xlane.xlu0 %411
      %v413 = vrsqrt.pop %v412
      %v414 = vmul.f32 %v412, %v413
      %vm415 = vcmp.eq.f32.partialorder %v412, inf
      %v416 = vsel %vm415, %v412, %v414
      %vm417 = vcmp.eq.f32.partialorder %v412, 0.0
      %v418 = vand.u32 %v412, 2147483648
      %v419 = vsel %vm417, %v418, %v416
      %v420 = vld [vmem:[%s370] sm:$0xff]
      %v421 = vsub.f32 %v420, %v408
      %v422 = vld [vmem:[%s374] sm:$0xff]
      %v423 = vsub.f32 %v422, %v419
      %v424 = vsub.f32 %v421, %v423
      %vm425 = vcmask 7168
      %426 = vst.msk [vmem:[%s378] sm:$0xff] %vm425, %v424
      %v427 = vmul.f32 %v382, %v382
      %v428 = vsel %vm398, %v427, 0.0
      %429 = vadd.xlane.f32.xlu0 %v428
      %v430 = vpop.xlane.xlu0 %429
      %v431 = vrsqrt.pop %v430
      %v432 = vmin.f32 %v431, 1.0
      %v433 = vmul.f32 %v382, %v432
      %s434 = scalar_lea.vmem [#allocation2], %s381
      %435 = vst.msk [vmem:[%s434] sm:$0xff] %vm398, %v433
      %v436 = vmul.f32 %v383, %v383
      %v437 = vsel %vm398, %v436, 0.0
      %438 = vadd.xlane.f32.xlu0 %v437
      %v439 = vpop.xlane.xlu0 %438
      %v440 = vrsqrt.pop %v439
      %v441 = vmin.f32 %v440, 1.0
      %v442 = vmul.f32 %v383, %v441
      %s443 = scalar_lea.vmem [#allocation3], %s381
      %444 = vst.msk [vmem:[%s443] sm:$0xff] %vm398, %v442
      %v445 = vmul.f32 %v384, %v384
      %v446 = vsel %vm398, %v445, 0.0
      %447 = vadd.xlane.f32.xlu0 %v446
      %v448 = vpop.xlane.xlu0 %447
      %v449 = vrsqrt.pop %v448
      %v450 = vmin.f32 %v449, 1.0
      %v451 = vmul.f32 %v384, %v450
      %s452 = scalar_lea.vmem [#allocation4], %s381
      %453 = vst.msk [vmem:[%s452] sm:$0xff] %vm398, %v451
      %p454 = scmp.gt.s32.totalorder %s38, 0
      // Predicated region
      $region49: #{_transrec_forward_impl.1} parent=47 // pred_check
        %p455 = pneg %p454
      $region50: #{_transrec_forward_impl.1} parent=47 // pred_check_branch
        %457 = sbr.rel (%p455) target = $region52
      $region51: #{_transrec_forward_impl.1} parent=47 // pred_region
        %s458 = ssub.s32 1, %s379
        %s459 = smul.u32 %s458, 8
        %s460 = scalar_lea.sflag [#allocation5], %s458
        %s461 = smul.u32 8, 1
        %s462 = sshll.u32 %s461, 4
        %463 = dma.done %s460, %s462
        %s464 = sshll.u32 %s461, 4
        %465 = dma.done %s460, %s464
        %s466 = sshll.u32 %s461, 4
        %467 = dma.done %s460, %s466
      $region52: #{_transrec_forward_impl.1} parent=47 // pred_fallthru
        _
      %s468 = sld [smem:[#allocation7 + %s380]]
      %s469 = sld [smem:[#allocation8 + %s380]]
      %s470 = sld [smem:[#allocation9 + %s380]]
      %s471 = scalar_lea.vmem %s12, %s468
      %s472 = scalar_lea.sflag [#allocation5], %s379
      %p474 = scmp.lt.u32.totalorder 1, 8
      %p475 = pneg %p474
      // Predicated region
      $region53: #{_transrec_forward_impl.1} parent=47 // pred_check
        _
      $region54: #{_transrec_forward_impl.1} parent=47 // pred_check_branch
        %477 = sbr.rel (%p474) target = $region56
      $region55: #{_transrec_forward_impl.1} parent=47 // pred_region
        %s492 = sand.u32 1, 7
        %p493 = scmp.eq.s32.totalorder %s492, 0
        %p494 = pneg %p493
        // Predicated region
        $region68: #{_transrec_forward_impl.1} parent=55 // pred_check
          _
        $region69: #{_transrec_forward_impl.1} parent=55 // pred_check_branch
          %496 = sbr.rel (%p493) target = $region71
        $region70: #{_transrec_forward_impl.1} parent=55 // pred_region
          %s497 = sand.u32 1, 7
          %s498 = ssub.s32 1, %s497
          %s499 = scalar_lea.vmem %s434, %s498 [#allocation2]
          %s500 = ssub.s32 1, %s497
          %s501 = scalar_lea.vmem %s471, %s500
          %s502 = sshllo.u32 0, %s497
          loop: start=0, step=1, limit=1
          $region72: #{_transrec_forward_impl.1} parent=70 // loop_pre_header
            _
          $region73: #{_transrec_forward_impl.1} parent=70 // loop_header
            %s504 = sphi 0, %s508
            %p505 = scmp.ge.s32.totalorder %s504, 1
            %s509 = sphi %s499, %s499
            %s510 = sphi %s501, %s501
          $region74: #{_transrec_forward_impl.1} parent=70 // loop_header_branch
            %507 = sbr.rel (%p505) target = $region78
          $region75: #{_transrec_forward_impl.1} parent=70 // loop_body
            %v511 = vld [vmem:[%s509] sm:%s502]
            %512 = vst [vmem:[%s510] sm:%s502] %v511
          $region76: #{_transrec_forward_impl.1} parent=70 // loop_footer
            %s508 = sadd.s32 1, %s504
          $region77: #{_transrec_forward_impl.1} parent=70 // loop_footer_branch
            %503 = sbr.rel target = $region73
          $region78: #{_transrec_forward_impl.1} parent=70 // loop_exit
            _
        $region71: #{_transrec_forward_impl.1} parent=55 // pred_fallthru
          _
      $region56: #{_transrec_forward_impl.1} parent=47 // pred_fallthru
        _
      // Predicated region
      $region57: #{_transrec_forward_impl.1} parent=47 // pred_check
        %p478 = pneg %p474
      $region58: #{_transrec_forward_impl.1} parent=47 // pred_check_branch
        %480 = sbr.rel (%p478) target = $region60
      $region59: #{_transrec_forward_impl.1} parent=47 // pred_region
        %s481 = sshllo.u32 0, 1
        loop: start=0, step=1, limit=1
        $region61: #{_transrec_forward_impl.1} parent=59 // loop_pre_header
          _
        $region62: #{_transrec_forward_impl.1} parent=59 // loop_header
          %s483 = sphi 0, %s487
          %p484 = scmp.ge.s32.totalorder %s483, 1
          %s488 = sphi %s434, %s434
          %s489 = sphi %s471, %s471
        $region63: #{_transrec_forward_impl.1} parent=59 // loop_header_branch
          %486 = sbr.rel (%p484) target = $region67
        $region64: #{_transrec_forward_impl.1} parent=59 // loop_body
          %v490 = vld [vmem:[%s488] sm:%s481]
          %491 = vst [vmem:[%s489] sm:%s481] %v490
        $region65: #{_transrec_forward_impl.1} parent=59 // loop_footer
          %s487 = sadd.s32 1, %s483
        $region66: #{_transrec_forward_impl.1} parent=59 // loop_footer_branch
          %482 = sbr.rel target = $region62
        $region67: #{_transrec_forward_impl.1} parent=59 // loop_exit
          _
      $region60: #{_transrec_forward_impl.1} parent=47 // pred_fallthru
        _
      // Predicated region
      $region79: #{_transrec_forward_impl.1} parent=47 // pred_check
        _
      $region80: #{_transrec_forward_impl.1} parent=47 // pred_check_branch
        %515 = sbr.rel (0) target = $region82
      $region81: #{_transrec_forward_impl.1} parent=47 // pred_region
        %516 = vsyncadd %s472, 16
      $region82: #{_transrec_forward_impl.1} parent=47 // pred_fallthru
        _
      %s517 = scalar_lea.vmem %s12, %s469
      %p519 = scmp.lt.u32.totalorder 1, 8
      %p520 = pneg %p519
      // Predicated region
      $region83: #{_transrec_forward_impl.1} parent=47 // pred_check
        _
      $region84: #{_transrec_forward_impl.1} parent=47 // pred_check_branch
        %522 = sbr.rel (%p519) target = $region86
      $region85: #{_transrec_forward_impl.1} parent=47 // pred_region
        %s537 = sand.u32 1, 7
        %p538 = scmp.eq.s32.totalorder %s537, 0
        %p539 = pneg %p538
        // Predicated region
        $region98: #{_transrec_forward_impl.1} parent=85 // pred_check
          _
        $region99: #{_transrec_forward_impl.1} parent=85 // pred_check_branch
          %541 = sbr.rel (%p538) target = $region101
        $region100: #{_transrec_forward_impl.1} parent=85 // pred_region
          %s542 = sand.u32 1, 7
          %s543 = ssub.s32 1, %s542
          %s544 = scalar_lea.vmem %s443, %s543 [#allocation3]
          %s545 = ssub.s32 1, %s542
          %s546 = scalar_lea.vmem %s517, %s545
          %s547 = sshllo.u32 0, %s542
          loop: start=0, step=1, limit=1
          $region102: #{_transrec_forward_impl.1} parent=100 // loop_pre_header
            _
          $region103: #{_transrec_forward_impl.1} parent=100 // loop_header
            %s549 = sphi 0, %s553
            %p550 = scmp.ge.s32.totalorder %s549, 1
            %s554 = sphi %s544, %s544
            %s555 = sphi %s546, %s546
          $region104: #{_transrec_forward_impl.1} parent=100 // loop_header_branch
            %552 = sbr.rel (%p550) target = $region108
          $region105: #{_transrec_forward_impl.1} parent=100 // loop_body
            %v556 = vld [vmem:[%s554] sm:%s547]
            %557 = vst [vmem:[%s555] sm:%s547] %v556
          $region106: #{_transrec_forward_impl.1} parent=100 // loop_footer
            %s553 = sadd.s32 1, %s549
          $region107: #{_transrec_forward_impl.1} parent=100 // loop_footer_branch
            %548 = sbr.rel target = $region103
          $region108: #{_transrec_forward_impl.1} parent=100 // loop_exit
            _
        $region101: #{_transrec_forward_impl.1} parent=85 // pred_fallthru
          _
      $region86: #{_transrec_forward_impl.1} parent=47 // pred_fallthru
        _
      // Predicated region
      $region87: #{_transrec_forward_impl.1} parent=47 // pred_check
        %p523 = pneg %p519
      $region88: #{_transrec_forward_impl.1} parent=47 // pred_check_branch
        %525 = sbr.rel (%p523) target = $region90
      $region89: #{_transrec_forward_impl.1} parent=47 // pred_region
        %s526 = sshllo.u32 0, 1
        loop: start=0, step=1, limit=1
        $region91: #{_transrec_forward_impl.1} parent=89 // loop_pre_header
          _
        $region92: #{_transrec_forward_impl.1} parent=89 // loop_header
          %s528 = sphi 0, %s532
          %p529 = scmp.ge.s32.totalorder %s528, 1
          %s533 = sphi %s443, %s443
          %s534 = sphi %s517, %s517
        $region93: #{_transrec_forward_impl.1} parent=89 // loop_header_branch
          %531 = sbr.rel (%p529) target = $region97
        $region94: #{_transrec_forward_impl.1} parent=89 // loop_body
          %v535 = vld [vmem:[%s533] sm:%s526]
          %536 = vst [vmem:[%s534] sm:%s526] %v535
        $region95: #{_transrec_forward_impl.1} parent=89 // loop_footer
          %s532 = sadd.s32 1, %s528
        $region96: #{_transrec_forward_impl.1} parent=89 // loop_footer_branch
          %527 = sbr.rel target = $region92
        $region97: #{_transrec_forward_impl.1} parent=89 // loop_exit
          _
      $region90: #{_transrec_forward_impl.1} parent=47 // pred_fallthru
        _
      // Predicated region
      $region109: #{_transrec_forward_impl.1} parent=47 // pred_check
        _
      $region110: #{_transrec_forward_impl.1} parent=47 // pred_check_branch
        %560 = sbr.rel (0) target = $region112
      $region111: #{_transrec_forward_impl.1} parent=47 // pred_region
        %561 = vsyncadd %s472, 16
      $region112: #{_transrec_forward_impl.1} parent=47 // pred_fallthru
        _
      %s562 = scalar_lea.vmem %s12, %s470
      %p564 = scmp.lt.u32.totalorder 1, 8
      %p565 = pneg %p564
      // Predicated region
      $region113: #{_transrec_forward_impl.1} parent=47 // pred_check
        _
      $region114: #{_transrec_forward_impl.1} parent=47 // pred_check_branch
        %567 = sbr.rel (%p564) target = $region116
      $region115: #{_transrec_forward_impl.1} parent=47 // pred_region
        %s582 = sand.u32 1, 7
        %p583 = scmp.eq.s32.totalorder %s582, 0
        %p584 = pneg %p583
        // Predicated region
        $region128: #{_transrec_forward_impl.1} parent=115 // pred_check
          _
        $region129: #{_transrec_forward_impl.1} parent=115 // pred_check_branch
          %586 = sbr.rel (%p583) target = $region131
        $region130: #{_transrec_forward_impl.1} parent=115 // pred_region
          %s587 = sand.u32 1, 7
          %s588 = ssub.s32 1, %s587
          %s589 = scalar_lea.vmem %s452, %s588 [#allocation4]
          %s590 = ssub.s32 1, %s587
          %s591 = scalar_lea.vmem %s562, %s590
          %s592 = sshllo.u32 0, %s587
          loop: start=0, step=1, limit=1
          $region132: #{_transrec_forward_impl.1} parent=130 // loop_pre_header
            _
          $region133: #{_transrec_forward_impl.1} parent=130 // loop_header
            %s594 = sphi 0, %s598
            %p595 = scmp.ge.s32.totalorder %s594, 1
            %s599 = sphi %s589, %s589
            %s600 = sphi %s591, %s591
          $region134: #{_transrec_forward_impl.1} parent=130 // loop_header_branch
            %597 = sbr.rel (%p595) target = $region138
          $region135: #{_transrec_forward_impl.1} parent=130 // loop_body
            %v601 = vld [vmem:[%s599] sm:%s592]
            %602 = vst [vmem:[%s600] sm:%s592] %v601
          $region136: #{_transrec_forward_impl.1} parent=130 // loop_footer
            %s598 = sadd.s32 1, %s594
          $region137: #{_transrec_forward_impl.1} parent=130 // loop_footer_branch
            %593 = sbr.rel target = $region133
          $region138: #{_transrec_forward_impl.1} parent=130 // loop_exit
            _
        $region131: #{_transrec_forward_impl.1} parent=115 // pred_fallthru
          _
      $region116: #{_transrec_forward_impl.1} parent=47 // pred_fallthru
        _
      // Predicated region
      $region117: #{_transrec_forward_impl.1} parent=47 // pred_check
        %p568 = pneg %p564
      $region118: #{_transrec_forward_impl.1} parent=47 // pred_check_branch
        %570 = sbr.rel (%p568) target = $region120
      $region119: #{_transrec_forward_impl.1} parent=47 // pred_region
        %s571 = sshllo.u32 0, 1
        loop: start=0, step=1, limit=1
        $region121: #{_transrec_forward_impl.1} parent=119 // loop_pre_header
          _
        $region122: #{_transrec_forward_impl.1} parent=119 // loop_header
          %s573 = sphi 0, %s577
          %p574 = scmp.ge.s32.totalorder %s573, 1
          %s578 = sphi %s452, %s452
          %s579 = sphi %s562, %s562
        $region123: #{_transrec_forward_impl.1} parent=119 // loop_header_branch
          %576 = sbr.rel (%p574) target = $region127
        $region124: #{_transrec_forward_impl.1} parent=119 // loop_body
          %v580 = vld [vmem:[%s578] sm:%s571]
          %581 = vst [vmem:[%s579] sm:%s571] %v580
        $region125: #{_transrec_forward_impl.1} parent=119 // loop_footer
          %s577 = sadd.s32 1, %s573
        $region126: #{_transrec_forward_impl.1} parent=119 // loop_footer_branch
          %572 = sbr.rel target = $region122
        $region127: #{_transrec_forward_impl.1} parent=119 // loop_exit
          _
      $region120: #{_transrec_forward_impl.1} parent=47 // pred_fallthru
        _
      // Predicated region
      $region139: #{_transrec_forward_impl.1} parent=47 // pred_check
        _
      $region140: #{_transrec_forward_impl.1} parent=47 // pred_check_branch
        %605 = sbr.rel (0) target = $region142
      $region141: #{_transrec_forward_impl.1} parent=47 // pred_region
        %606 = vsyncadd %s472, 16
      $region142: #{_transrec_forward_impl.1} parent=47 // pred_fallthru
        _
      %s607 = sadd.s32 %s380, 1
      %s608 = sld [smem:[#allocation7 + %s607]]
      %s609 = sld [smem:[#allocation8 + %s607]]
      %s610 = sld [smem:[#allocation9 + %s607]]
      %s611 = sadd.s32 %s381, 1
      %s612 = scalar_lea.vmem [#allocation2], %s611
      %s613 = scalar_lea.vmem %s12, %s608
      %p615 = scmp.lt.u32.totalorder 1, 8
      %p616 = pneg %p615
      // Predicated region
      $region143: #{_transrec_forward_impl.1} parent=47 // pred_check
        _
      $region144: #{_transrec_forward_impl.1} parent=47 // pred_check_branch
        %618 = sbr.rel (%p615) target = $region146
      $region145: #{_transrec_forward_impl.1} parent=47 // pred_region
        %s633 = sand.u32 1, 7
        %p634 = scmp.eq.s32.totalorder %s633, 0
        %p635 = pneg %p634
        // Predicated region
        $region158: #{_transrec_forward_impl.1} parent=145 // pred_check
          _
        $region159: #{_transrec_forward_impl.1} parent=145 // pred_check_branch
          %637 = sbr.rel (%p634) target = $region161
        $region160: #{_transrec_forward_impl.1} parent=145 // pred_region
          %s638 = sand.u32 1, 7
          %s639 = ssub.s32 1, %s638
          %s640 = scalar_lea.vmem %s612, %s639 [#allocation2]
          %s641 = ssub.s32 1, %s638
          %s642 = scalar_lea.vmem %s613, %s641
          %s643 = sshllo.u32 0, %s638
          loop: start=0, step=1, limit=1
          $region162: #{_transrec_forward_impl.1} parent=160 // loop_pre_header
            _
          $region163: #{_transrec_forward_impl.1} parent=160 // loop_header
            %s645 = sphi 0, %s649
            %p646 = scmp.ge.s32.totalorder %s645, 1
            %s650 = sphi %s640, %s640
            %s651 = sphi %s642, %s642
          $region164: #{_transrec_forward_impl.1} parent=160 // loop_header_branch
            %648 = sbr.rel (%p646) target = $region168
          $region165: #{_transrec_forward_impl.1} parent=160 // loop_body
            %v652 = vld [vmem:[%s650] sm:%s643]
            %653 = vst [vmem:[%s651] sm:%s643] %v652
          $region166: #{_transrec_forward_impl.1} parent=160 // loop_footer
            %s649 = sadd.s32 1, %s645
          $region167: #{_transrec_forward_impl.1} parent=160 // loop_footer_branch
            %644 = sbr.rel target = $region163
          $region168: #{_transrec_forward_impl.1} parent=160 // loop_exit
            _
        $region161: #{_transrec_forward_impl.1} parent=145 // pred_fallthru
          _
      $region146: #{_transrec_forward_impl.1} parent=47 // pred_fallthru
        _
      // Predicated region
      $region147: #{_transrec_forward_impl.1} parent=47 // pred_check
        %p619 = pneg %p615
      $region148: #{_transrec_forward_impl.1} parent=47 // pred_check_branch
        %621 = sbr.rel (%p619) target = $region150
      $region149: #{_transrec_forward_impl.1} parent=47 // pred_region
        %s622 = sshllo.u32 0, 1
        loop: start=0, step=1, limit=1
        $region151: #{_transrec_forward_impl.1} parent=149 // loop_pre_header
          _
        $region152: #{_transrec_forward_impl.1} parent=149 // loop_header
          %s624 = sphi 0, %s628
          %p625 = scmp.ge.s32.totalorder %s624, 1
          %s629 = sphi %s612, %s612
          %s630 = sphi %s613, %s613
        $region153: #{_transrec_forward_impl.1} parent=149 // loop_header_branch
          %627 = sbr.rel (%p625) target = $region157
        $region154: #{_transrec_forward_impl.1} parent=149 // loop_body
          %v631 = vld [vmem:[%s629] sm:%s622]
          %632 = vst [vmem:[%s630] sm:%s622] %v631
        $region155: #{_transrec_forward_impl.1} parent=149 // loop_footer
          %s628 = sadd.s32 1, %s624
        $region156: #{_transrec_forward_impl.1} parent=149 // loop_footer_branch
          %623 = sbr.rel target = $region152
        $region157: #{_transrec_forward_impl.1} parent=149 // loop_exit
          _
      $region150: #{_transrec_forward_impl.1} parent=47 // pred_fallthru
        _
      // Predicated region
      $region169: #{_transrec_forward_impl.1} parent=47 // pred_check
        _
      $region170: #{_transrec_forward_impl.1} parent=47 // pred_check_branch
        %656 = sbr.rel (0) target = $region172
      $region171: #{_transrec_forward_impl.1} parent=47 // pred_region
        %657 = vsyncadd %s472, 16
      $region172: #{_transrec_forward_impl.1} parent=47 // pred_fallthru
        _
      %s658 = scalar_lea.vmem [#allocation3], %s611
      %s659 = scalar_lea.vmem %s12, %s609
      %p661 = scmp.lt.u32.totalorder 1, 8
      %p662 = pneg %p661
      // Predicated region
      $region173: #{_transrec_forward_impl.1} parent=47 // pred_check
        _
      $region174: #{_transrec_forward_impl.1} parent=47 // pred_check_branch
        %664 = sbr.rel (%p661) target = $region176
      $region175: #{_transrec_forward_impl.1} parent=47 // pred_region
        %s679 = sand.u32 1, 7
        %p680 = scmp.eq.s32.totalorder %s679, 0
        %p681 = pneg %p680
        // Predicated region
        $region188: #{_transrec_forward_impl.1} parent=175 // pred_check
          _
        $region189: #{_transrec_forward_impl.1} parent=175 // pred_check_branch
          %683 = sbr.rel (%p680) target = $region191
        $region190: #{_transrec_forward_impl.1} parent=175 // pred_region
          %s684 = sand.u32 1, 7
          %s685 = ssub.s32 1, %s684
          %s686 = scalar_lea.vmem %s658, %s685 [#allocation3]
          %s687 = ssub.s32 1, %s684
          %s688 = scalar_lea.vmem %s659, %s687
          %s689 = sshllo.u32 0, %s684
          loop: start=0, step=1, limit=1
          $region192: #{_transrec_forward_impl.1} parent=190 // loop_pre_header
            _
          $region193: #{_transrec_forward_impl.1} parent=190 // loop_header
            %s691 = sphi 0, %s695
            %p692 = scmp.ge.s32.totalorder %s691, 1
            %s696 = sphi %s686, %s686
            %s697 = sphi %s688, %s688
          $region194: #{_transrec_forward_impl.1} parent=190 // loop_header_branch
            %694 = sbr.rel (%p692) target = $region198
          $region195: #{_transrec_forward_impl.1} parent=190 // loop_body
            %v698 = vld [vmem:[%s696] sm:%s689]
            %699 = vst [vmem:[%s697] sm:%s689] %v698
          $region196: #{_transrec_forward_impl.1} parent=190 // loop_footer
            %s695 = sadd.s32 1, %s691
          $region197: #{_transrec_forward_impl.1} parent=190 // loop_footer_branch
            %690 = sbr.rel target = $region193
          $region198: #{_transrec_forward_impl.1} parent=190 // loop_exit
            _
        $region191: #{_transrec_forward_impl.1} parent=175 // pred_fallthru
          _
      $region176: #{_transrec_forward_impl.1} parent=47 // pred_fallthru
        _
      // Predicated region
      $region177: #{_transrec_forward_impl.1} parent=47 // pred_check
        %p665 = pneg %p661
      $region178: #{_transrec_forward_impl.1} parent=47 // pred_check_branch
        %667 = sbr.rel (%p665) target = $region180
      $region179: #{_transrec_forward_impl.1} parent=47 // pred_region
        %s668 = sshllo.u32 0, 1
        loop: start=0, step=1, limit=1
        $region181: #{_transrec_forward_impl.1} parent=179 // loop_pre_header
          _
        $region182: #{_transrec_forward_impl.1} parent=179 // loop_header
          %s670 = sphi 0, %s674
          %p671 = scmp.ge.s32.totalorder %s670, 1
          %s675 = sphi %s658, %s658
          %s676 = sphi %s659, %s659
        $region183: #{_transrec_forward_impl.1} parent=179 // loop_header_branch
          %673 = sbr.rel (%p671) target = $region187
        $region184: #{_transrec_forward_impl.1} parent=179 // loop_body
          %v677 = vld [vmem:[%s675] sm:%s668]
          %678 = vst [vmem:[%s676] sm:%s668] %v677
        $region185: #{_transrec_forward_impl.1} parent=179 // loop_footer
          %s674 = sadd.s32 1, %s670
        $region186: #{_transrec_forward_impl.1} parent=179 // loop_footer_branch
          %669 = sbr.rel target = $region182
        $region187: #{_transrec_forward_impl.1} parent=179 // loop_exit
          _
      $region180: #{_transrec_forward_impl.1} parent=47 // pred_fallthru
        _
      // Predicated region
      $region199: #{_transrec_forward_impl.1} parent=47 // pred_check
        _
      $region200: #{_transrec_forward_impl.1} parent=47 // pred_check_branch
        %702 = sbr.rel (0) target = $region202
      $region201: #{_transrec_forward_impl.1} parent=47 // pred_region
        %703 = vsyncadd %s472, 16
      $region202: #{_transrec_forward_impl.1} parent=47 // pred_fallthru
        _
      %s704 = scalar_lea.vmem [#allocation4], %s611
      %s705 = scalar_lea.vmem %s12, %s610
      %p707 = scmp.lt.u32.totalorder 1, 8
      %p708 = pneg %p707
      // Predicated region
      $region203: #{_transrec_forward_impl.1} parent=47 // pred_check
        _
      $region204: #{_transrec_forward_impl.1} parent=47 // pred_check_branch
        %710 = sbr.rel (%p707) target = $region206
      $region205: #{_transrec_forward_impl.1} parent=47 // pred_region
        %s725 = sand.u32 1, 7
        %p726 = scmp.eq.s32.totalorder %s725, 0
        %p727 = pneg %p726
        // Predicated region
        $region218: #{_transrec_forward_impl.1} parent=205 // pred_check
          _
        $region219: #{_transrec_forward_impl.1} parent=205 // pred_check_branch
          %729 = sbr.rel (%p726) target = $region221
        $region220: #{_transrec_forward_impl.1} parent=205 // pred_region
          %s730 = sand.u32 1, 7
          %s731 = ssub.s32 1, %s730
          %s732 = scalar_lea.vmem %s704, %s731 [#allocation4]
          %s733 = ssub.s32 1, %s730
          %s734 = scalar_lea.vmem %s705, %s733
          %s735 = sshllo.u32 0, %s730
          loop: start=0, step=1, limit=1
          $region222: #{_transrec_forward_impl.1} parent=220 // loop_pre_header
            _
          $region223: #{_transrec_forward_impl.1} parent=220 // loop_header
            %s737 = sphi 0, %s741
            %p738 = scmp.ge.s32.totalorder %s737, 1
            %s742 = sphi %s732, %s732
            %s743 = sphi %s734, %s734
          $region224: #{_transrec_forward_impl.1} parent=220 // loop_header_branch
            %740 = sbr.rel (%p738) target = $region228
          $region225: #{_transrec_forward_impl.1} parent=220 // loop_body
            %v744 = vld [vmem:[%s742] sm:%s735]
            %745 = vst [vmem:[%s743] sm:%s735] %v744
          $region226: #{_transrec_forward_impl.1} parent=220 // loop_footer
            %s741 = sadd.s32 1, %s737
          $region227: #{_transrec_forward_impl.1} parent=220 // loop_footer_branch
            %736 = sbr.rel target = $region223
          $region228: #{_transrec_forward_impl.1} parent=220 // loop_exit
            _
        $region221: #{_transrec_forward_impl.1} parent=205 // pred_fallthru
          _
      $region206: #{_transrec_forward_impl.1} parent=47 // pred_fallthru
        _
      // Predicated region
      $region207: #{_transrec_forward_impl.1} parent=47 // pred_check
        %p711 = pneg %p707
      $region208: #{_transrec_forward_impl.1} parent=47 // pred_check_branch
        %713 = sbr.rel (%p711) target = $region210
      $region209: #{_transrec_forward_impl.1} parent=47 // pred_region
        %s714 = sshllo.u32 0, 1
        loop: start=0, step=1, limit=1
        $region211: #{_transrec_forward_impl.1} parent=209 // loop_pre_header
          _
        $region212: #{_transrec_forward_impl.1} parent=209 // loop_header
          %s716 = sphi 0, %s720
          %p717 = scmp.ge.s32.totalorder %s716, 1
          %s721 = sphi %s704, %s704
          %s722 = sphi %s705, %s705
        $region213: #{_transrec_forward_impl.1} parent=209 // loop_header_branch
          %719 = sbr.rel (%p717) target = $region217
        $region214: #{_transrec_forward_impl.1} parent=209 // loop_body
          %v723 = vld [vmem:[%s721] sm:%s714]
          %724 = vst [vmem:[%s722] sm:%s714] %v723
        $region215: #{_transrec_forward_impl.1} parent=209 // loop_footer
          %s720 = sadd.s32 1, %s716
        $region216: #{_transrec_forward_impl.1} parent=209 // loop_footer_branch
          %715 = sbr.rel target = $region212
        $region217: #{_transrec_forward_impl.1} parent=209 // loop_exit
          _
      $region210: #{_transrec_forward_impl.1} parent=47 // pred_fallthru
        _
      // Predicated region
      $region229: #{_transrec_forward_impl.1} parent=47 // pred_check
        _
      $region230: #{_transrec_forward_impl.1} parent=47 // pred_check_branch
        %748 = sbr.rel (0) target = $region232
      $region231: #{_transrec_forward_impl.1} parent=47 // pred_region
        %749 = vsyncadd %s472, 16
      $region232: #{_transrec_forward_impl.1} parent=47 // pred_fallthru
        _
      %s750 = sadd.s32 %s380, 2
      %s751 = sld [smem:[#allocation7 + %s750]]
      %s752 = sld [smem:[#allocation8 + %s750]]
      %s753 = sld [smem:[#allocation9 + %s750]]
      %s754 = sadd.s32 %s381, 2
      %s755 = scalar_lea.vmem [#allocation2], %s754
      %s756 = scalar_lea.vmem %s12, %s751
      %p758 = scmp.lt.u32.totalorder 1, 8
      %p759 = pneg %p758
      // Predicated region
      $region233: #{_transrec_forward_impl.1} parent=47 // pred_check
        _
      $region234: #{_transrec_forward_impl.1} parent=47 // pred_check_branch
        %761 = sbr.rel (%p758) target = $region236
      $region235: #{_transrec_forward_impl.1} parent=47 // pred_region
        %s776 = sand.u32 1, 7
        %p777 = scmp.eq.s32.totalorder %s776, 0
        %p778 = pneg %p777
        // Predicated region
        $region248: #{_transrec_forward_impl.1} parent=235 // pred_check
          _
        $region249: #{_transrec_forward_impl.1} parent=235 // pred_check_branch
          %780 = sbr.rel (%p777) target = $region251
        $region250: #{_transrec_forward_impl.1} parent=235 // pred_region
          %s781 = sand.u32 1, 7
          %s782 = ssub.s32 1, %s781
          %s783 = scalar_lea.vmem %s755, %s782 [#allocation2]
          %s784 = ssub.s32 1, %s781
          %s785 = scalar_lea.vmem %s756, %s784
          %s786 = sshllo.u32 0, %s781
          loop: start=0, step=1, limit=1
          $region252: #{_transrec_forward_impl.1} parent=250 // loop_pre_header
            _
          $region253: #{_transrec_forward_impl.1} parent=250 // loop_header
            %s788 = sphi 0, %s792
            %p789 = scmp.ge.s32.totalorder %s788, 1
            %s793 = sphi %s783, %s783
            %s794 = sphi %s785, %s785
          $region254: #{_transrec_forward_impl.1} parent=250 // loop_header_branch
            %791 = sbr.rel (%p789) target = $region258
          $region255: #{_transrec_forward_impl.1} parent=250 // loop_body
            %v795 = vld [vmem:[%s793] sm:%s786]
            %796 = vst [vmem:[%s794] sm:%s786] %v795
          $region256: #{_transrec_forward_impl.1} parent=250 // loop_footer
            %s792 = sadd.s32 1, %s788
          $region257: #{_transrec_forward_impl.1} parent=250 // loop_footer_branch
            %787 = sbr.rel target = $region253
          $region258: #{_transrec_forward_impl.1} parent=250 // loop_exit
            _
        $region251: #{_transrec_forward_impl.1} parent=235 // pred_fallthru
          _
      $region236: #{_transrec_forward_impl.1} parent=47 // pred_fallthru
        _
      // Predicated region
      $region237: #{_transrec_forward_impl.1} parent=47 // pred_check
        %p762 = pneg %p758
      $region238: #{_transrec_forward_impl.1} parent=47 // pred_check_branch
        %764 = sbr.rel (%p762) target = $region240
      $region239: #{_transrec_forward_impl.1} parent=47 // pred_region
        %s765 = sshllo.u32 0, 1
        loop: start=0, step=1, limit=1
        $region241: #{_transrec_forward_impl.1} parent=239 // loop_pre_header
          _
        $region242: #{_transrec_forward_impl.1} parent=239 // loop_header
          %s767 = sphi 0, %s771
          %p768 = scmp.ge.s32.totalorder %s767, 1
          %s772 = sphi %s755, %s755
          %s773 = sphi %s756, %s756
        $region243: #{_transrec_forward_impl.1} parent=239 // loop_header_branch
          %770 = sbr.rel (%p768) target = $region247
        $region244: #{_transrec_forward_impl.1} parent=239 // loop_body
          %v774 = vld [vmem:[%s772] sm:%s765]
          %775 = vst [vmem:[%s773] sm:%s765] %v774
        $region245: #{_transrec_forward_impl.1} parent=239 // loop_footer
          %s771 = sadd.s32 1, %s767
        $region246: #{_transrec_forward_impl.1} parent=239 // loop_footer_branch
          %766 = sbr.rel target = $region242
        $region247: #{_transrec_forward_impl.1} parent=239 // loop_exit
          _
      $region240: #{_transrec_forward_impl.1} parent=47 // pred_fallthru
        _
      // Predicated region
      $region259: #{_transrec_forward_impl.1} parent=47 // pred_check
        _
      $region260: #{_transrec_forward_impl.1} parent=47 // pred_check_branch
        %799 = sbr.rel (0) target = $region262
      $region261: #{_transrec_forward_impl.1} parent=47 // pred_region
        %800 = vsyncadd %s472, 16
      $region262: #{_transrec_forward_impl.1} parent=47 // pred_fallthru
        _
      %s801 = scalar_lea.vmem [#allocation3], %s754
      %s802 = scalar_lea.vmem %s12, %s752
      %p804 = scmp.lt.u32.totalorder 1, 8
      %p805 = pneg %p804
      // Predicated region
      $region263: #{_transrec_forward_impl.1} parent=47 // pred_check
        _
      $region264: #{_transrec_forward_impl.1} parent=47 // pred_check_branch
        %807 = sbr.rel (%p804) target = $region266
      $region265: #{_transrec_forward_impl.1} parent=47 // pred_region
        %s822 = sand.u32 1, 7
        %p823 = scmp.eq.s32.totalorder %s822, 0
        %p824 = pneg %p823
        // Predicated region
        $region278: #{_transrec_forward_impl.1} parent=265 // pred_check
          _
        $region279: #{_transrec_forward_impl.1} parent=265 // pred_check_branch
          %826 = sbr.rel (%p823) target = $region281
        $region280: #{_transrec_forward_impl.1} parent=265 // pred_region
          %s827 = sand.u32 1, 7
          %s828 = ssub.s32 1, %s827
          %s829 = scalar_lea.vmem %s801, %s828 [#allocation3]
          %s830 = ssub.s32 1, %s827
          %s831 = scalar_lea.vmem %s802, %s830
          %s832 = sshllo.u32 0, %s827
          loop: start=0, step=1, limit=1
          $region282: #{_transrec_forward_impl.1} parent=280 // loop_pre_header
            _
          $region283: #{_transrec_forward_impl.1} parent=280 // loop_header
            %s834 = sphi 0, %s838
            %p835 = scmp.ge.s32.totalorder %s834, 1
            %s839 = sphi %s829, %s829
            %s840 = sphi %s831, %s831
          $region284: #{_transrec_forward_impl.1} parent=280 // loop_header_branch
            %837 = sbr.rel (%p835) target = $region288
          $region285: #{_transrec_forward_impl.1} parent=280 // loop_body
            %v841 = vld [vmem:[%s839] sm:%s832]
            %842 = vst [vmem:[%s840] sm:%s832] %v841
          $region286: #{_transrec_forward_impl.1} parent=280 // loop_footer
            %s838 = sadd.s32 1, %s834
          $region287: #{_transrec_forward_impl.1} parent=280 // loop_footer_branch
            %833 = sbr.rel target = $region283
          $region288: #{_transrec_forward_impl.1} parent=280 // loop_exit
            _
        $region281: #{_transrec_forward_impl.1} parent=265 // pred_fallthru
          _
      $region266: #{_transrec_forward_impl.1} parent=47 // pred_fallthru
        _
      // Predicated region
      $region267: #{_transrec_forward_impl.1} parent=47 // pred_check
        %p808 = pneg %p804
      $region268: #{_transrec_forward_impl.1} parent=47 // pred_check_branch
        %810 = sbr.rel (%p808) target = $region270
      $region269: #{_transrec_forward_impl.1} parent=47 // pred_region
        %s811 = sshllo.u32 0, 1
        loop: start=0, step=1, limit=1
        $region271: #{_transrec_forward_impl.1} parent=269 // loop_pre_header
          _
        $region272: #{_transrec_forward_impl.1} parent=269 // loop_header
          %s813 = sphi 0, %s817
          %p814 = scmp.ge.s32.totalorder %s813, 1
          %s818 = sphi %s801, %s801
          %s819 = sphi %s802, %s802
        $region273: #{_transrec_forward_impl.1} parent=269 // loop_header_branch
          %816 = sbr.rel (%p814) target = $region277
        $region274: #{_transrec_forward_impl.1} parent=269 // loop_body
          %v820 = vld [vmem:[%s818] sm:%s811]
          %821 = vst [vmem:[%s819] sm:%s811] %v820
        $region275: #{_transrec_forward_impl.1} parent=269 // loop_footer
          %s817 = sadd.s32 1, %s813
        $region276: #{_transrec_forward_impl.1} parent=269 // loop_footer_branch
          %812 = sbr.rel target = $region272
        $region277: #{_transrec_forward_impl.1} parent=269 // loop_exit
          _
      $region270: #{_transrec_forward_impl.1} parent=47 // pred_fallthru
        _
      // Predicated region
      $region289: #{_transrec_forward_impl.1} parent=47 // pred_check
        _
      $region290: #{_transrec_forward_impl.1} parent=47 // pred_check_branch
        %845 = sbr.rel (0) target = $region292
      $region291: #{_transrec_forward_impl.1} parent=47 // pred_region
        %846 = vsyncadd %s472, 16
      $region292: #{_transrec_forward_impl.1} parent=47 // pred_fallthru
        _
      %s847 = scalar_lea.vmem [#allocation4], %s754
      %s848 = scalar_lea.vmem %s12, %s753
      %p850 = scmp.lt.u32.totalorder 1, 8
      %p851 = pneg %p850
      // Predicated region
      $region293: #{_transrec_forward_impl.1} parent=47 // pred_check
        _
      $region294: #{_transrec_forward_impl.1} parent=47 // pred_check_branch
        %853 = sbr.rel (%p850) target = $region296
      $region295: #{_transrec_forward_impl.1} parent=47 // pred_region
        %s868 = sand.u32 1, 7
        %p869 = scmp.eq.s32.totalorder %s868, 0
        %p870 = pneg %p869
        // Predicated region
        $region308: #{_transrec_forward_impl.1} parent=295 // pred_check
          _
        $region309: #{_transrec_forward_impl.1} parent=295 // pred_check_branch
          %872 = sbr.rel (%p869) target = $region311
        $region310: #{_transrec_forward_impl.1} parent=295 // pred_region
          %s873 = sand.u32 1, 7
          %s874 = ssub.s32 1, %s873
          %s875 = scalar_lea.vmem %s847, %s874 [#allocation4]
          %s876 = ssub.s32 1, %s873
          %s877 = scalar_lea.vmem %s848, %s876
          %s878 = sshllo.u32 0, %s873
          loop: start=0, step=1, limit=1
          $region312: #{_transrec_forward_impl.1} parent=310 // loop_pre_header
            _
          $region313: #{_transrec_forward_impl.1} parent=310 // loop_header
            %s880 = sphi 0, %s884
            %p881 = scmp.ge.s32.totalorder %s880, 1
            %s885 = sphi %s875, %s875
            %s886 = sphi %s877, %s877
          $region314: #{_transrec_forward_impl.1} parent=310 // loop_header_branch
            %883 = sbr.rel (%p881) target = $region318
          $region315: #{_transrec_forward_impl.1} parent=310 // loop_body
            %v887 = vld [vmem:[%s885] sm:%s878]
            %888 = vst [vmem:[%s886] sm:%s878] %v887
          $region316: #{_transrec_forward_impl.1} parent=310 // loop_footer
            %s884 = sadd.s32 1, %s880
          $region317: #{_transrec_forward_impl.1} parent=310 // loop_footer_branch
            %879 = sbr.rel target = $region313
          $region318: #{_transrec_forward_impl.1} parent=310 // loop_exit
            _
        $region311: #{_transrec_forward_impl.1} parent=295 // pred_fallthru
          _
      $region296: #{_transrec_forward_impl.1} parent=47 // pred_fallthru
        _
      // Predicated region
      $region297: #{_transrec_forward_impl.1} parent=47 // pred_check
        %p854 = pneg %p850
      $region298: #{_transrec_forward_impl.1} parent=47 // pred_check_branch
        %856 = sbr.rel (%p854) target = $region300
      $region299: #{_transrec_forward_impl.1} parent=47 // pred_region
        %s857 = sshllo.u32 0, 1
        loop: start=0, step=1, limit=1
        $region301: #{_transrec_forward_impl.1} parent=299 // loop_pre_header
          _
        $region302: #{_transrec_forward_impl.1} parent=299 // loop_header
          %s859 = sphi 0, %s863
          %p860 = scmp.ge.s32.totalorder %s859, 1
          %s864 = sphi %s847, %s847
          %s865 = sphi %s848, %s848
        $region303: #{_transrec_forward_impl.1} parent=299 // loop_header_branch
          %862 = sbr.rel (%p860) target = $region307
        $region304: #{_transrec_forward_impl.1} parent=299 // loop_body
          %v866 = vld [vmem:[%s864] sm:%s857]
          %867 = vst [vmem:[%s865] sm:%s857] %v866
        $region305: #{_transrec_forward_impl.1} parent=299 // loop_footer
          %s863 = sadd.s32 1, %s859
        $region306: #{_transrec_forward_impl.1} parent=299 // loop_footer_branch
          %858 = sbr.rel target = $region302
        $region307: #{_transrec_forward_impl.1} parent=299 // loop_exit
          _
      $region300: #{_transrec_forward_impl.1} parent=47 // pred_fallthru
        _
      // Predicated region
      $region319: #{_transrec_forward_impl.1} parent=47 // pred_check
        _
      $region320: #{_transrec_forward_impl.1} parent=47 // pred_check_branch
        %891 = sbr.rel (0) target = $region322
      $region321: #{_transrec_forward_impl.1} parent=47 // pred_region
        %892 = vsyncadd %s472, 16
      $region322: #{_transrec_forward_impl.1} parent=47 // pred_fallthru
        _
      %s893 = sadd.s32 %s380, 3
      %s894 = sld [smem:[#allocation7 + %s893]]
      %s895 = sld [smem:[#allocation8 + %s893]]
      %s896 = sld [smem:[#allocation9 + %s893]]
      %s897 = sadd.s32 %s381, 3
      %s898 = scalar_lea.vmem [#allocation2], %s897
      %s899 = scalar_lea.vmem %s12, %s894
      %p901 = scmp.lt.u32.totalorder 1, 8
      %p902 = pneg %p901
      // Predicated region
      $region323: #{_transrec_forward_impl.1} parent=47 // pred_check
        _
      $region324: #{_transrec_forward_impl.1} parent=47 // pred_check_branch
        %904 = sbr.rel (%p901) target = $region326
      $region325: #{_transrec_forward_impl.1} parent=47 // pred_region
        %s919 = sand.u32 1, 7
        %p920 = scmp.eq.s32.totalorder %s919, 0
        %p921 = pneg %p920
        // Predicated region
        $region338: #{_transrec_forward_impl.1} parent=325 // pred_check
          _
        $region339: #{_transrec_forward_impl.1} parent=325 // pred_check_branch
          %923 = sbr.rel (%p920) target = $region341
        $region340: #{_transrec_forward_impl.1} parent=325 // pred_region
          %s924 = sand.u32 1, 7
          %s925 = ssub.s32 1, %s924
          %s926 = scalar_lea.vmem %s898, %s925 [#allocation2]
          %s927 = ssub.s32 1, %s924
          %s928 = scalar_lea.vmem %s899, %s927
          %s929 = sshllo.u32 0, %s924
          loop: start=0, step=1, limit=1
          $region342: #{_transrec_forward_impl.1} parent=340 // loop_pre_header
            _
          $region343: #{_transrec_forward_impl.1} parent=340 // loop_header
            %s931 = sphi 0, %s935
            %p932 = scmp.ge.s32.totalorder %s931, 1
            %s936 = sphi %s926, %s926
            %s937 = sphi %s928, %s928
          $region344: #{_transrec_forward_impl.1} parent=340 // loop_header_branch
            %934 = sbr.rel (%p932) target = $region348
          $region345: #{_transrec_forward_impl.1} parent=340 // loop_body
            %v938 = vld [vmem:[%s936] sm:%s929]
            %939 = vst [vmem:[%s937] sm:%s929] %v938
          $region346: #{_transrec_forward_impl.1} parent=340 // loop_footer
            %s935 = sadd.s32 1, %s931
          $region347: #{_transrec_forward_impl.1} parent=340 // loop_footer_branch
            %930 = sbr.rel target = $region343
          $region348: #{_transrec_forward_impl.1} parent=340 // loop_exit
            _
        $region341: #{_transrec_forward_impl.1} parent=325 // pred_fallthru
          _
      $region326: #{_transrec_forward_impl.1} parent=47 // pred_fallthru
        _
      // Predicated region
      $region327: #{_transrec_forward_impl.1} parent=47 // pred_check
        %p905 = pneg %p901
      $region328: #{_transrec_forward_impl.1} parent=47 // pred_check_branch
        %907 = sbr.rel (%p905) target = $region330
      $region329: #{_transrec_forward_impl.1} parent=47 // pred_region
        %s908 = sshllo.u32 0, 1
        loop: start=0, step=1, limit=1
        $region331: #{_transrec_forward_impl.1} parent=329 // loop_pre_header
          _
        $region332: #{_transrec_forward_impl.1} parent=329 // loop_header
          %s910 = sphi 0, %s914
          %p911 = scmp.ge.s32.totalorder %s910, 1
          %s915 = sphi %s898, %s898
          %s916 = sphi %s899, %s899
        $region333: #{_transrec_forward_impl.1} parent=329 // loop_header_branch
          %913 = sbr.rel (%p911) target = $region337
        $region334: #{_transrec_forward_impl.1} parent=329 // loop_body
          %v917 = vld [vmem:[%s915] sm:%s908]
          %918 = vst [vmem:[%s916] sm:%s908] %v917
        $region335: #{_transrec_forward_impl.1} parent=329 // loop_footer
          %s914 = sadd.s32 1, %s910
        $region336: #{_transrec_forward_impl.1} parent=329 // loop_footer_branch
          %909 = sbr.rel target = $region332
        $region337: #{_transrec_forward_impl.1} parent=329 // loop_exit
          _
      $region330: #{_transrec_forward_impl.1} parent=47 // pred_fallthru
        _
      // Predicated region
      $region349: #{_transrec_forward_impl.1} parent=47 // pred_check
        _
      $region350: #{_transrec_forward_impl.1} parent=47 // pred_check_branch
        %942 = sbr.rel (0) target = $region352
      $region351: #{_transrec_forward_impl.1} parent=47 // pred_region
        %943 = vsyncadd %s472, 16
      $region352: #{_transrec_forward_impl.1} parent=47 // pred_fallthru
        _
      %s944 = scalar_lea.vmem [#allocation3], %s897
      %s945 = scalar_lea.vmem %s12, %s895
      %p947 = scmp.lt.u32.totalorder 1, 8
      %p948 = pneg %p947
      // Predicated region
      $region353: #{_transrec_forward_impl.1} parent=47 // pred_check
        _
      $region354: #{_transrec_forward_impl.1} parent=47 // pred_check_branch
        %950 = sbr.rel (%p947) target = $region356
      $region355: #{_transrec_forward_impl.1} parent=47 // pred_region
        %s965 = sand.u32 1, 7
        %p966 = scmp.eq.s32.totalorder %s965, 0
        %p967 = pneg %p966
        // Predicated region
        $region368: #{_transrec_forward_impl.1} parent=355 // pred_check
          _
        $region369: #{_transrec_forward_impl.1} parent=355 // pred_check_branch
          %969 = sbr.rel (%p966) target = $region371
        $region370: #{_transrec_forward_impl.1} parent=355 // pred_region
          %s970 = sand.u32 1, 7
          %s971 = ssub.s32 1, %s970
          %s972 = scalar_lea.vmem %s944, %s971 [#allocation3]
          %s973 = ssub.s32 1, %s970
          %s974 = scalar_lea.vmem %s945, %s973
          %s975 = sshllo.u32 0, %s970
          loop: start=0, step=1, limit=1
          $region372: #{_transrec_forward_impl.1} parent=370 // loop_pre_header
            _
          $region373: #{_transrec_forward_impl.1} parent=370 // loop_header
            %s977 = sphi 0, %s981
            %p978 = scmp.ge.s32.totalorder %s977, 1
            %s982 = sphi %s972, %s972
            %s983 = sphi %s974, %s974
          $region374: #{_transrec_forward_impl.1} parent=370 // loop_header_branch
            %980 = sbr.rel (%p978) target = $region378
          $region375: #{_transrec_forward_impl.1} parent=370 // loop_body
            %v984 = vld [vmem:[%s982] sm:%s975]
            %985 = vst [vmem:[%s983] sm:%s975] %v984
          $region376: #{_transrec_forward_impl.1} parent=370 // loop_footer
            %s981 = sadd.s32 1, %s977
          $region377: #{_transrec_forward_impl.1} parent=370 // loop_footer_branch
            %976 = sbr.rel target = $region373
          $region378: #{_transrec_forward_impl.1} parent=370 // loop_exit
            _
        $region371: #{_transrec_forward_impl.1} parent=355 // pred_fallthru
          _
      $region356: #{_transrec_forward_impl.1} parent=47 // pred_fallthru
        _
      // Predicated region
      $region357: #{_transrec_forward_impl.1} parent=47 // pred_check
        %p951 = pneg %p947
      $region358: #{_transrec_forward_impl.1} parent=47 // pred_check_branch
        %953 = sbr.rel (%p951) target = $region360
      $region359: #{_transrec_forward_impl.1} parent=47 // pred_region
        %s954 = sshllo.u32 0, 1
        loop: start=0, step=1, limit=1
        $region361: #{_transrec_forward_impl.1} parent=359 // loop_pre_header
          _
        $region362: #{_transrec_forward_impl.1} parent=359 // loop_header
          %s956 = sphi 0, %s960
          %p957 = scmp.ge.s32.totalorder %s956, 1
          %s961 = sphi %s944, %s944
          %s962 = sphi %s945, %s945
        $region363: #{_transrec_forward_impl.1} parent=359 // loop_header_branch
          %959 = sbr.rel (%p957) target = $region367
        $region364: #{_transrec_forward_impl.1} parent=359 // loop_body
          %v963 = vld [vmem:[%s961] sm:%s954]
          %964 = vst [vmem:[%s962] sm:%s954] %v963
        $region365: #{_transrec_forward_impl.1} parent=359 // loop_footer
          %s960 = sadd.s32 1, %s956
        $region366: #{_transrec_forward_impl.1} parent=359 // loop_footer_branch
          %955 = sbr.rel target = $region362
        $region367: #{_transrec_forward_impl.1} parent=359 // loop_exit
          _
      $region360: #{_transrec_forward_impl.1} parent=47 // pred_fallthru
        _
      // Predicated region
      $region379: #{_transrec_forward_impl.1} parent=47 // pred_check
        _
      $region380: #{_transrec_forward_impl.1} parent=47 // pred_check_branch
        %988 = sbr.rel (0) target = $region382
      $region381: #{_transrec_forward_impl.1} parent=47 // pred_region
        %989 = vsyncadd %s472, 16
      $region382: #{_transrec_forward_impl.1} parent=47 // pred_fallthru
        _
      %s990 = scalar_lea.vmem [#allocation4], %s897
      %s991 = scalar_lea.vmem %s12, %s896
      %p993 = scmp.lt.u32.totalorder 1, 8
      %p994 = pneg %p993
      // Predicated region
      $region383: #{_transrec_forward_impl.1} parent=47 // pred_check
        _
      $region384: #{_transrec_forward_impl.1} parent=47 // pred_check_branch
        %996 = sbr.rel (%p993) target = $region386
      $region385: #{_transrec_forward_impl.1} parent=47 // pred_region
        %s1011 = sand.u32 1, 7
        %p1012 = scmp.eq.s32.totalorder %s1011, 0
        %p1013 = pneg %p1012
        // Predicated region
        $region398: #{_transrec_forward_impl.1} parent=385 // pred_check
          _
        $region399: #{_transrec_forward_impl.1} parent=385 // pred_check_branch
          %1015 = sbr.rel (%p1012) target = $region401
        $region400: #{_transrec_forward_impl.1} parent=385 // pred_region
          %s1016 = sand.u32 1, 7
          %s1017 = ssub.s32 1, %s1016
          %s1018 = scalar_lea.vmem %s990, %s1017 [#allocation4]
          %s1019 = ssub.s32 1, %s1016
          %s1020 = scalar_lea.vmem %s991, %s1019
          %s1021 = sshllo.u32 0, %s1016
          loop: start=0, step=1, limit=1
          $region402: #{_transrec_forward_impl.1} parent=400 // loop_pre_header
            _
          $region403: #{_transrec_forward_impl.1} parent=400 // loop_header
            %s1023 = sphi 0, %s1027
            %p1024 = scmp.ge.s32.totalorder %s1023, 1
            %s1028 = sphi %s1018, %s1018
            %s1029 = sphi %s1020, %s1020
          $region404: #{_transrec_forward_impl.1} parent=400 // loop_header_branch
            %1026 = sbr.rel (%p1024) target = $region408
          $region405: #{_transrec_forward_impl.1} parent=400 // loop_body
            %v1030 = vld [vmem:[%s1028] sm:%s1021]
            %1031 = vst [vmem:[%s1029] sm:%s1021] %v1030
          $region406: #{_transrec_forward_impl.1} parent=400 // loop_footer
            %s1027 = sadd.s32 1, %s1023
          $region407: #{_transrec_forward_impl.1} parent=400 // loop_footer_branch
            %1022 = sbr.rel target = $region403
          $region408: #{_transrec_forward_impl.1} parent=400 // loop_exit
            _
        $region401: #{_transrec_forward_impl.1} parent=385 // pred_fallthru
          _
      $region386: #{_transrec_forward_impl.1} parent=47 // pred_fallthru
        _
      // Predicated region
      $region387: #{_transrec_forward_impl.1} parent=47 // pred_check
        %p997 = pneg %p993
      $region388: #{_transrec_forward_impl.1} parent=47 // pred_check_branch
        %999 = sbr.rel (%p997) target = $region390
      $region389: #{_transrec_forward_impl.1} parent=47 // pred_region
        %s1000 = sshllo.u32 0, 1
        loop: start=0, step=1, limit=1
        $region391: #{_transrec_forward_impl.1} parent=389 // loop_pre_header
          _
        $region392: #{_transrec_forward_impl.1} parent=389 // loop_header
          %s1002 = sphi 0, %s1006
          %p1003 = scmp.ge.s32.totalorder %s1002, 1
          %s1007 = sphi %s990, %s990
          %s1008 = sphi %s991, %s991
        $region393: #{_transrec_forward_impl.1} parent=389 // loop_header_branch
          %1005 = sbr.rel (%p1003) target = $region397
        $region394: #{_transrec_forward_impl.1} parent=389 // loop_body
          %v1009 = vld [vmem:[%s1007] sm:%s1000]
          %1010 = vst [vmem:[%s1008] sm:%s1000] %v1009
        $region395: #{_transrec_forward_impl.1} parent=389 // loop_footer
          %s1006 = sadd.s32 1, %s1002
        $region396: #{_transrec_forward_impl.1} parent=389 // loop_footer_branch
          %1001 = sbr.rel target = $region392
        $region397: #{_transrec_forward_impl.1} parent=389 // loop_exit
          _
      $region390: #{_transrec_forward_impl.1} parent=47 // pred_fallthru
        _
      // Predicated region
      $region409: #{_transrec_forward_impl.1} parent=47 // pred_check
        _
      $region410: #{_transrec_forward_impl.1} parent=47 // pred_check_branch
        %1034 = sbr.rel (0) target = $region412
      $region411: #{_transrec_forward_impl.1} parent=47 // pred_region
        %1035 = vsyncadd %s472, 16
      $region412: #{_transrec_forward_impl.1} parent=47 // pred_fallthru
        _
      %s1036 = sadd.s32 %s380, 4
      %s1037 = sld [smem:[#allocation7 + %s1036]]
      %s1038 = sld [smem:[#allocation8 + %s1036]]
      %s1039 = sld [smem:[#allocation9 + %s1036]]
      %s1040 = sadd.s32 %s381, 4
      %s1041 = scalar_lea.vmem [#allocation2], %s1040
      %s1042 = scalar_lea.vmem %s12, %s1037
      %p1044 = scmp.lt.u32.totalorder 1, 8
      %p1045 = pneg %p1044
      // Predicated region
      $region413: #{_transrec_forward_impl.1} parent=47 // pred_check
        _
      $region414: #{_transrec_forward_impl.1} parent=47 // pred_check_branch
        %1047 = sbr.rel (%p1044) target = $region416
      $region415: #{_transrec_forward_impl.1} parent=47 // pred_region
        %s1062 = sand.u32 1, 7
        %p1063 = scmp.eq.s32.totalorder %s1062, 0
        %p1064 = pneg %p1063
        // Predicated region
        $region428: #{_transrec_forward_impl.1} parent=415 // pred_check
          _
        $region429: #{_transrec_forward_impl.1} parent=415 // pred_check_branch
          %1066 = sbr.rel (%p1063) target = $region431
        $region430: #{_transrec_forward_impl.1} parent=415 // pred_region
          %s1067 = sand.u32 1, 7
          %s1068 = ssub.s32 1, %s1067
          %s1069 = scalar_lea.vmem %s1041, %s1068 [#allocation2]
          %s1070 = ssub.s32 1, %s1067
          %s1071 = scalar_lea.vmem %s1042, %s1070
          %s1072 = sshllo.u32 0, %s1067
          loop: start=0, step=1, limit=1
          $region432: #{_transrec_forward_impl.1} parent=430 // loop_pre_header
            _
          $region433: #{_transrec_forward_impl.1} parent=430 // loop_header
            %s1074 = sphi 0, %s1078
            %p1075 = scmp.ge.s32.totalorder %s1074, 1
            %s1079 = sphi %s1069, %s1069
            %s1080 = sphi %s1071, %s1071
          $region434: #{_transrec_forward_impl.1} parent=430 // loop_header_branch
            %1077 = sbr.rel (%p1075) target = $region438
          $region435: #{_transrec_forward_impl.1} parent=430 // loop_body
            %v1081 = vld [vmem:[%s1079] sm:%s1072]
            %1082 = vst [vmem:[%s1080] sm:%s1072] %v1081
          $region436: #{_transrec_forward_impl.1} parent=430 // loop_footer
            %s1078 = sadd.s32 1, %s1074
          $region437: #{_transrec_forward_impl.1} parent=430 // loop_footer_branch
            %1073 = sbr.rel target = $region433
          $region438: #{_transrec_forward_impl.1} parent=430 // loop_exit
            _
        $region431: #{_transrec_forward_impl.1} parent=415 // pred_fallthru
          _
      $region416: #{_transrec_forward_impl.1} parent=47 // pred_fallthru
        _
      // Predicated region
      $region417: #{_transrec_forward_impl.1} parent=47 // pred_check
        %p1048 = pneg %p1044
      $region418: #{_transrec_forward_impl.1} parent=47 // pred_check_branch
        %1050 = sbr.rel (%p1048) target = $region420
      $region419: #{_transrec_forward_impl.1} parent=47 // pred_region
        %s1051 = sshllo.u32 0, 1
        loop: start=0, step=1, limit=1
        $region421: #{_transrec_forward_impl.1} parent=419 // loop_pre_header
          _
        $region422: #{_transrec_forward_impl.1} parent=419 // loop_header
          %s1053 = sphi 0, %s1057
          %p1054 = scmp.ge.s32.totalorder %s1053, 1
          %s1058 = sphi %s1041, %s1041
          %s1059 = sphi %s1042, %s1042
        $region423: #{_transrec_forward_impl.1} parent=419 // loop_header_branch
          %1056 = sbr.rel (%p1054) target = $region427
        $region424: #{_transrec_forward_impl.1} parent=419 // loop_body
          %v1060 = vld [vmem:[%s1058] sm:%s1051]
          %1061 = vst [vmem:[%s1059] sm:%s1051] %v1060
        $region425: #{_transrec_forward_impl.1} parent=419 // loop_footer
          %s1057 = sadd.s32 1, %s1053
        $region426: #{_transrec_forward_impl.1} parent=419 // loop_footer_branch
          %1052 = sbr.rel target = $region422
        $region427: #{_transrec_forward_impl.1} parent=419 // loop_exit
          _
      $region420: #{_transrec_forward_impl.1} parent=47 // pred_fallthru
        _
      // Predicated region
      $region439: #{_transrec_forward_impl.1} parent=47 // pred_check
        _
      $region440: #{_transrec_forward_impl.1} parent=47 // pred_check_branch
        %1085 = sbr.rel (0) target = $region442
      $region441: #{_transrec_forward_impl.1} parent=47 // pred_region
        %1086 = vsyncadd %s472, 16
      $region442: #{_transrec_forward_impl.1} parent=47 // pred_fallthru
        _
      %s1087 = scalar_lea.vmem [#allocation3], %s1040
      %s1088 = scalar_lea.vmem %s12, %s1038
      %p1090 = scmp.lt.u32.totalorder 1, 8
      %p1091 = pneg %p1090
      // Predicated region
      $region443: #{_transrec_forward_impl.1} parent=47 // pred_check
        _
      $region444: #{_transrec_forward_impl.1} parent=47 // pred_check_branch
        %1093 = sbr.rel (%p1090) target = $region446
      $region445: #{_transrec_forward_impl.1} parent=47 // pred_region
        %s1108 = sand.u32 1, 7
        %p1109 = scmp.eq.s32.totalorder %s1108, 0
        %p1110 = pneg %p1109
        // Predicated region
        $region458: #{_transrec_forward_impl.1} parent=445 // pred_check
          _
        $region459: #{_transrec_forward_impl.1} parent=445 // pred_check_branch
          %1112 = sbr.rel (%p1109) target = $region461
        $region460: #{_transrec_forward_impl.1} parent=445 // pred_region
          %s1113 = sand.u32 1, 7
          %s1114 = ssub.s32 1, %s1113
          %s1115 = scalar_lea.vmem %s1087, %s1114 [#allocation3]
          %s1116 = ssub.s32 1, %s1113
          %s1117 = scalar_lea.vmem %s1088, %s1116
          %s1118 = sshllo.u32 0, %s1113
          loop: start=0, step=1, limit=1
          $region462: #{_transrec_forward_impl.1} parent=460 // loop_pre_header
            _
          $region463: #{_transrec_forward_impl.1} parent=460 // loop_header
            %s1120 = sphi 0, %s1124
            %p1121 = scmp.ge.s32.totalorder %s1120, 1
            %s1125 = sphi %s1115, %s1115
            %s1126 = sphi %s1117, %s1117
          $region464: #{_transrec_forward_impl.1} parent=460 // loop_header_branch
            %1123 = sbr.rel (%p1121) target = $region468
          $region465: #{_transrec_forward_impl.1} parent=460 // loop_body
            %v1127 = vld [vmem:[%s1125] sm:%s1118]
            %1128 = vst [vmem:[%s1126] sm:%s1118] %v1127
          $region466: #{_transrec_forward_impl.1} parent=460 // loop_footer
            %s1124 = sadd.s32 1, %s1120
          $region467: #{_transrec_forward_impl.1} parent=460 // loop_footer_branch
            %1119 = sbr.rel target = $region463
          $region468: #{_transrec_forward_impl.1} parent=460 // loop_exit
            _
        $region461: #{_transrec_forward_impl.1} parent=445 // pred_fallthru
          _
      $region446: #{_transrec_forward_impl.1} parent=47 // pred_fallthru
        _
      // Predicated region
      $region447: #{_transrec_forward_impl.1} parent=47 // pred_check
        %p1094 = pneg %p1090
      $region448: #{_transrec_forward_impl.1} parent=47 // pred_check_branch
        %1096 = sbr.rel (%p1094) target = $region450
      $region449: #{_transrec_forward_impl.1} parent=47 // pred_region
        %s1097 = sshllo.u32 0, 1
        loop: start=0, step=1, limit=1
        $region451: #{_transrec_forward_impl.1} parent=449 // loop_pre_header
          _
        $region452: #{_transrec_forward_impl.1} parent=449 // loop_header
          %s1099 = sphi 0, %s1103
          %p1100 = scmp.ge.s32.totalorder %s1099, 1
          %s1104 = sphi %s1087, %s1087
          %s1105 = sphi %s1088, %s1088
        $region453: #{_transrec_forward_impl.1} parent=449 // loop_header_branch
          %1102 = sbr.rel (%p1100) target = $region457
        $region454: #{_transrec_forward_impl.1} parent=449 // loop_body
          %v1106 = vld [vmem:[%s1104] sm:%s1097]
          %1107 = vst [vmem:[%s1105] sm:%s1097] %v1106
        $region455: #{_transrec_forward_impl.1} parent=449 // loop_footer
          %s1103 = sadd.s32 1, %s1099
        $region456: #{_transrec_forward_impl.1} parent=449 // loop_footer_branch
          %1098 = sbr.rel target = $region452
        $region457: #{_transrec_forward_impl.1} parent=449 // loop_exit
          _
      $region450: #{_transrec_forward_impl.1} parent=47 // pred_fallthru
        _
      // Predicated region
      $region469: #{_transrec_forward_impl.1} parent=47 // pred_check
        _
      $region470: #{_transrec_forward_impl.1} parent=47 // pred_check_branch
        %1131 = sbr.rel (0) target = $region472
      $region471: #{_transrec_forward_impl.1} parent=47 // pred_region
        %1132 = vsyncadd %s472, 16
      $region472: #{_transrec_forward_impl.1} parent=47 // pred_fallthru
        _
      %s1133 = scalar_lea.vmem [#allocation4], %s1040
      %s1134 = scalar_lea.vmem %s12, %s1039
      %p1136 = scmp.lt.u32.totalorder 1, 8
      %p1137 = pneg %p1136
      // Predicated region
      $region473: #{_transrec_forward_impl.1} parent=47 // pred_check
        _
      $region474: #{_transrec_forward_impl.1} parent=47 // pred_check_branch
        %1139 = sbr.rel (%p1136) target = $region476
      $region475: #{_transrec_forward_impl.1} parent=47 // pred_region
        %s1154 = sand.u32 1, 7
        %p1155 = scmp.eq.s32.totalorder %s1154, 0
        %p1156 = pneg %p1155
        // Predicated region
        $region488: #{_transrec_forward_impl.1} parent=475 // pred_check
          _
        $region489: #{_transrec_forward_impl.1} parent=475 // pred_check_branch
          %1158 = sbr.rel (%p1155) target = $region491
        $region490: #{_transrec_forward_impl.1} parent=475 // pred_region
          %s1159 = sand.u32 1, 7
          %s1160 = ssub.s32 1, %s1159
          %s1161 = scalar_lea.vmem %s1133, %s1160 [#allocation4]
          %s1162 = ssub.s32 1, %s1159
          %s1163 = scalar_lea.vmem %s1134, %s1162
          %s1164 = sshllo.u32 0, %s1159
          loop: start=0, step=1, limit=1
          $region492: #{_transrec_forward_impl.1} parent=490 // loop_pre_header
            _
          $region493: #{_transrec_forward_impl.1} parent=490 // loop_header
            %s1166 = sphi 0, %s1170
            %p1167 = scmp.ge.s32.totalorder %s1166, 1
            %s1171 = sphi %s1161, %s1161
            %s1172 = sphi %s1163, %s1163
          $region494: #{_transrec_forward_impl.1} parent=490 // loop_header_branch
            %1169 = sbr.rel (%p1167) target = $region498
          $region495: #{_transrec_forward_impl.1} parent=490 // loop_body
            %v1173 = vld [vmem:[%s1171] sm:%s1164]
            %1174 = vst [vmem:[%s1172] sm:%s1164] %v1173
          $region496: #{_transrec_forward_impl.1} parent=490 // loop_footer
            %s1170 = sadd.s32 1, %s1166
          $region497: #{_transrec_forward_impl.1} parent=490 // loop_footer_branch
            %1165 = sbr.rel target = $region493
          $region498: #{_transrec_forward_impl.1} parent=490 // loop_exit
            _
        $region491: #{_transrec_forward_impl.1} parent=475 // pred_fallthru
          _
      $region476: #{_transrec_forward_impl.1} parent=47 // pred_fallthru
        _
      // Predicated region
      $region477: #{_transrec_forward_impl.1} parent=47 // pred_check
        %p1140 = pneg %p1136
      $region478: #{_transrec_forward_impl.1} parent=47 // pred_check_branch
        %1142 = sbr.rel (%p1140) target = $region480
      $region479: #{_transrec_forward_impl.1} parent=47 // pred_region
        %s1143 = sshllo.u32 0, 1
        loop: start=0, step=1, limit=1
        $region481: #{_transrec_forward_impl.1} parent=479 // loop_pre_header
          _
        $region482: #{_transrec_forward_impl.1} parent=479 // loop_header
          %s1145 = sphi 0, %s1149
          %p1146 = scmp.ge.s32.totalorder %s1145, 1
          %s1150 = sphi %s1133, %s1133
          %s1151 = sphi %s1134, %s1134
        $region483: #{_transrec_forward_impl.1} parent=479 // loop_header_branch
          %1148 = sbr.rel (%p1146) target = $region487
        $region484: #{_transrec_forward_impl.1} parent=479 // loop_body
          %v1152 = vld [vmem:[%s1150] sm:%s1143]
          %1153 = vst [vmem:[%s1151] sm:%s1143] %v1152
        $region485: #{_transrec_forward_impl.1} parent=479 // loop_footer
          %s1149 = sadd.s32 1, %s1145
        $region486: #{_transrec_forward_impl.1} parent=479 // loop_footer_branch
          %1144 = sbr.rel target = $region482
        $region487: #{_transrec_forward_impl.1} parent=479 // loop_exit
          _
      $region480: #{_transrec_forward_impl.1} parent=47 // pred_fallthru
        _
      // Predicated region
      $region499: #{_transrec_forward_impl.1} parent=47 // pred_check
        _
      $region500: #{_transrec_forward_impl.1} parent=47 // pred_check_branch
        %1177 = sbr.rel (0) target = $region502
      $region501: #{_transrec_forward_impl.1} parent=47 // pred_region
        %1178 = vsyncadd %s472, 16
      $region502: #{_transrec_forward_impl.1} parent=47 // pred_fallthru
        _
      %s1179 = sadd.s32 %s380, 5
      %s1180 = sld [smem:[#allocation7 + %s1179]]
      %s1181 = sld [smem:[#allocation8 + %s1179]]
      %s1182 = sld [smem:[#allocation9 + %s1179]]
      %s1183 = sadd.s32 %s381, 5
      %s1184 = scalar_lea.vmem [#allocation2], %s1183
      %s1185 = scalar_lea.vmem %s12, %s1180
      %p1187 = scmp.lt.u32.totalorder 1, 8
      %p1188 = pneg %p1187
      // Predicated region
      $region503: #{_transrec_forward_impl.1} parent=47 // pred_check
        _
      $region504: #{_transrec_forward_impl.1} parent=47 // pred_check_branch
        %1190 = sbr.rel (%p1187) target = $region506
      $region505: #{_transrec_forward_impl.1} parent=47 // pred_region
        %s1205 = sand.u32 1, 7
        %p1206 = scmp.eq.s32.totalorder %s1205, 0
        %p1207 = pneg %p1206
        // Predicated region
        $region518: #{_transrec_forward_impl.1} parent=505 // pred_check
          _
        $region519: #{_transrec_forward_impl.1} parent=505 // pred_check_branch
          %1209 = sbr.rel (%p1206) target = $region521
        $region520: #{_transrec_forward_impl.1} parent=505 // pred_region
          %s1210 = sand.u32 1, 7
          %s1211 = ssub.s32 1, %s1210
          %s1212 = scalar_lea.vmem %s1184, %s1211 [#allocation2]
          %s1213 = ssub.s32 1, %s1210
          %s1214 = scalar_lea.vmem %s1185, %s1213
          %s1215 = sshllo.u32 0, %s1210
          loop: start=0, step=1, limit=1
          $region522: #{_transrec_forward_impl.1} parent=520 // loop_pre_header
            _
          $region523: #{_transrec_forward_impl.1} parent=520 // loop_header
            %s1217 = sphi 0, %s1221
            %p1218 = scmp.ge.s32.totalorder %s1217, 1
            %s1222 = sphi %s1212, %s1212
            %s1223 = sphi %s1214, %s1214
          $region524: #{_transrec_forward_impl.1} parent=520 // loop_header_branch
            %1220 = sbr.rel (%p1218) target = $region528
          $region525: #{_transrec_forward_impl.1} parent=520 // loop_body
            %v1224 = vld [vmem:[%s1222] sm:%s1215]
            %1225 = vst [vmem:[%s1223] sm:%s1215] %v1224
          $region526: #{_transrec_forward_impl.1} parent=520 // loop_footer
            %s1221 = sadd.s32 1, %s1217
          $region527: #{_transrec_forward_impl.1} parent=520 // loop_footer_branch
            %1216 = sbr.rel target = $region523
          $region528: #{_transrec_forward_impl.1} parent=520 // loop_exit
            _
        $region521: #{_transrec_forward_impl.1} parent=505 // pred_fallthru
          _
      $region506: #{_transrec_forward_impl.1} parent=47 // pred_fallthru
        _
      // Predicated region
      $region507: #{_transrec_forward_impl.1} parent=47 // pred_check
        %p1191 = pneg %p1187
      $region508: #{_transrec_forward_impl.1} parent=47 // pred_check_branch
        %1193 = sbr.rel (%p1191) target = $region510
      $region509: #{_transrec_forward_impl.1} parent=47 // pred_region
        %s1194 = sshllo.u32 0, 1
        loop: start=0, step=1, limit=1
        $region511: #{_transrec_forward_impl.1} parent=509 // loop_pre_header
          _
        $region512: #{_transrec_forward_impl.1} parent=509 // loop_header
          %s1196 = sphi 0, %s1200
          %p1197 = scmp.ge.s32.totalorder %s1196, 1
          %s1201 = sphi %s1184, %s1184
          %s1202 = sphi %s1185, %s1185
        $region513: #{_transrec_forward_impl.1} parent=509 // loop_header_branch
          %1199 = sbr.rel (%p1197) target = $region517
        $region514: #{_transrec_forward_impl.1} parent=509 // loop_body
          %v1203 = vld [vmem:[%s1201] sm:%s1194]
          %1204 = vst [vmem:[%s1202] sm:%s1194] %v1203
        $region515: #{_transrec_forward_impl.1} parent=509 // loop_footer
          %s1200 = sadd.s32 1, %s1196
        $region516: #{_transrec_forward_impl.1} parent=509 // loop_footer_branch
          %1195 = sbr.rel target = $region512
        $region517: #{_transrec_forward_impl.1} parent=509 // loop_exit
          _
      $region510: #{_transrec_forward_impl.1} parent=47 // pred_fallthru
        _
      // Predicated region
      $region529: #{_transrec_forward_impl.1} parent=47 // pred_check
        _
      $region530: #{_transrec_forward_impl.1} parent=47 // pred_check_branch
        %1228 = sbr.rel (0) target = $region532
      $region531: #{_transrec_forward_impl.1} parent=47 // pred_region
        %1229 = vsyncadd %s472, 16
      $region532: #{_transrec_forward_impl.1} parent=47 // pred_fallthru
        _
      %s1230 = scalar_lea.vmem [#allocation3], %s1183
      %s1231 = scalar_lea.vmem %s12, %s1181
      %p1233 = scmp.lt.u32.totalorder 1, 8
      %p1234 = pneg %p1233
      // Predicated region
      $region533: #{_transrec_forward_impl.1} parent=47 // pred_check
        _
      $region534: #{_transrec_forward_impl.1} parent=47 // pred_check_branch
        %1236 = sbr.rel (%p1233) target = $region536
      $region535: #{_transrec_forward_impl.1} parent=47 // pred_region
        %s1251 = sand.u32 1, 7
        %p1252 = scmp.eq.s32.totalorder %s1251, 0
        %p1253 = pneg %p1252
        // Predicated region
        $region548: #{_transrec_forward_impl.1} parent=535 // pred_check
          _
        $region549: #{_transrec_forward_impl.1} parent=535 // pred_check_branch
          %1255 = sbr.rel (%p1252) target = $region551
        $region550: #{_transrec_forward_impl.1} parent=535 // pred_region
          %s1256 = sand.u32 1, 7
          %s1257 = ssub.s32 1, %s1256
          %s1258 = scalar_lea.vmem %s1230, %s1257 [#allocation3]
          %s1259 = ssub.s32 1, %s1256
          %s1260 = scalar_lea.vmem %s1231, %s1259
          %s1261 = sshllo.u32 0, %s1256
          loop: start=0, step=1, limit=1
          $region552: #{_transrec_forward_impl.1} parent=550 // loop_pre_header
            _
          $region553: #{_transrec_forward_impl.1} parent=550 // loop_header
            %s1263 = sphi 0, %s1267
            %p1264 = scmp.ge.s32.totalorder %s1263, 1
            %s1268 = sphi %s1258, %s1258
            %s1269 = sphi %s1260, %s1260
          $region554: #{_transrec_forward_impl.1} parent=550 // loop_header_branch
            %1266 = sbr.rel (%p1264) target = $region558
          $region555: #{_transrec_forward_impl.1} parent=550 // loop_body
            %v1270 = vld [vmem:[%s1268] sm:%s1261]
            %1271 = vst [vmem:[%s1269] sm:%s1261] %v1270
          $region556: #{_transrec_forward_impl.1} parent=550 // loop_footer
            %s1267 = sadd.s32 1, %s1263
          $region557: #{_transrec_forward_impl.1} parent=550 // loop_footer_branch
            %1262 = sbr.rel target = $region553
          $region558: #{_transrec_forward_impl.1} parent=550 // loop_exit
            _
        $region551: #{_transrec_forward_impl.1} parent=535 // pred_fallthru
          _
      $region536: #{_transrec_forward_impl.1} parent=47 // pred_fallthru
        _
      // Predicated region
      $region537: #{_transrec_forward_impl.1} parent=47 // pred_check
        %p1237 = pneg %p1233
      $region538: #{_transrec_forward_impl.1} parent=47 // pred_check_branch
        %1239 = sbr.rel (%p1237) target = $region540
      $region539: #{_transrec_forward_impl.1} parent=47 // pred_region
        %s1240 = sshllo.u32 0, 1
        loop: start=0, step=1, limit=1
        $region541: #{_transrec_forward_impl.1} parent=539 // loop_pre_header
          _
        $region542: #{_transrec_forward_impl.1} parent=539 // loop_header
          %s1242 = sphi 0, %s1246
          %p1243 = scmp.ge.s32.totalorder %s1242, 1
          %s1247 = sphi %s1230, %s1230
          %s1248 = sphi %s1231, %s1231
        $region543: #{_transrec_forward_impl.1} parent=539 // loop_header_branch
          %1245 = sbr.rel (%p1243) target = $region547
        $region544: #{_transrec_forward_impl.1} parent=539 // loop_body
          %v1249 = vld [vmem:[%s1247] sm:%s1240]
          %1250 = vst [vmem:[%s1248] sm:%s1240] %v1249
        $region545: #{_transrec_forward_impl.1} parent=539 // loop_footer
          %s1246 = sadd.s32 1, %s1242
        $region546: #{_transrec_forward_impl.1} parent=539 // loop_footer_branch
          %1241 = sbr.rel target = $region542
        $region547: #{_transrec_forward_impl.1} parent=539 // loop_exit
          _
      $region540: #{_transrec_forward_impl.1} parent=47 // pred_fallthru
        _
      // Predicated region
      $region559: #{_transrec_forward_impl.1} parent=47 // pred_check
        _
      $region560: #{_transrec_forward_impl.1} parent=47 // pred_check_branch
        %1274 = sbr.rel (0) target = $region562
      $region561: #{_transrec_forward_impl.1} parent=47 // pred_region
        %1275 = vsyncadd %s472, 16
      $region562: #{_transrec_forward_impl.1} parent=47 // pred_fallthru
        _
      %s1276 = scalar_lea.vmem [#allocation4], %s1183
      %s1277 = scalar_lea.vmem %s12, %s1182
      %p1279 = scmp.lt.u32.totalorder 1, 8
      %p1280 = pneg %p1279
      // Predicated region
      $region563: #{_transrec_forward_impl.1} parent=47 // pred_check
        _
      $region564: #{_transrec_forward_impl.1} parent=47 // pred_check_branch
        %1282 = sbr.rel (%p1279) target = $region566
      $region565: #{_transrec_forward_impl.1} parent=47 // pred_region
        %s1297 = sand.u32 1, 7
        %p1298 = scmp.eq.s32.totalorder %s1297, 0
        %p1299 = pneg %p1298
        // Predicated region
        $region578: #{_transrec_forward_impl.1} parent=565 // pred_check
          _
        $region579: #{_transrec_forward_impl.1} parent=565 // pred_check_branch
          %1301 = sbr.rel (%p1298) target = $region581
        $region580: #{_transrec_forward_impl.1} parent=565 // pred_region
          %s1302 = sand.u32 1, 7
          %s1303 = ssub.s32 1, %s1302
          %s1304 = scalar_lea.vmem %s1276, %s1303 [#allocation4]
          %s1305 = ssub.s32 1, %s1302
          %s1306 = scalar_lea.vmem %s1277, %s1305
          %s1307 = sshllo.u32 0, %s1302
          loop: start=0, step=1, limit=1
          $region582: #{_transrec_forward_impl.1} parent=580 // loop_pre_header
            _
          $region583: #{_transrec_forward_impl.1} parent=580 // loop_header
            %s1309 = sphi 0, %s1313
            %p1310 = scmp.ge.s32.totalorder %s1309, 1
            %s1314 = sphi %s1304, %s1304
            %s1315 = sphi %s1306, %s1306
          $region584: #{_transrec_forward_impl.1} parent=580 // loop_header_branch
            %1312 = sbr.rel (%p1310) target = $region588
          $region585: #{_transrec_forward_impl.1} parent=580 // loop_body
            %v1316 = vld [vmem:[%s1314] sm:%s1307]
            %1317 = vst [vmem:[%s1315] sm:%s1307] %v1316
          $region586: #{_transrec_forward_impl.1} parent=580 // loop_footer
            %s1313 = sadd.s32 1, %s1309
          $region587: #{_transrec_forward_impl.1} parent=580 // loop_footer_branch
            %1308 = sbr.rel target = $region583
          $region588: #{_transrec_forward_impl.1} parent=580 // loop_exit
            _
        $region581: #{_transrec_forward_impl.1} parent=565 // pred_fallthru
          _
      $region566: #{_transrec_forward_impl.1} parent=47 // pred_fallthru
        _
      // Predicated region
      $region567: #{_transrec_forward_impl.1} parent=47 // pred_check
        %p1283 = pneg %p1279
      $region568: #{_transrec_forward_impl.1} parent=47 // pred_check_branch
        %1285 = sbr.rel (%p1283) target = $region570
      $region569: #{_transrec_forward_impl.1} parent=47 // pred_region
        %s1286 = sshllo.u32 0, 1
        loop: start=0, step=1, limit=1
        $region571: #{_transrec_forward_impl.1} parent=569 // loop_pre_header
          _
        $region572: #{_transrec_forward_impl.1} parent=569 // loop_header
          %s1288 = sphi 0, %s1292
          %p1289 = scmp.ge.s32.totalorder %s1288, 1
          %s1293 = sphi %s1276, %s1276
          %s1294 = sphi %s1277, %s1277
        $region573: #{_transrec_forward_impl.1} parent=569 // loop_header_branch
          %1291 = sbr.rel (%p1289) target = $region577
        $region574: #{_transrec_forward_impl.1} parent=569 // loop_body
          %v1295 = vld [vmem:[%s1293] sm:%s1286]
          %1296 = vst [vmem:[%s1294] sm:%s1286] %v1295
        $region575: #{_transrec_forward_impl.1} parent=569 // loop_footer
          %s1292 = sadd.s32 1, %s1288
        $region576: #{_transrec_forward_impl.1} parent=569 // loop_footer_branch
          %1287 = sbr.rel target = $region572
        $region577: #{_transrec_forward_impl.1} parent=569 // loop_exit
          _
      $region570: #{_transrec_forward_impl.1} parent=47 // pred_fallthru
        _
      // Predicated region
      $region589: #{_transrec_forward_impl.1} parent=47 // pred_check
        _
      $region590: #{_transrec_forward_impl.1} parent=47 // pred_check_branch
        %1320 = sbr.rel (0) target = $region592
      $region591: #{_transrec_forward_impl.1} parent=47 // pred_region
        %1321 = vsyncadd %s472, 16
      $region592: #{_transrec_forward_impl.1} parent=47 // pred_fallthru
        _
      %s1322 = sadd.s32 %s380, 6
      %s1323 = sld [smem:[#allocation7 + %s1322]]
      %s1324 = sld [smem:[#allocation8 + %s1322]]
      %s1325 = sld [smem:[#allocation9 + %s1322]]
      %s1326 = sadd.s32 %s381, 6
      %s1327 = scalar_lea.vmem [#allocation2], %s1326
      %s1328 = scalar_lea.vmem %s12, %s1323
      %p1330 = scmp.lt.u32.totalorder 1, 8
      %p1331 = pneg %p1330
      // Predicated region
      $region593: #{_transrec_forward_impl.1} parent=47 // pred_check
        _
      $region594: #{_transrec_forward_impl.1} parent=47 // pred_check_branch
        %1333 = sbr.rel (%p1330) target = $region596
      $region595: #{_transrec_forward_impl.1} parent=47 // pred_region
        %s1348 = sand.u32 1, 7
        %p1349 = scmp.eq.s32.totalorder %s1348, 0
        %p1350 = pneg %p1349
        // Predicated region
        $region608: #{_transrec_forward_impl.1} parent=595 // pred_check
          _
        $region609: #{_transrec_forward_impl.1} parent=595 // pred_check_branch
          %1352 = sbr.rel (%p1349) target = $region611
        $region610: #{_transrec_forward_impl.1} parent=595 // pred_region
          %s1353 = sand.u32 1, 7
          %s1354 = ssub.s32 1, %s1353
          %s1355 = scalar_lea.vmem %s1327, %s1354 [#allocation2]
          %s1356 = ssub.s32 1, %s1353
          %s1357 = scalar_lea.vmem %s1328, %s1356
          %s1358 = sshllo.u32 0, %s1353
          loop: start=0, step=1, limit=1
          $region612: #{_transrec_forward_impl.1} parent=610 // loop_pre_header
            _
          $region613: #{_transrec_forward_impl.1} parent=610 // loop_header
            %s1360 = sphi 0, %s1364
            %p1361 = scmp.ge.s32.totalorder %s1360, 1
            %s1365 = sphi %s1355, %s1355
            %s1366 = sphi %s1357, %s1357
          $region614: #{_transrec_forward_impl.1} parent=610 // loop_header_branch
            %1363 = sbr.rel (%p1361) target = $region618
          $region615: #{_transrec_forward_impl.1} parent=610 // loop_body
            %v1367 = vld [vmem:[%s1365] sm:%s1358]
            %1368 = vst [vmem:[%s1366] sm:%s1358] %v1367
          $region616: #{_transrec_forward_impl.1} parent=610 // loop_footer
            %s1364 = sadd.s32 1, %s1360
          $region617: #{_transrec_forward_impl.1} parent=610 // loop_footer_branch
            %1359 = sbr.rel target = $region613
          $region618: #{_transrec_forward_impl.1} parent=610 // loop_exit
            _
        $region611: #{_transrec_forward_impl.1} parent=595 // pred_fallthru
          _
      $region596: #{_transrec_forward_impl.1} parent=47 // pred_fallthru
        _
      // Predicated region
      $region597: #{_transrec_forward_impl.1} parent=47 // pred_check
        %p1334 = pneg %p1330
      $region598: #{_transrec_forward_impl.1} parent=47 // pred_check_branch
        %1336 = sbr.rel (%p1334) target = $region600
      $region599: #{_transrec_forward_impl.1} parent=47 // pred_region
        %s1337 = sshllo.u32 0, 1
        loop: start=0, step=1, limit=1
        $region601: #{_transrec_forward_impl.1} parent=599 // loop_pre_header
          _
        $region602: #{_transrec_forward_impl.1} parent=599 // loop_header
          %s1339 = sphi 0, %s1343
          %p1340 = scmp.ge.s32.totalorder %s1339, 1
          %s1344 = sphi %s1327, %s1327
          %s1345 = sphi %s1328, %s1328
        $region603: #{_transrec_forward_impl.1} parent=599 // loop_header_branch
          %1342 = sbr.rel (%p1340) target = $region607
        $region604: #{_transrec_forward_impl.1} parent=599 // loop_body
          %v1346 = vld [vmem:[%s1344] sm:%s1337]
          %1347 = vst [vmem:[%s1345] sm:%s1337] %v1346
        $region605: #{_transrec_forward_impl.1} parent=599 // loop_footer
          %s1343 = sadd.s32 1, %s1339
        $region606: #{_transrec_forward_impl.1} parent=599 // loop_footer_branch
          %1338 = sbr.rel target = $region602
        $region607: #{_transrec_forward_impl.1} parent=599 // loop_exit
          _
      $region600: #{_transrec_forward_impl.1} parent=47 // pred_fallthru
        _
      // Predicated region
      $region619: #{_transrec_forward_impl.1} parent=47 // pred_check
        _
      $region620: #{_transrec_forward_impl.1} parent=47 // pred_check_branch
        %1371 = sbr.rel (0) target = $region622
      $region621: #{_transrec_forward_impl.1} parent=47 // pred_region
        %1372 = vsyncadd %s472, 16
      $region622: #{_transrec_forward_impl.1} parent=47 // pred_fallthru
        _
      %s1373 = scalar_lea.vmem [#allocation3], %s1326
      %s1374 = scalar_lea.vmem %s12, %s1324
      %p1376 = scmp.lt.u32.totalorder 1, 8
      %p1377 = pneg %p1376
      // Predicated region
      $region623: #{_transrec_forward_impl.1} parent=47 // pred_check
        _
      $region624: #{_transrec_forward_impl.1} parent=47 // pred_check_branch
        %1379 = sbr.rel (%p1376) target = $region626
      $region625: #{_transrec_forward_impl.1} parent=47 // pred_region
        %s1394 = sand.u32 1, 7
        %p1395 = scmp.eq.s32.totalorder %s1394, 0
        %p1396 = pneg %p1395
        // Predicated region
        $region638: #{_transrec_forward_impl.1} parent=625 // pred_check
          _
        $region639: #{_transrec_forward_impl.1} parent=625 // pred_check_branch
          %1398 = sbr.rel (%p1395) target = $region641
        $region640: #{_transrec_forward_impl.1} parent=625 // pred_region
          %s1399 = sand.u32 1, 7
          %s1400 = ssub.s32 1, %s1399
          %s1401 = scalar_lea.vmem %s1373, %s1400 [#allocation3]
          %s1402 = ssub.s32 1, %s1399
          %s1403 = scalar_lea.vmem %s1374, %s1402
          %s1404 = sshllo.u32 0, %s1399
          loop: start=0, step=1, limit=1
          $region642: #{_transrec_forward_impl.1} parent=640 // loop_pre_header
            _
          $region643: #{_transrec_forward_impl.1} parent=640 // loop_header
            %s1406 = sphi 0, %s1410
            %p1407 = scmp.ge.s32.totalorder %s1406, 1
            %s1411 = sphi %s1401, %s1401
            %s1412 = sphi %s1403, %s1403
          $region644: #{_transrec_forward_impl.1} parent=640 // loop_header_branch
            %1409 = sbr.rel (%p1407) target = $region648
          $region645: #{_transrec_forward_impl.1} parent=640 // loop_body
            %v1413 = vld [vmem:[%s1411] sm:%s1404]
            %1414 = vst [vmem:[%s1412] sm:%s1404] %v1413
          $region646: #{_transrec_forward_impl.1} parent=640 // loop_footer
            %s1410 = sadd.s32 1, %s1406
          $region647: #{_transrec_forward_impl.1} parent=640 // loop_footer_branch
            %1405 = sbr.rel target = $region643
          $region648: #{_transrec_forward_impl.1} parent=640 // loop_exit
            _
        $region641: #{_transrec_forward_impl.1} parent=625 // pred_fallthru
          _
      $region626: #{_transrec_forward_impl.1} parent=47 // pred_fallthru
        _
      // Predicated region
      $region627: #{_transrec_forward_impl.1} parent=47 // pred_check
        %p1380 = pneg %p1376
      $region628: #{_transrec_forward_impl.1} parent=47 // pred_check_branch
        %1382 = sbr.rel (%p1380) target = $region630
      $region629: #{_transrec_forward_impl.1} parent=47 // pred_region
        %s1383 = sshllo.u32 0, 1
        loop: start=0, step=1, limit=1
        $region631: #{_transrec_forward_impl.1} parent=629 // loop_pre_header
          _
        $region632: #{_transrec_forward_impl.1} parent=629 // loop_header
          %s1385 = sphi 0, %s1389
          %p1386 = scmp.ge.s32.totalorder %s1385, 1
          %s1390 = sphi %s1373, %s1373
          %s1391 = sphi %s1374, %s1374
        $region633: #{_transrec_forward_impl.1} parent=629 // loop_header_branch
          %1388 = sbr.rel (%p1386) target = $region637
        $region634: #{_transrec_forward_impl.1} parent=629 // loop_body
          %v1392 = vld [vmem:[%s1390] sm:%s1383]
          %1393 = vst [vmem:[%s1391] sm:%s1383] %v1392
        $region635: #{_transrec_forward_impl.1} parent=629 // loop_footer
          %s1389 = sadd.s32 1, %s1385
        $region636: #{_transrec_forward_impl.1} parent=629 // loop_footer_branch
          %1384 = sbr.rel target = $region632
        $region637: #{_transrec_forward_impl.1} parent=629 // loop_exit
          _
      $region630: #{_transrec_forward_impl.1} parent=47 // pred_fallthru
        _
      // Predicated region
      $region649: #{_transrec_forward_impl.1} parent=47 // pred_check
        _
      $region650: #{_transrec_forward_impl.1} parent=47 // pred_check_branch
        %1417 = sbr.rel (0) target = $region652
      $region651: #{_transrec_forward_impl.1} parent=47 // pred_region
        %1418 = vsyncadd %s472, 16
      $region652: #{_transrec_forward_impl.1} parent=47 // pred_fallthru
        _
      %s1419 = scalar_lea.vmem [#allocation4], %s1326
      %s1420 = scalar_lea.vmem %s12, %s1325
      %p1422 = scmp.lt.u32.totalorder 1, 8
      %p1423 = pneg %p1422
      // Predicated region
      $region653: #{_transrec_forward_impl.1} parent=47 // pred_check
        _
      $region654: #{_transrec_forward_impl.1} parent=47 // pred_check_branch
        %1425 = sbr.rel (%p1422) target = $region656
      $region655: #{_transrec_forward_impl.1} parent=47 // pred_region
        %s1440 = sand.u32 1, 7
        %p1441 = scmp.eq.s32.totalorder %s1440, 0
        %p1442 = pneg %p1441
        // Predicated region
        $region668: #{_transrec_forward_impl.1} parent=655 // pred_check
          _
        $region669: #{_transrec_forward_impl.1} parent=655 // pred_check_branch
          %1444 = sbr.rel (%p1441) target = $region671
        $region670: #{_transrec_forward_impl.1} parent=655 // pred_region
          %s1445 = sand.u32 1, 7
          %s1446 = ssub.s32 1, %s1445
          %s1447 = scalar_lea.vmem %s1419, %s1446 [#allocation4]
          %s1448 = ssub.s32 1, %s1445
          %s1449 = scalar_lea.vmem %s1420, %s1448
          %s1450 = sshllo.u32 0, %s1445
          loop: start=0, step=1, limit=1
          $region672: #{_transrec_forward_impl.1} parent=670 // loop_pre_header
            _
          $region673: #{_transrec_forward_impl.1} parent=670 // loop_header
            %s1452 = sphi 0, %s1456
            %p1453 = scmp.ge.s32.totalorder %s1452, 1
            %s1457 = sphi %s1447, %s1447
            %s1458 = sphi %s1449, %s1449
          $region674: #{_transrec_forward_impl.1} parent=670 // loop_header_branch
            %1455 = sbr.rel (%p1453) target = $region678
          $region675: #{_transrec_forward_impl.1} parent=670 // loop_body
            %v1459 = vld [vmem:[%s1457] sm:%s1450]
            %1460 = vst [vmem:[%s1458] sm:%s1450] %v1459
          $region676: #{_transrec_forward_impl.1} parent=670 // loop_footer
            %s1456 = sadd.s32 1, %s1452
          $region677: #{_transrec_forward_impl.1} parent=670 // loop_footer_branch
            %1451 = sbr.rel target = $region673
          $region678: #{_transrec_forward_impl.1} parent=670 // loop_exit
            _
        $region671: #{_transrec_forward_impl.1} parent=655 // pred_fallthru
          _
      $region656: #{_transrec_forward_impl.1} parent=47 // pred_fallthru
        _
      // Predicated region
      $region657: #{_transrec_forward_impl.1} parent=47 // pred_check
        %p1426 = pneg %p1422
      $region658: #{_transrec_forward_impl.1} parent=47 // pred_check_branch
        %1428 = sbr.rel (%p1426) target = $region660
      $region659: #{_transrec_forward_impl.1} parent=47 // pred_region
        %s1429 = sshllo.u32 0, 1
        loop: start=0, step=1, limit=1
        $region661: #{_transrec_forward_impl.1} parent=659 // loop_pre_header
          _
        $region662: #{_transrec_forward_impl.1} parent=659 // loop_header
          %s1431 = sphi 0, %s1435
          %p1432 = scmp.ge.s32.totalorder %s1431, 1
          %s1436 = sphi %s1419, %s1419
          %s1437 = sphi %s1420, %s1420
        $region663: #{_transrec_forward_impl.1} parent=659 // loop_header_branch
          %1434 = sbr.rel (%p1432) target = $region667
        $region664: #{_transrec_forward_impl.1} parent=659 // loop_body
          %v1438 = vld [vmem:[%s1436] sm:%s1429]
          %1439 = vst [vmem:[%s1437] sm:%s1429] %v1438
        $region665: #{_transrec_forward_impl.1} parent=659 // loop_footer
          %s1435 = sadd.s32 1, %s1431
        $region666: #{_transrec_forward_impl.1} parent=659 // loop_footer_branch
          %1430 = sbr.rel target = $region662
        $region667: #{_transrec_forward_impl.1} parent=659 // loop_exit
          _
      $region660: #{_transrec_forward_impl.1} parent=47 // pred_fallthru
        _
      // Predicated region
      $region679: #{_transrec_forward_impl.1} parent=47 // pred_check
        _
      $region680: #{_transrec_forward_impl.1} parent=47 // pred_check_branch
        %1463 = sbr.rel (0) target = $region682
      $region681: #{_transrec_forward_impl.1} parent=47 // pred_region
        %1464 = vsyncadd %s472, 16
      $region682: #{_transrec_forward_impl.1} parent=47 // pred_fallthru
        _
      %s1465 = sadd.s32 %s380, 7
      %s1466 = sld [smem:[#allocation7 + %s1465]]
      %s1467 = sld [smem:[#allocation8 + %s1465]]
      %s1468 = sld [smem:[#allocation9 + %s1465]]
      %s1469 = sadd.s32 %s381, 7
      %s1470 = scalar_lea.vmem [#allocation2], %s1469
      %s1471 = scalar_lea.vmem %s12, %s1466
      %p1473 = scmp.lt.u32.totalorder 1, 8
      %p1474 = pneg %p1473
      // Predicated region
      $region683: #{_transrec_forward_impl.1} parent=47 // pred_check
        _
      $region684: #{_transrec_forward_impl.1} parent=47 // pred_check_branch
        %1476 = sbr.rel (%p1473) target = $region686
      $region685: #{_transrec_forward_impl.1} parent=47 // pred_region
        %s1491 = sand.u32 1, 7
        %p1492 = scmp.eq.s32.totalorder %s1491, 0
        %p1493 = pneg %p1492
        // Predicated region
        $region698: #{_transrec_forward_impl.1} parent=685 // pred_check
          _
        $region699: #{_transrec_forward_impl.1} parent=685 // pred_check_branch
          %1495 = sbr.rel (%p1492) target = $region701
        $region700: #{_transrec_forward_impl.1} parent=685 // pred_region
          %s1496 = sand.u32 1, 7
          %s1497 = ssub.s32 1, %s1496
          %s1498 = scalar_lea.vmem %s1470, %s1497 [#allocation2]
          %s1499 = ssub.s32 1, %s1496
          %s1500 = scalar_lea.vmem %s1471, %s1499
          %s1501 = sshllo.u32 0, %s1496
          loop: start=0, step=1, limit=1
          $region702: #{_transrec_forward_impl.1} parent=700 // loop_pre_header
            _
          $region703: #{_transrec_forward_impl.1} parent=700 // loop_header
            %s1503 = sphi 0, %s1507
            %p1504 = scmp.ge.s32.totalorder %s1503, 1
            %s1508 = sphi %s1498, %s1498
            %s1509 = sphi %s1500, %s1500
          $region704: #{_transrec_forward_impl.1} parent=700 // loop_header_branch
            %1506 = sbr.rel (%p1504) target = $region708
          $region705: #{_transrec_forward_impl.1} parent=700 // loop_body
            %v1510 = vld [vmem:[%s1508] sm:%s1501]
            %1511 = vst [vmem:[%s1509] sm:%s1501] %v1510
          $region706: #{_transrec_forward_impl.1} parent=700 // loop_footer
            %s1507 = sadd.s32 1, %s1503
          $region707: #{_transrec_forward_impl.1} parent=700 // loop_footer_branch
            %1502 = sbr.rel target = $region703
          $region708: #{_transrec_forward_impl.1} parent=700 // loop_exit
            _
        $region701: #{_transrec_forward_impl.1} parent=685 // pred_fallthru
          _
      $region686: #{_transrec_forward_impl.1} parent=47 // pred_fallthru
        _
      // Predicated region
      $region687: #{_transrec_forward_impl.1} parent=47 // pred_check
        %p1477 = pneg %p1473
      $region688: #{_transrec_forward_impl.1} parent=47 // pred_check_branch
        %1479 = sbr.rel (%p1477) target = $region690
      $region689: #{_transrec_forward_impl.1} parent=47 // pred_region
        %s1480 = sshllo.u32 0, 1
        loop: start=0, step=1, limit=1
        $region691: #{_transrec_forward_impl.1} parent=689 // loop_pre_header
          _
        $region692: #{_transrec_forward_impl.1} parent=689 // loop_header
          %s1482 = sphi 0, %s1486
          %p1483 = scmp.ge.s32.totalorder %s1482, 1
          %s1487 = sphi %s1470, %s1470
          %s1488 = sphi %s1471, %s1471
        $region693: #{_transrec_forward_impl.1} parent=689 // loop_header_branch
          %1485 = sbr.rel (%p1483) target = $region697
        $region694: #{_transrec_forward_impl.1} parent=689 // loop_body
          %v1489 = vld [vmem:[%s1487] sm:%s1480]
          %1490 = vst [vmem:[%s1488] sm:%s1480] %v1489
        $region695: #{_transrec_forward_impl.1} parent=689 // loop_footer
          %s1486 = sadd.s32 1, %s1482
        $region696: #{_transrec_forward_impl.1} parent=689 // loop_footer_branch
          %1481 = sbr.rel target = $region692
        $region697: #{_transrec_forward_impl.1} parent=689 // loop_exit
          _
      $region690: #{_transrec_forward_impl.1} parent=47 // pred_fallthru
        _
      // Predicated region
      $region709: #{_transrec_forward_impl.1} parent=47 // pred_check
        _
      $region710: #{_transrec_forward_impl.1} parent=47 // pred_check_branch
        %1514 = sbr.rel (0) target = $region712
      $region711: #{_transrec_forward_impl.1} parent=47 // pred_region
        %1515 = vsyncadd %s472, 16
      $region712: #{_transrec_forward_impl.1} parent=47 // pred_fallthru
        _
      %s1516 = scalar_lea.vmem [#allocation3], %s1469
      %s1517 = scalar_lea.vmem %s12, %s1467
      %p1519 = scmp.lt.u32.totalorder 1, 8
      %p1520 = pneg %p1519
      // Predicated region
      $region713: #{_transrec_forward_impl.1} parent=47 // pred_check
        _
      $region714: #{_transrec_forward_impl.1} parent=47 // pred_check_branch
        %1522 = sbr.rel (%p1519) target = $region716
      $region715: #{_transrec_forward_impl.1} parent=47 // pred_region
        %s1537 = sand.u32 1, 7
        %p1538 = scmp.eq.s32.totalorder %s1537, 0
        %p1539 = pneg %p1538
        // Predicated region
        $region728: #{_transrec_forward_impl.1} parent=715 // pred_check
          _
        $region729: #{_transrec_forward_impl.1} parent=715 // pred_check_branch
          %1541 = sbr.rel (%p1538) target = $region731
        $region730: #{_transrec_forward_impl.1} parent=715 // pred_region
          %s1542 = sand.u32 1, 7
          %s1543 = ssub.s32 1, %s1542
          %s1544 = scalar_lea.vmem %s1516, %s1543 [#allocation3]
          %s1545 = ssub.s32 1, %s1542
          %s1546 = scalar_lea.vmem %s1517, %s1545
          %s1547 = sshllo.u32 0, %s1542
          loop: start=0, step=1, limit=1
          $region732: #{_transrec_forward_impl.1} parent=730 // loop_pre_header
            _
          $region733: #{_transrec_forward_impl.1} parent=730 // loop_header
            %s1549 = sphi 0, %s1553
            %p1550 = scmp.ge.s32.totalorder %s1549, 1
            %s1554 = sphi %s1544, %s1544
            %s1555 = sphi %s1546, %s1546
          $region734: #{_transrec_forward_impl.1} parent=730 // loop_header_branch
            %1552 = sbr.rel (%p1550) target = $region738
          $region735: #{_transrec_forward_impl.1} parent=730 // loop_body
            %v1556 = vld [vmem:[%s1554] sm:%s1547]
            %1557 = vst [vmem:[%s1555] sm:%s1547] %v1556
          $region736: #{_transrec_forward_impl.1} parent=730 // loop_footer
            %s1553 = sadd.s32 1, %s1549
          $region737: #{_transrec_forward_impl.1} parent=730 // loop_footer_branch
            %1548 = sbr.rel target = $region733
          $region738: #{_transrec_forward_impl.1} parent=730 // loop_exit
            _
        $region731: #{_transrec_forward_impl.1} parent=715 // pred_fallthru
          _
      $region716: #{_transrec_forward_impl.1} parent=47 // pred_fallthru
        _
      // Predicated region
      $region717: #{_transrec_forward_impl.1} parent=47 // pred_check
        %p1523 = pneg %p1519
      $region718: #{_transrec_forward_impl.1} parent=47 // pred_check_branch
        %1525 = sbr.rel (%p1523) target = $region720
      $region719: #{_transrec_forward_impl.1} parent=47 // pred_region
        %s1526 = sshllo.u32 0, 1
        loop: start=0, step=1, limit=1
        $region721: #{_transrec_forward_impl.1} parent=719 // loop_pre_header
          _
        $region722: #{_transrec_forward_impl.1} parent=719 // loop_header
          %s1528 = sphi 0, %s1532
          %p1529 = scmp.ge.s32.totalorder %s1528, 1
          %s1533 = sphi %s1516, %s1516
          %s1534 = sphi %s1517, %s1517
        $region723: #{_transrec_forward_impl.1} parent=719 // loop_header_branch
          %1531 = sbr.rel (%p1529) target = $region727
        $region724: #{_transrec_forward_impl.1} parent=719 // loop_body
          %v1535 = vld [vmem:[%s1533] sm:%s1526]
          %1536 = vst [vmem:[%s1534] sm:%s1526] %v1535
        $region725: #{_transrec_forward_impl.1} parent=719 // loop_footer
          %s1532 = sadd.s32 1, %s1528
        $region726: #{_transrec_forward_impl.1} parent=719 // loop_footer_branch
          %1527 = sbr.rel target = $region722
        $region727: #{_transrec_forward_impl.1} parent=719 // loop_exit
          _
      $region720: #{_transrec_forward_impl.1} parent=47 // pred_fallthru
        _
      // Predicated region
      $region739: #{_transrec_forward_impl.1} parent=47 // pred_check
        _
      $region740: #{_transrec_forward_impl.1} parent=47 // pred_check_branch
        %1560 = sbr.rel (0) target = $region742
      $region741: #{_transrec_forward_impl.1} parent=47 // pred_region
        %1561 = vsyncadd %s472, 16
      $region742: #{_transrec_forward_impl.1} parent=47 // pred_fallthru
        _
      %s1562 = scalar_lea.vmem [#allocation4], %s1469
      %s1563 = scalar_lea.vmem %s12, %s1468
      %p1565 = scmp.lt.u32.totalorder 1, 8
      %p1566 = pneg %p1565
      // Predicated region
      $region743: #{_transrec_forward_impl.1} parent=47 // pred_check
        _
      $region744: #{_transrec_forward_impl.1} parent=47 // pred_check_branch
        %1568 = sbr.rel (%p1565) target = $region746
      $region745: #{_transrec_forward_impl.1} parent=47 // pred_region
        %s1583 = sand.u32 1, 7
        %p1584 = scmp.eq.s32.totalorder %s1583, 0
        %p1585 = pneg %p1584
        // Predicated region
        $region758: #{_transrec_forward_impl.1} parent=745 // pred_check
          _
        $region759: #{_transrec_forward_impl.1} parent=745 // pred_check_branch
          %1587 = sbr.rel (%p1584) target = $region761
        $region760: #{_transrec_forward_impl.1} parent=745 // pred_region
          %s1588 = sand.u32 1, 7
          %s1589 = ssub.s32 1, %s1588
          %s1590 = scalar_lea.vmem %s1562, %s1589 [#allocation4]
          %s1591 = ssub.s32 1, %s1588
          %s1592 = scalar_lea.vmem %s1563, %s1591
          %s1593 = sshllo.u32 0, %s1588
          loop: start=0, step=1, limit=1
          $region762: #{_transrec_forward_impl.1} parent=760 // loop_pre_header
            _
          $region763: #{_transrec_forward_impl.1} parent=760 // loop_header
            %s1595 = sphi 0, %s1599
            %p1596 = scmp.ge.s32.totalorder %s1595, 1
            %s1600 = sphi %s1590, %s1590
            %s1601 = sphi %s1592, %s1592
          $region764: #{_transrec_forward_impl.1} parent=760 // loop_header_branch
            %1598 = sbr.rel (%p1596) target = $region768
          $region765: #{_transrec_forward_impl.1} parent=760 // loop_body
            %v1602 = vld [vmem:[%s1600] sm:%s1593]
            %1603 = vst [vmem:[%s1601] sm:%s1593] %v1602
          $region766: #{_transrec_forward_impl.1} parent=760 // loop_footer
            %s1599 = sadd.s32 1, %s1595
          $region767: #{_transrec_forward_impl.1} parent=760 // loop_footer_branch
            %1594 = sbr.rel target = $region763
          $region768: #{_transrec_forward_impl.1} parent=760 // loop_exit
            _
        $region761: #{_transrec_forward_impl.1} parent=745 // pred_fallthru
          _
      $region746: #{_transrec_forward_impl.1} parent=47 // pred_fallthru
        _
      // Predicated region
      $region747: #{_transrec_forward_impl.1} parent=47 // pred_check
        %p1569 = pneg %p1565
      $region748: #{_transrec_forward_impl.1} parent=47 // pred_check_branch
        %1571 = sbr.rel (%p1569) target = $region750
      $region749: #{_transrec_forward_impl.1} parent=47 // pred_region
        %s1572 = sshllo.u32 0, 1
        loop: start=0, step=1, limit=1
        $region751: #{_transrec_forward_impl.1} parent=749 // loop_pre_header
          _
        $region752: #{_transrec_forward_impl.1} parent=749 // loop_header
          %s1574 = sphi 0, %s1578
          %p1575 = scmp.ge.s32.totalorder %s1574, 1
          %s1579 = sphi %s1562, %s1562
          %s1580 = sphi %s1563, %s1563
        $region753: #{_transrec_forward_impl.1} parent=749 // loop_header_branch
          %1577 = sbr.rel (%p1575) target = $region757
        $region754: #{_transrec_forward_impl.1} parent=749 // loop_body
          %v1581 = vld [vmem:[%s1579] sm:%s1572]
          %1582 = vst [vmem:[%s1580] sm:%s1572] %v1581
        $region755: #{_transrec_forward_impl.1} parent=749 // loop_footer
          %s1578 = sadd.s32 1, %s1574
        $region756: #{_transrec_forward_impl.1} parent=749 // loop_footer_branch
          %1573 = sbr.rel target = $region752
        $region757: #{_transrec_forward_impl.1} parent=749 // loop_exit
          _
      $region750: #{_transrec_forward_impl.1} parent=47 // pred_fallthru
        _
      // Predicated region
      $region769: #{_transrec_forward_impl.1} parent=47 // pred_check
        _
      $region770: #{_transrec_forward_impl.1} parent=47 // pred_check_branch
        %1606 = sbr.rel (0) target = $region772
      $region771: #{_transrec_forward_impl.1} parent=47 // pred_region
        %1607 = vsyncadd %s472, 16
      $region772: #{_transrec_forward_impl.1} parent=47 // pred_fallthru
        _
      %p1608 = scmp.eq.s32.totalorder %s38, 1
      // Predicated region
      $region773: #{_transrec_forward_impl.1} parent=47 // pred_check
        %p1609 = pneg %p1608
      $region774: #{_transrec_forward_impl.1} parent=47 // pred_check_branch
        %1611 = sbr.rel (%p1609) target = $region776
      $region775: #{_transrec_forward_impl.1} parent=47 // pred_region
        %s1612 = smul.u32 8, 1
        %s1613 = sshll.u32 %s1612, 4
        %1614 = dma.done %s472, %s1613
        %s1615 = sshll.u32 %s1612, 4
        %1616 = dma.done %s472, %s1615
        %s1617 = sshll.u32 %s1612, 4
        %1618 = dma.done %s472, %s1617
      $region776: #{_transrec_forward_impl.1} parent=47 // pred_fallthru
        _
      %p1619 = scmp.lt.s32.totalorder %s38, 1
      %s1620 = scalar_select %p1619, %s38, 1
      %s1621 = smul.addr %s1620, 8
      %s1622 = scalar_lea.vmem %s11, %s1621
      // Predicated region
      $region777: #{_transrec_forward_impl.1} parent=47 // pred_check
        %p1623 = pneg %p233
      $region778: #{_transrec_forward_impl.1} parent=47 // pred_check_branch
        %1625 = sbr.rel (%p1623) target = $region780
      $region779: #{_transrec_forward_impl.1} parent=47 // pred_region
        _
      $region780: #{_transrec_forward_impl.1} parent=47 // pred_fallthru
        _
    $region48: #{_transrec_forward_impl.1} parent=5 // pred_fallthru
      _
    %p1626 = scmp.le.s32.totalorder 2, %s33
    // Predicated region
    $region781: #{_transrec_forward_impl.1} parent=5 // pred_check
      %p1627 = pneg %p1626
    $region782: #{_transrec_forward_impl.1} parent=5 // pred_check_branch
      %1629 = sbr.rel (%p1627) target = $region784
    $region783: #{_transrec_forward_impl.1} parent=5 // pred_region
      %s1630 = ssub.s32 %s33, 2
      // Predicated region
      $region785: #{_transrec_forward_impl.1} parent=783 // pred_check
        %p1631 = pneg %p239
      $region786: #{_transrec_forward_impl.1} parent=783 // pred_check_branch
        %1633 = sbr.rel (%p1631) target = $region788
      $region787: #{_transrec_forward_impl.1} parent=783 // pred_region
        %p1634 = scmp.lt.s32.totalorder %s39, 1
        %s1635 = scalar_select %p1634, %s39, 1
        %s1636 = smul.addr %s1635, 8
        %s1637 = scalar_lea.vmem %s11, %s1636
      $region788: #{_transrec_forward_impl.1} parent=783 // pred_fallthru
        _
    $region784: #{_transrec_forward_impl.1} parent=5 // pred_fallthru
      _
  $region6: #{_transrec_forward_impl.1} parent=0 // loop_footer
    %s37 = sadd.s32 1, %s33
  $region7: #{_transrec_forward_impl.1} parent=0 // loop_footer_branch
    %32 = sbr.rel target = $region3
  $region8: #{_transrec_forward_impl.1} parent=0 // loop_exit
    _
  %1638 = vsyncmov [#allocation5]
  %s1639 = vpop.sfrf %1638
  %p1640 = scmp.eq.s32.totalorder %s1639, 0
  %p1641 = pneg %p1640
  %1643 = shalt.err (%p1641)
  %s1644 = scalar_lea.sflag [#allocation5], 1
  %1645 = vsyncmov %s1644
  %s1646 = vpop.sfrf %1645
  %p1647 = scmp.eq.s32.totalorder %s1646, 0
  %p1648 = pneg %p1647
  %1650 = shalt.err (%p1648)

</llo_original>
